<compile_context>
chip_gen: v5e
topology: v5e:2x2
jax: 0.10.0
libtpu: 0.0.40
codegen_flags: <defaults>
</compile_context>

<pallas_src>
import jax
import jax.numpy as jnp
from jax import lax
from jax.experimental import pallas as pl
from jax.experimental.pallas import tpu as pltpu


def fake_news_lstm_kernel(len_ref, x_ref, wih_ref, whh_ref, b_ref,
                          wo_ref, bo_ref, out_ref,
                          z_scr, h_scr, c_scr, sel_scr):
    Bb = len_ref.shape[0]            # batch rows handled by this program
    H = whh_ref.shape[0]             # hidden size
    TB = x_ref.shape[0]              # T_pad * Bb (time-major, flattened)
    CB = z_scr.shape[0] // 2         # rows per projection chunk = C * Bb
    C = CB // Bb                     # timesteps per chunk (= inner unroll cap)
    n_chunks = TB // CB

    # ---- init per-program recurrent state (scratch persists across grid) ----
    h_scr[...] = jnp.zeros_like(h_scr)
    c_scr[...] = jnp.zeros_like(c_scr)
    sel_scr[...] = jnp.zeros_like(sel_scr)

    def project(chunk, slot):
        """x[chunk] @ W_ih + b -> z_scr[slot]; one (C*Bb,E)x(E,4H) MXU pass."""
        xs = chunk * CB
        zs = slot * CB
        if not isinstance(xs, int):            # traced: give alignment hints
            xs = pl.multiple_of(xs, CB)
            zs = pl.multiple_of(zs, CB)
        z_scr[pl.ds(zs, CB), :] = (
            jnp.dot(x_ref[pl.ds(xs, CB), :], wih_ref[...],
                    preferred_element_type=jnp.float32) + b_ref[...])

    project(0, 0)                               # prologue: chunk 0 -> slot 0

    @pl.loop(0, n_chunks)
    def _(kc):
        slot = kc % 2

        # Prefetch next chunk's input projection into the other slot; it has
        # no data dependence on this chunk's serial steps, so it can overlap.
        @pl.when(kc + 1 < n_chunks)
        def _():
            project(kc + 1, 1 - slot)

        # Hoisted out of the unrolled per-step loop (no per-step broadcast).
        lens_b = jnp.broadcast_to(len_ref[...] - 1, (Bb, H))
        z_base = pl.multiple_of(slot * CB, CB)
        t_base = kc * C

        def step(j, carry):
            h, c, sel = carry
            zoff = pl.multiple_of(z_base + j * Bb, Bb)
            z = (z_scr[pl.ds(zoff, Bb), :]
                 + jnp.dot(h.astype(jnp.bfloat16), whh_ref[...],
                           preferred_element_type=jnp.float32))   # (Bb,4H) f32
            i_g = jax.nn.sigmoid(z[:, 0 * H:1 * H])
            f_g = jax.nn.sigmoid(z[:, 1 * H:2 * H])
            g_g = jnp.tanh(z[:, 2 * H:3 * H])
            o_g = jax.nn.sigmoid(z[:, 3 * H:4 * H])
            c_new = f_g * c + i_g * g_g
            h_new = o_g * jnp.tanh(c_new)
            # hidden state at the last valid timestep of each row
            sel_new = jnp.where(lens_b == t_base + j, h_new, sel)
            return h_new, c_new, sel_new

        h1, c1, sel1 = lax.fori_loop(
            0, C, step, (h_scr[...], c_scr[...], sel_scr[...]), unroll=True)
        h_scr[...] = h1
        c_scr[...] = c1
        sel_scr[...] = sel1

    # ---- head: Linear(H,1) as VPU multiply + cross-lane reduce + sigmoid ----
    logits = (jnp.sum(sel_scr[...] * wo_ref[...], axis=-1, keepdims=True)
              + bo_ref[...])
    out_ref[...] = jax.nn.sigmoid(logits)


def fake_news_net_forward(inp, input_len, params, *, batch_block=8, chunk_t=8):
    """inp: (B, T) int32 token ids; input_len: (B,) int32, 1 <= len <= T."""
    emb, w_ih, w_hh, b, w_out, b_out = (
        params["embedding"], params["w_ih"], params["w_hh"],
        params["b"], params["w_out"], params["b_out"])
    B, T = inp.shape
    E = emb.shape[1]
    H = w_hh.shape[0]

    Bb = batch_block
    assert B % Bb == 0 and Bb % 8 == 0, "batch must split into 8-aligned groups"
    G = B // Bb
    C = chunk_t
    T_pad = pl.cdiv(T, C) * C            # pad time to a multiple of the chunk

    # Embedding gather straight to bf16, time-major: skips the f32 (B,T,E)
    # materialization + transpose copy of the previous version.
    x = jnp.take(emb.astype(jnp.bfloat16), inp.T, axis=0)          # (T, B, E)
    if T_pad != T:
        x = jnp.pad(x, ((0, T_pad - T), (0, 0), (0, 0)))
    # Group-major layout: each grid step sees a contiguous (T_pad*Bb, E) slab.
    x = (x.reshape(T_pad, G, Bb, E).transpose(1, 0, 2, 3)
          .reshape(G * T_pad * Bb, E))

    len_col = input_len.astype(jnp.int32).reshape(B, 1)

    def full(shape):
        return pl.BlockSpec(shape, lambda g: (0,) * len(shape))

    flops = 2 * T_pad * B * E * 4 * H + 2 * T_pad * B * H * 4 * H + 2 * B * H
    transcendentals = 5 * T_pad * B * H
    bytes_accessed = (x.size * x.dtype.itemsize
                      + (E * 4 * H + H * 4 * H) * 2      # bf16 weights
                      + 4 * H * 4 + H * 4 + 4            # b, w_out, b_out
                      + B * 4 + B * 4)                   # lengths, output

    probs = pl.pallas_call(
        fake_news_lstm_kernel,
        out_shape=jax.ShapeDtypeStruct((B, 1), jnp.float32),
        grid=(G,),
        in_specs=[
            pl.BlockSpec((Bb, 1), lambda g: (g, 0)),            # lengths
            pl.BlockSpec((T_pad * Bb, E), lambda g: (g, 0)),    # x, time-major
            full((E, 4 * H)),                                    # W_ih
            full((H, 4 * H)),                                    # W_hh
            full((1, 4 * H)),                                    # b_ih + b_hh
            full((1, H)),                                        # W_out
            full((1, 1)),                                        # b_out
        ],
        out_specs=pl.BlockSpec((Bb, 1), lambda g: (g, 0)),
        scratch_shapes=[
            pltpu.VMEM((2 * C * Bb, 4 * H), jnp.float32),        # z dbl-buffer
            pltpu.VMEM((Bb, H), jnp.float32),                    # h
            pltpu.VMEM((Bb, H), jnp.float32),                    # c
            pltpu.VMEM((Bb, H), jnp.float32),                    # h at len-1
        ],
        compiler_params=pltpu.CompilerParams(
            dimension_semantics=("parallel",),
            vmem_limit_bytes=48 * 1024 * 1024),
        cost_estimate=pl.CostEstimate(
            flops=flops, transcendentals=transcendentals,
            bytes_accessed=bytes_accessed),
    )(len_col, x,
      w_ih.astype(jnp.bfloat16), w_hh.astype(jnp.bfloat16),
      b, w_out.reshape(1, H), b_out)

    return probs[:, 0]                                   # torch.squeeze(., 1)


def reference_forward(inp, input_len, params):
    """Pure-JAX f32 reference (lax.scan LSTM) for validation."""
    emb, w_ih, w_hh, b, w_out, b_out = (
        params["embedding"], params["w_ih"], params["w_hh"],
        params["b"], params["w_out"], params["b_out"])
    B, T = inp.shape
    H = w_hh.shape[0]
    x = jnp.take(emb, inp, axis=0)                        # (B, T, E)

    def step(carry, x_t):
        h, c = carry
        z = x_t @ w_ih + h @ w_hh + b[0]
        i = jax.nn.sigmoid(z[:, :H])
        f = jax.nn.sigmoid(z[:, H:2 * H])
        g = jnp.tanh(z[:, 2 * H:3 * H])
        o = jax.nn.sigmoid(z[:, 3 * H:])
        c = f * c + i * g
        h = o * jnp.tanh(c)
        return (h, c), h

    h0 = jnp.zeros((B, H), jnp.float32)
    (_, _), hs = lax.scan(step, (h0, h0), jnp.transpose(x, (1, 0, 2)))
    hs = jnp.transpose(hs, (1, 0, 2))                     # (B, T, H)
    out_fwd = hs[jnp.arange(B), input_len - 1, :]         # (B, H)
    logits = out_fwd @ w_out + b_out[0]
    return jax.nn.sigmoid(logits)[:, 0]


def init_params(key, vocab_size, embed_dim, hidden_size):
    ks = jax.random.split(key, 7)
    s = 1.0 / jnp.sqrt(hidden_size)
    return {
        "embedding": jax.random.normal(ks[0], (vocab_size, embed_dim),
                                       jnp.float32),
        "w_ih": jax.random.uniform(ks[1], (embed_dim, 4 * hidden_size),
                                   jnp.float32, -s, s),
        "w_hh": jax.random.uniform(ks[2], (hidden_size, 4 * hidden_size),
                                   jnp.float32, -s, s),
        # b = b_ih + b_hh combined
        "b": jax.random.uniform(ks[3], (1, 4 * hidden_size),
                                jnp.float32, -s, s),
        "w_out": jax.random.uniform(ks[4], (hidden_size, 1),
                                    jnp.float32, -s, s),
        "b_out": jax.random.uniform(ks[5], (1, 1), jnp.float32, -s, s),
    }


if __name__ == "__main__":
    VOCAB = 100
    EMBED = 256      # fixed by the module (nn.Embedding(vocab, 256))
    HIDDEN = 128     # small lane-aligned stand-in for hidden_size=400
    B, T = 8, 12

    key = jax.random.PRNGKey(0)
    k_par, k_tok, k_len = jax.random.split(key, 3)

    params = init_params(k_par, VOCAB, EMBED, HIDDEN)
    inp = jax.random.randint(k_tok, (B, T), 0, VOCAB, dtype=jnp.int32)
    input_len = jax.random.randint(k_len, (B,), 1, T + 1, dtype=jnp.int32)

    out = jax.block_until_ready(fake_news_net_forward(inp, input_len, params))
    ref = jax.block_until_ready(reference_forward(inp, input_len, params))

    assert out.shape == (B,)
    # bf16 matmul operands (f32 accumulation) -> loose tolerance vs f32 ref.
    assert jnp.allclose(out, ref, atol=2e-2, rtol=2e-2), (out, ref)

    print("KERNEL_OK")
</pallas_src>

<mosaic_0001>
module attributes {stable_mosaic.version = 11 : i64} {
  func.func @fake_news_lstm_kernel(%arg0: i32, %arg1: memref<8x1xi32, #tpu.memory_space<vmem>>, %arg2: memref<128x256xbf16, #tpu.memory_space<vmem>>, %arg3: memref<256x512xbf16, #tpu.memory_space<vmem>>, %arg4: memref<128x512xbf16, #tpu.memory_space<vmem>>, %arg5: memref<1x512xf32, #tpu.memory_space<vmem>>, %arg6: memref<1x128xf32, #tpu.memory_space<vmem>>, %arg7: memref<1x1xf32, #tpu.memory_space<vmem>>, %arg8: memref<8x1xf32, #tpu.memory_space<vmem>>, %arg9: memref<128x512xf32, #tpu.memory_space<vmem>>, %arg10: memref<8x128xf32, #tpu.memory_space<vmem>>, %arg11: memref<8x128xf32, #tpu.memory_space<vmem>>, %arg12: memref<8x128xf32, #tpu.memory_space<vmem>>) attributes {dimension_semantics = [#tpu.dimension_semantics<parallel>], iteration_bounds = array<i64: 1>, scalar_prefetch = 0 : i64, scratch_operands = 4 : i64, tpu.core_type = #tpu.core_type<tc>, window_params = [{transform_indices = @transform_0, window_bounds = array<i64: 8, 1>}, {transform_indices = @transform_1, window_bounds = array<i64: 128, 256>}, {pipeline_mode = #tpu.pipeline_mode<synchronous>, transform_indices = @transform_2, window_bounds = array<i64: 256, 512>}, {pipeline_mode = #tpu.pipeline_mode<synchronous>, transform_indices = @transform_3, window_bounds = array<i64: 128, 512>}, {pipeline_mode = #tpu.pipeline_mode<synchronous>, transform_indices = @transform_4, window_bounds = array<i64: 1, 512>}, {pipeline_mode = #tpu.pipeline_mode<synchronous>, transform_indices = @transform_5, window_bounds = array<i64: 1, 128>}, {pipeline_mode = #tpu.pipeline_mode<synchronous>, transform_indices = @transform_6, window_bounds = array<i64: 1, 1>}, {transform_indices = @transform_7, window_bounds = array<i64: 8, 1>}]} {
    %cst = arith.constant 0.000000e+00 : f32
    %0 = vector.broadcast %cst : f32 to vector<8x128xf32>
    %c0 = arith.constant 0 : index
    %c0_0 = arith.constant 0 : index
    %1 = vector.load %arg10[%c0, %c0_0] : memref<8x128xf32, #tpu.memory_space<vmem>>, vector<8x128xf32>
    tpu.vector_store %arg10[%c0, %c0_0], %0 {strides = array<i32>} : memref<8x128xf32, #tpu.memory_space<vmem>>, vector<8x128xf32>,
    %cst_1 = arith.constant 0.000000e+00 : f32
    %2 = vector.broadcast %cst_1 : f32 to vector<8x128xf32>
    %c0_2 = arith.constant 0 : index
    %c0_3 = arith.constant 0 : index
    %3 = vector.load %arg11[%c0_2, %c0_3] : memref<8x128xf32, #tpu.memory_space<vmem>>, vector<8x128xf32>
    tpu.vector_store %arg11[%c0_2, %c0_3], %2 {strides = array<i32>} : memref<8x128xf32, #tpu.memory_space<vmem>>, vector<8x128xf32>,
    %cst_4 = arith.constant 0.000000e+00 : f32
    %4 = vector.broadcast %cst_4 : f32 to vector<8x128xf32>
    %c0_5 = arith.constant 0 : index
    %c0_6 = arith.constant 0 : index
    %5 = vector.load %arg12[%c0_5, %c0_6] : memref<8x128xf32, #tpu.memory_space<vmem>>, vector<8x128xf32>
    tpu.vector_store %arg12[%c0_5, %c0_6], %4 {strides = array<i32>} : memref<8x128xf32, #tpu.memory_space<vmem>>, vector<8x128xf32>,
    %c0_7 = arith.constant 0 : index
    %c0_8 = arith.constant 0 : index
    %6 = vector.load %arg2[%c0_7, %c0_8] : memref<128x256xbf16, #tpu.memory_space<vmem>>, vector<64x256xbf16>
    %c0_9 = arith.constant 0 : index
    %c0_10 = arith.constant 0 : index
    %7 = vector.load %arg3[%c0_9, %c0_10] : memref<256x512xbf16, #tpu.memory_space<vmem>>, vector<256x512xbf16>
    %cst_11 = arith.constant dense<0.000000e+00> : vector<64x512xf32>
    %8 = tpu.matmul %6, %7, %cst_11 {dimension_numbers = #tpu.dot_dimension_numbers<[1], [0], [0], [1], [0, 0, 1, 1], [], []>} : vector<64x256xbf16>, vector<256x512xbf16>, vector<64x512xf32> -> vector<64x512xf32>
    %c0_12 = arith.constant 0 : index
    %c0_13 = arith.constant 0 : index
    %9 = vector.load %arg5[%c0_12, %c0_13] : memref<1x512xf32, #tpu.memory_space<vmem>>, vector<1x512xf32>
    %10 = vector.broadcast %9 : vector<1x512xf32> to vector<64x512xf32>
    %11 = arith.addf %8, %10 : vector<64x512xf32>
    %c0_14 = arith.constant 0 : index
    %c0_15 = arith.constant 0 : index
    %12 = vector.load %arg9[%c0_14, %c0_15] : memref<128x512xf32, #tpu.memory_space<vmem>>, vector<64x512xf32>
    tpu.vector_store %arg9[%c0_14, %c0_15], %11 {strides = array<i32>} : memref<128x512xf32, #tpu.memory_space<vmem>>, vector<64x512xf32>,
    %c0_i32 = arith.constant 0 : i32
    %c2_i32 = arith.constant 2 : i32
    %13 = arith.addi %c0_i32, %c2_i32 : i32
    %c1_i32 = arith.constant 1 : i32
    scf.for %arg13 = %c0_i32 to %13 step %c1_i32  : i32 {
      %c1_i32_27 = arith.constant 1 : i32
      %29 = arith.muli %arg13, %c1_i32_27 : i32
      %c0_i32_28 = arith.constant 0 : i32
      %30 = arith.addi %c0_i32_28, %29 : i32
      %c2_i32_29 = arith.constant 2 : i32
      %c0_i32_30 = arith.constant 0 : i32
      %31 = arith.cmpi eq, %c2_i32_29, %c0_i32_30 : i32
      %c1_i32_31 = arith.constant 1 : i32
      %32 = arith.select %31, %c1_i32_31, %c2_i32_29 : i32
      %33 = arith.remsi %30, %32 : i32
      %c0_i32_32 = arith.constant 0 : i32
      %34 = arith.cmpi ne, %33, %c0_i32_32 : i32
      %c0_i32_33 = arith.constant 0 : i32
      %35 = arith.cmpi slt, %33, %c0_i32_33 : i32
      %c0_i32_34 = arith.constant 0 : i32
      %36 = arith.cmpi slt, %32, %c0_i32_34 : i32
      %37 = arith.xori %35, %36 : i1
      %38 = arith.andi %37, %34 : i1
      %39 = arith.addi %33, %32 : i32
      %40 = arith.select %38, %39, %33 : i32
      %c1_i32_35 = arith.constant 1 : i32
      %41 = arith.addi %30, %c1_i32_35 : i32
      %c2_i32_36 = arith.constant 2 : i32
      %42 = arith.cmpi slt, %41, %c2_i32_36 : i32
      %43 = arith.extui %42 : i1 to i32
      %c0_i32_37 = arith.constant 0 : i32
      %44 = arith.cmpi ne, %43, %c0_i32_37 : i32
      scf.if %44 {
        %c1_i32_121 = arith.constant 1 : i32
        %363 = arith.addi %30, %c1_i32_121 : i32
        %c1_i32_122 = arith.constant 1 : i32
        %364 = arith.subi %c1_i32_122, %40 : i32
        %c64_i32_123 = arith.constant 64 : i32
        %365 = arith.muli %363, %c64_i32_123 : i32
        %c64_i32_124 = arith.constant 64 : i32
        %366 = arith.muli %364, %c64_i32_124 : i32
        %367 = tpu.assume_multiple %365, 64 : i32
        %368 = tpu.assume_multiple %366, 64 : i32
        %369 = arith.index_cast %367 : i32 to index
        %c0_125 = arith.constant 0 : index
        %370 = vector.load %arg2[%369, %c0_125] : memref<128x256xbf16, #tpu.memory_space<vmem>>, vector<64x256xbf16>
        %c0_126 = arith.constant 0 : index
        %c0_127 = arith.constant 0 : index
        %371 = vector.load %arg3[%c0_126, %c0_127] : memref<256x512xbf16, #tpu.memory_space<vmem>>, vector<256x512xbf16>
        %cst_128 = arith.constant dense<0.000000e+00> : vector<64x512xf32>
        %372 = tpu.matmul %370, %371, %cst_128 {dimension_numbers = #tpu.dot_dimension_numbers<[1], [0], [0], [1], [0, 0, 1, 1], [], []>} : vector<64x256xbf16>, vector<256x512xbf16>, vector<64x512xf32> -> vector<64x512xf32>
        %c0_129 = arith.constant 0 : index
        %c0_130 = arith.constant 0 : index
        %373 = vector.load %arg5[%c0_129, %c0_130] : memref<1x512xf32, #tpu.memory_space<vmem>>, vector<1x512xf32>
        %374 = vector.broadcast %373 : vector<1x512xf32> to vector<64x512xf32>
        %375 = arith.addf %372, %374 : vector<64x512xf32>
        %376 = arith.index_cast %368 : i32 to index
        %c0_131 = arith.constant 0 : index
        %377 = vector.load %arg9[%376, %c0_131] : memref<128x512xf32, #tpu.memory_space<vmem>>, vector<64x512xf32>
        tpu.vector_store %arg9[%376, %c0_131], %375 {strides = array<i32>} : memref<128x512xf32, #tpu.memory_space<vmem>>, vector<64x512xf32>,
      } else {
      }
      %c0_38 = arith.constant 0 : index
      %c0_39 = arith.constant 0 : index
      %45 = vector.load %arg1[%c0_38, %c0_39] : memref<8x1xi32, #tpu.memory_space<vmem>>, vector<8x1xi32>
      %c1_i32_40 = arith.constant 1 : i32
      %46 = vector.broadcast %c1_i32_40 : i32 to vector<8x1xi32>
      %47 = arith.subi %45, %46 : vector<8x1xi32>
      %48 = vector.shape_cast %47 : vector<8x1xi32> to vector<8x1xi32>
      %49 = vector.broadcast %48 : vector<8x1xi32> to vector<8x128xi32>
      %c64_i32 = arith.constant 64 : i32
      %50 = arith.muli %40, %c64_i32 : i32
      %51 = tpu.assume_multiple %50, 64 : i32
      %c8_i32 = arith.constant 8 : i32
      %52 = arith.muli %30, %c8_i32 : i32
      %c0_41 = arith.constant 0 : index
      %c0_42 = arith.constant 0 : index
      %53 = vector.load %arg10[%c0_41, %c0_42] : memref<8x128xf32, #tpu.memory_space<vmem>>, vector<8x128xf32>
      %c0_43 = arith.constant 0 : index
      %c0_44 = arith.constant 0 : index
      %54 = vector.load %arg11[%c0_43, %c0_44] : memref<8x128xf32, #tpu.memory_space<vmem>>, vector<8x128xf32>
      %c0_45 = arith.constant 0 : index
      %c0_46 = arith.constant 0 : index
      %55 = vector.load %arg12[%c0_45, %c0_46] : memref<8x128xf32, #tpu.memory_space<vmem>>, vector<8x128xf32>
      %c0_i32_47 = arith.constant 0 : i32
      %c8_i32_48 = arith.constant 8 : i32
      %56 = arith.muli %c0_i32_47, %c8_i32_48 : i32
      %57 = arith.addi %51, %56 : i32
      %58 = tpu.assume_multiple %57, 8 : i32
      %59 = arith.index_cast %58 : i32 to index
      %c0_49 = arith.constant 0 : index
      %60 = vector.load %arg9[%59, %c0_49] : memref<128x512xf32, #tpu.memory_space<vmem>>, vector<8x512xf32>
      %61 = arith.truncf %53 : vector<8x128xf32> to vector<8x128xbf16>
      %c0_50 = arith.constant 0 : index
      %c0_51 = arith.constant 0 : index
      %62 = vector.load %arg4[%c0_50, %c0_51] : memref<128x512xbf16, #tpu.memory_space<vmem>>, vector<128x512xbf16>
      %cst_52 = arith.constant dense<0.000000e+00> : vector<8x512xf32>
      %63 = tpu.matmul %61, %62, %cst_52 {dimension_numbers = #tpu.dot_dimension_numbers<[1], [0], [0], [1], [0, 0, 1, 1], [], []>} : vector<8x128xbf16>, vector<128x512xbf16>, vector<8x512xf32> -> vector<8x512xf32>
      %64 = arith.addf %60, %63 : vector<8x512xf32>
      %65 = vector.extract_strided_slice %64 {offsets = [0, 0], sizes = [8, 128], strides = [1, 1]} : vector<8x512xf32> to vector<8x128xf32>
      %66 = arith.negf %65 : vector<8x128xf32>
      %67 = math.exp %66 : vector<8x128xf32>
      %cst_53 = arith.constant 1.000000e+00 : f32
      %68 = vector.broadcast %cst_53 : f32 to vector<8x128xf32>
      %69 = arith.addf %68, %67 : vector<8x128xf32>
      %70 = arith.divf %68, %69 : vector<8x128xf32>
      %71 = vector.extract_strided_slice %64 {offsets = [0, 128], sizes = [8, 128], strides = [1, 1]} : vector<8x512xf32> to vector<8x128xf32>
      %72 = arith.negf %71 : vector<8x128xf32>
      %73 = math.exp %72 : vector<8x128xf32>
      %cst_54 = arith.constant 1.000000e+00 : f32
      %74 = vector.broadcast %cst_54 : f32 to vector<8x128xf32>
      %75 = arith.addf %74, %73 : vector<8x128xf32>
      %76 = arith.divf %74, %75 : vector<8x128xf32>
      %77 = vector.extract_strided_slice %64 {offsets = [0, 256], sizes = [8, 128], strides = [1, 1]} : vector<8x512xf32> to vector<8x128xf32>
      %78 = math.tanh %77 : vector<8x128xf32>
      %79 = vector.extract_strided_slice %64 {offsets = [0, 384], sizes = [8, 128], strides = [1, 1]} : vector<8x512xf32> to vector<8x128xf32>
      %80 = arith.negf %79 : vector<8x128xf32>
      %81 = math.exp %80 : vector<8x128xf32>
      %cst_55 = arith.constant 1.000000e+00 : f32
      %82 = vector.broadcast %cst_55 : f32 to vector<8x128xf32>
      %83 = arith.addf %82, %81 : vector<8x128xf32>
      %84 = arith.divf %82, %83 : vector<8x128xf32>
      %85 = arith.mulf %76, %54 : vector<8x128xf32>
      %86 = arith.mulf %70, %78 : vector<8x128xf32>
      %87 = arith.addf %85, %86 : vector<8x128xf32>
      %88 = math.tanh %87 : vector<8x128xf32>
      %89 = arith.mulf %84, %88 : vector<8x128xf32>
      %90 = arith.addi %52, %c0_i32_47 : i32
      %91 = vector.broadcast %90 : i32 to vector<8x128xi32>
      %92 = arith.cmpi eq, %49, %91 : vector<8x128xi32>
      %93 = arith.select %92, %89, %55 : vector<8x128xi1>, vector<8x128xf32>
      %c1_i32_56 = arith.constant 1 : i32
      %c8_i32_57 = arith.constant 8 : i32
      %94 = arith.muli %c1_i32_56, %c8_i32_57 : i32
      %95 = arith.addi %51, %94 : i32
      %96 = tpu.assume_multiple %95, 8 : i32
      %97 = arith.index_cast %96 : i32 to index
      %c0_58 = arith.constant 0 : index
      %98 = vector.load %arg9[%97, %c0_58] : memref<128x512xf32, #tpu.memory_space<vmem>>, vector<8x512xf32>
      %99 = arith.truncf %89 : vector<8x128xf32> to vector<8x128xbf16>
      %c0_59 = arith.constant 0 : index
      %c0_60 = arith.constant 0 : index
      %100 = vector.load %arg4[%c0_59, %c0_60] : memref<128x512xbf16, #tpu.memory_space<vmem>>, vector<128x512xbf16>
      %cst_61 = arith.constant dense<0.000000e+00> : vector<8x512xf32>
      %101 = tpu.matmul %99, %100, %cst_61 {dimension_numbers = #tpu.dot_dimension_numbers<[1], [0], [0], [1], [0, 0, 1, 1], [], []>} : vector<8x128xbf16>, vector<128x512xbf16>, vector<8x512xf32> -> vector<8x512xf32>
      %102 = arith.addf %98, %101 : vector<8x512xf32>
      %103 = vector.extract_strided_slice %102 {offsets = [0, 0], sizes = [8, 128], strides = [1, 1]} : vector<8x512xf32> to vector<8x128xf32>
      %104 = arith.negf %103 : vector<8x128xf32>
      %105 = math.exp %104 : vector<8x128xf32>
      %cst_62 = arith.constant 1.000000e+00 : f32
      %106 = vector.broadcast %cst_62 : f32 to vector<8x128xf32>
      %107 = arith.addf %106, %105 : vector<8x128xf32>
      %108 = arith.divf %106, %107 : vector<8x128xf32>
      %109 = vector.extract_strided_slice %102 {offsets = [0, 128], sizes = [8, 128], strides = [1, 1]} : vector<8x512xf32> to vector<8x128xf32>
      %110 = arith.negf %109 : vector<8x128xf32>
      %111 = math.exp %110 : vector<8x128xf32>
      %cst_63 = arith.constant 1.000000e+00 : f32
      %112 = vector.broadcast %cst_63 : f32 to vector<8x128xf32>
      %113 = arith.addf %112, %111 : vector<8x128xf32>
      %114 = arith.divf %112, %113 : vector<8x128xf32>
      %115 = vector.extract_strided_slice %102 {offsets = [0, 256], sizes = [8, 128], strides = [1, 1]} : vector<8x512xf32> to vector<8x128xf32>
      %116 = math.tanh %115 : vector<8x128xf32>
      %117 = vector.extract_strided_slice %102 {offsets = [0, 384], sizes = [8, 128], strides = [1, 1]} : vector<8x512xf32> to vector<8x128xf32>
      %118 = arith.negf %117 : vector<8x128xf32>
      %119 = math.exp %118 : vector<8x128xf32>
      %cst_64 = arith.constant 1.000000e+00 : f32
      %120 = vector.broadcast %cst_64 : f32 to vector<8x128xf32>
      %121 = arith.addf %120, %119 : vector<8x128xf32>
      %122 = arith.divf %120, %121 : vector<8x128xf32>
      %123 = arith.mulf %114, %87 : vector<8x128xf32>
      %124 = arith.mulf %108, %116 : vector<8x128xf32>
      %125 = arith.addf %123, %124 : vector<8x128xf32>
      %126 = math.tanh %125 : vector<8x128xf32>
      %127 = arith.mulf %122, %126 : vector<8x128xf32>
      %128 = arith.addi %52, %c1_i32_56 : i32
      %129 = vector.broadcast %128 : i32 to vector<8x128xi32>
      %130 = arith.cmpi eq, %49, %129 : vector<8x128xi32>
      %131 = arith.select %130, %127, %93 : vector<8x128xi1>, vector<8x128xf32>
      %c2_i32_65 = arith.constant 2 : i32
      %c8_i32_66 = arith.constant 8 : i32
      %132 = arith.muli %c2_i32_65, %c8_i32_66 : i32
      %133 = arith.addi %51, %132 : i32
      %134 = tpu.assume_multiple %133, 8 : i32
      %135 = arith.index_cast %134 : i32 to index
      %c0_67 = arith.constant 0 : index
      %136 = vector.load %arg9[%135, %c0_67] : memref<128x512xf32, #tpu.memory_space<vmem>>, vector<8x512xf32>
      %137 = arith.truncf %127 : vector<8x128xf32> to vector<8x128xbf16>
      %c0_68 = arith.constant 0 : index
      %c0_69 = arith.constant 0 : index
      %138 = vector.load %arg4[%c0_68, %c0_69] : memref<128x512xbf16, #tpu.memory_space<vmem>>, vector<128x512xbf16>
      %cst_70 = arith.constant dense<0.000000e+00> : vector<8x512xf32>
      %139 = tpu.matmul %137, %138, %cst_70 {dimension_numbers = #tpu.dot_dimension_numbers<[1], [0], [0], [1], [0, 0, 1, 1], [], []>} : vector<8x128xbf16>, vector<128x512xbf16>, vector<8x512xf32> -> vector<8x512xf32>
      %140 = arith.addf %136, %139 : vector<8x512xf32>
      %141 = vector.extract_strided_slice %140 {offsets = [0, 0], sizes = [8, 128], strides = [1, 1]} : vector<8x512xf32> to vector<8x128xf32>
      %142 = arith.negf %141 : vector<8x128xf32>
      %143 = math.exp %142 : vector<8x128xf32>
      %cst_71 = arith.constant 1.000000e+00 : f32
      %144 = vector.broadcast %cst_71 : f32 to vector<8x128xf32>
      %145 = arith.addf %144, %143 : vector<8x128xf32>
      %146 = arith.divf %144, %145 : vector<8x128xf32>
      %147 = vector.extract_strided_slice %140 {offsets = [0, 128], sizes = [8, 128], strides = [1, 1]} : vector<8x512xf32> to vector<8x128xf32>
      %148 = arith.negf %147 : vector<8x128xf32>
      %149 = math.exp %148 : vector<8x128xf32>
      %cst_72 = arith.constant 1.000000e+00 : f32
      %150 = vector.broadcast %cst_72 : f32 to vector<8x128xf32>
      %151 = arith.addf %150, %149 : vector<8x128xf32>
      %152 = arith.divf %150, %151 : vector<8x128xf32>
      %153 = vector.extract_strided_slice %140 {offsets = [0, 256], sizes = [8, 128], strides = [1, 1]} : vector<8x512xf32> to vector<8x128xf32>
      %154 = math.tanh %153 : vector<8x128xf32>
      %155 = vector.extract_strided_slice %140 {offsets = [0, 384], sizes = [8, 128], strides = [1, 1]} : vector<8x512xf32> to vector<8x128xf32>
      %156 = arith.negf %155 : vector<8x128xf32>
      %157 = math.exp %156 : vector<8x128xf32>
      %cst_73 = arith.constant 1.000000e+00 : f32
      %158 = vector.broadcast %cst_73 : f32 to vector<8x128xf32>
      %159 = arith.addf %158, %157 : vector<8x128xf32>
      %160 = arith.divf %158, %159 : vector<8x128xf32>
      %161 = arith.mulf %152, %125 : vector<8x128xf32>
      %162 = arith.mulf %146, %154 : vector<8x128xf32>
      %163 = arith.addf %161, %162 : vector<8x128xf32>
      %164 = math.tanh %163 : vector<8x128xf32>
      %165 = arith.mulf %160, %164 : vector<8x128xf32>
      %166 = arith.addi %52, %c2_i32_65 : i32
      %167 = vector.broadcast %166 : i32 to vector<8x128xi32>
      %168 = arith.cmpi eq, %49, %167 : vector<8x128xi32>
      %169 = arith.select %168, %165, %131 : vector<8x128xi1>, vector<8x128xf32>
      %c3_i32 = arith.constant 3 : i32
      %c8_i32_74 = arith.constant 8 : i32
      %170 = arith.muli %c3_i32, %c8_i32_74 : i32
      %171 = arith.addi %51, %170 : i32
      %172 = tpu.assume_multiple %171, 8 : i32
      %173 = arith.index_cast %172 : i32 to index
      %c0_75 = arith.constant 0 : index
      %174 = vector.load %arg9[%173, %c0_75] : memref<128x512xf32, #tpu.memory_space<vmem>>, vector<8x512xf32>
      %175 = arith.truncf %165 : vector<8x128xf32> to vector<8x128xbf16>
      %c0_76 = arith.constant 0 : index
      %c0_77 = arith.constant 0 : index
      %176 = vector.load %arg4[%c0_76, %c0_77] : memref<128x512xbf16, #tpu.memory_space<vmem>>, vector<128x512xbf16>
      %cst_78 = arith.constant dense<0.000000e+00> : vector<8x512xf32>
      %177 = tpu.matmul %175, %176, %cst_78 {dimension_numbers = #tpu.dot_dimension_numbers<[1], [0], [0], [1], [0, 0, 1, 1], [], []>} : vector<8x128xbf16>, vector<128x512xbf16>, vector<8x512xf32> -> vector<8x512xf32>
      %178 = arith.addf %174, %177 : vector<8x512xf32>
      %179 = vector.extract_strided_slice %178 {offsets = [0, 0], sizes = [8, 128], strides = [1, 1]} : vector<8x512xf32> to vector<8x128xf32>
      %180 = arith.negf %179 : vector<8x128xf32>
      %181 = math.exp %180 : vector<8x128xf32>
      %cst_79 = arith.constant 1.000000e+00 : f32
      %182 = vector.broadcast %cst_79 : f32 to vector<8x128xf32>
      %183 = arith.addf %182, %181 : vector<8x128xf32>
      %184 = arith.divf %182, %183 : vector<8x128xf32>
      %185 = vector.extract_strided_slice %178 {offsets = [0, 128], sizes = [8, 128], strides = [1, 1]} : vector<8x512xf32> to vector<8x128xf32>
      %186 = arith.negf %185 : vector<8x128xf32>
      %187 = math.exp %186 : vector<8x128xf32>
      %cst_80 = arith.constant 1.000000e+00 : f32
      %188 = vector.broadcast %cst_80 : f32 to vector<8x128xf32>
      %189 = arith.addf %188, %187 : vector<8x128xf32>
      %190 = arith.divf %188, %189 : vector<8x128xf32>
      %191 = vector.extract_strided_slice %178 {offsets = [0, 256], sizes = [8, 128], strides = [1, 1]} : vector<8x512xf32> to vector<8x128xf32>
      %192 = math.tanh %191 : vector<8x128xf32>
      %193 = vector.extract_strided_slice %178 {offsets = [0, 384], sizes = [8, 128], strides = [1, 1]} : vector<8x512xf32> to vector<8x128xf32>
      %194 = arith.negf %193 : vector<8x128xf32>
      %195 = math.exp %194 : vector<8x128xf32>
      %cst_81 = arith.constant 1.000000e+00 : f32
      %196 = vector.broadcast %cst_81 : f32 to vector<8x128xf32>
      %197 = arith.addf %196, %195 : vector<8x128xf32>
      %198 = arith.divf %196, %197 : vector<8x128xf32>
      %199 = arith.mulf %190, %163 : vector<8x128xf32>
      %200 = arith.mulf %184, %192 : vector<8x128xf32>
      %201 = arith.addf %199, %200 : vector<8x128xf32>
      %202 = math.tanh %201 : vector<8x128xf32>
      %203 = arith.mulf %198, %202 : vector<8x128xf32>
      %204 = arith.addi %52, %c3_i32 : i32
      %205 = vector.broadcast %204 : i32 to vector<8x128xi32>
      %206 = arith.cmpi eq, %49, %205 : vector<8x128xi32>
      %207 = arith.select %206, %203, %169 : vector<8x128xi1>, vector<8x128xf32>
      %c4_i32 = arith.constant 4 : i32
      %c8_i32_82 = arith.constant 8 : i32
      %208 = arith.muli %c4_i32, %c8_i32_82 : i32
      %209 = arith.addi %51, %208 : i32
      %210 = tpu.assume_multiple %209, 8 : i32
      %211 = arith.index_cast %210 : i32 to index
      %c0_83 = arith.constant 0 : index
      %212 = vector.load %arg9[%211, %c0_83] : memref<128x512xf32, #tpu.memory_space<vmem>>, vector<8x512xf32>
      %213 = arith.truncf %203 : vector<8x128xf32> to vector<8x128xbf16>
      %c0_84 = arith.constant 0 : index
      %c0_85 = arith.constant 0 : index
      %214 = vector.load %arg4[%c0_84, %c0_85] : memref<128x512xbf16, #tpu.memory_space<vmem>>, vector<128x512xbf16>
      %cst_86 = arith.constant dense<0.000000e+00> : vector<8x512xf32>
      %215 = tpu.matmul %213, %214, %cst_86 {dimension_numbers = #tpu.dot_dimension_numbers<[1], [0], [0], [1], [0, 0, 1, 1], [], []>} : vector<8x128xbf16>, vector<128x512xbf16>, vector<8x512xf32> -> vector<8x512xf32>
      %216 = arith.addf %212, %215 : vector<8x512xf32>
      %217 = vector.extract_strided_slice %216 {offsets = [0, 0], sizes = [8, 128], strides = [1, 1]} : vector<8x512xf32> to vector<8x128xf32>
      %218 = arith.negf %217 : vector<8x128xf32>
      %219 = math.exp %218 : vector<8x128xf32>
      %cst_87 = arith.constant 1.000000e+00 : f32
      %220 = vector.broadcast %cst_87 : f32 to vector<8x128xf32>
      %221 = arith.addf %220, %219 : vector<8x128xf32>
      %222 = arith.divf %220, %221 : vector<8x128xf32>
      %223 = vector.extract_strided_slice %216 {offsets = [0, 128], sizes = [8, 128], strides = [1, 1]} : vector<8x512xf32> to vector<8x128xf32>
      %224 = arith.negf %223 : vector<8x128xf32>
      %225 = math.exp %224 : vector<8x128xf32>
      %cst_88 = arith.constant 1.000000e+00 : f32
      %226 = vector.broadcast %cst_88 : f32 to vector<8x128xf32>
      %227 = arith.addf %226, %225 : vector<8x128xf32>
      %228 = arith.divf %226, %227 : vector<8x128xf32>
      %229 = vector.extract_strided_slice %216 {offsets = [0, 256], sizes = [8, 128], strides = [1, 1]} : vector<8x512xf32> to vector<8x128xf32>
      %230 = math.tanh %229 : vector<8x128xf32>
      %231 = vector.extract_strided_slice %216 {offsets = [0, 384], sizes = [8, 128], strides = [1, 1]} : vector<8x512xf32> to vector<8x128xf32>
      %232 = arith.negf %231 : vector<8x128xf32>
      %233 = math.exp %232 : vector<8x128xf32>
      %cst_89 = arith.constant 1.000000e+00 : f32
      %234 = vector.broadcast %cst_89 : f32 to vector<8x128xf32>
      %235 = arith.addf %234, %233 : vector<8x128xf32>
      %236 = arith.divf %234, %235 : vector<8x128xf32>
      %237 = arith.mulf %228, %201 : vector<8x128xf32>
      %238 = arith.mulf %222, %230 : vector<8x128xf32>
      %239 = arith.addf %237, %238 : vector<8x128xf32>
      %240 = math.tanh %239 : vector<8x128xf32>
      %241 = arith.mulf %236, %240 : vector<8x128xf32>
      %242 = arith.addi %52, %c4_i32 : i32
      %243 = vector.broadcast %242 : i32 to vector<8x128xi32>
      %244 = arith.cmpi eq, %49, %243 : vector<8x128xi32>
      %245 = arith.select %244, %241, %207 : vector<8x128xi1>, vector<8x128xf32>
      %c5_i32 = arith.constant 5 : i32
      %c8_i32_90 = arith.constant 8 : i32
      %246 = arith.muli %c5_i32, %c8_i32_90 : i32
      %247 = arith.addi %51, %246 : i32
      %248 = tpu.assume_multiple %247, 8 : i32
      %249 = arith.index_cast %248 : i32 to index
      %c0_91 = arith.constant 0 : index
      %250 = vector.load %arg9[%249, %c0_91] : memref<128x512xf32, #tpu.memory_space<vmem>>, vector<8x512xf32>
      %251 = arith.truncf %241 : vector<8x128xf32> to vector<8x128xbf16>
      %c0_92 = arith.constant 0 : index
      %c0_93 = arith.constant 0 : index
      %252 = vector.load %arg4[%c0_92, %c0_93] : memref<128x512xbf16, #tpu.memory_space<vmem>>, vector<128x512xbf16>
      %cst_94 = arith.constant dense<0.000000e+00> : vector<8x512xf32>
      %253 = tpu.matmul %251, %252, %cst_94 {dimension_numbers = #tpu.dot_dimension_numbers<[1], [0], [0], [1], [0, 0, 1, 1], [], []>} : vector<8x128xbf16>, vector<128x512xbf16>, vector<8x512xf32> -> vector<8x512xf32>
      %254 = arith.addf %250, %253 : vector<8x512xf32>
      %255 = vector.extract_strided_slice %254 {offsets = [0, 0], sizes = [8, 128], strides = [1, 1]} : vector<8x512xf32> to vector<8x128xf32>
      %256 = arith.negf %255 : vector<8x128xf32>
      %257 = math.exp %256 : vector<8x128xf32>
      %cst_95 = arith.constant 1.000000e+00 : f32
      %258 = vector.broadcast %cst_95 : f32 to vector<8x128xf32>
      %259 = arith.addf %258, %257 : vector<8x128xf32>
      %260 = arith.divf %258, %259 : vector<8x128xf32>
      %261 = vector.extract_strided_slice %254 {offsets = [0, 128], sizes = [8, 128], strides = [1, 1]} : vector<8x512xf32> to vector<8x128xf32>
      %262 = arith.negf %261 : vector<8x128xf32>
      %263 = math.exp %262 : vector<8x128xf32>
      %cst_96 = arith.constant 1.000000e+00 : f32
      %264 = vector.broadcast %cst_96 : f32 to vector<8x128xf32>
      %265 = arith.addf %264, %263 : vector<8x128xf32>
      %266 = arith.divf %264, %265 : vector<8x128xf32>
      %267 = vector.extract_strided_slice %254 {offsets = [0, 256], sizes = [8, 128], strides = [1, 1]} : vector<8x512xf32> to vector<8x128xf32>
      %268 = math.tanh %267 : vector<8x128xf32>
      %269 = vector.extract_strided_slice %254 {offsets = [0, 384], sizes = [8, 128], strides = [1, 1]} : vector<8x512xf32> to vector<8x128xf32>
      %270 = arith.negf %269 : vector<8x128xf32>
      %271 = math.exp %270 : vector<8x128xf32>
      %cst_97 = arith.constant 1.000000e+00 : f32
      %272 = vector.broadcast %cst_97 : f32 to vector<8x128xf32>
      %273 = arith.addf %272, %271 : vector<8x128xf32>
      %274 = arith.divf %272, %273 : vector<8x128xf32>
      %275 = arith.mulf %266, %239 : vector<8x128xf32>
      %276 = arith.mulf %260, %268 : vector<8x128xf32>
      %277 = arith.addf %275, %276 : vector<8x128xf32>
      %278 = math.tanh %277 : vector<8x128xf32>
      %279 = arith.mulf %274, %278 : vector<8x128xf32>
      %280 = arith.addi %52, %c5_i32 : i32
      %281 = vector.broadcast %280 : i32 to vector<8x128xi32>
      %282 = arith.cmpi eq, %49, %281 : vector<8x128xi32>
      %283 = arith.select %282, %279, %245 : vector<8x128xi1>, vector<8x128xf32>
      %c6_i32 = arith.constant 6 : i32
      %c8_i32_98 = arith.constant 8 : i32
      %284 = arith.muli %c6_i32, %c8_i32_98 : i32
      %285 = arith.addi %51, %284 : i32
      %286 = tpu.assume_multiple %285, 8 : i32
      %287 = arith.index_cast %286 : i32 to index
      %c0_99 = arith.constant 0 : index
      %288 = vector.load %arg9[%287, %c0_99] : memref<128x512xf32, #tpu.memory_space<vmem>>, vector<8x512xf32>
      %289 = arith.truncf %279 : vector<8x128xf32> to vector<8x128xbf16>
      %c0_100 = arith.constant 0 : index
      %c0_101 = arith.constant 0 : index
      %290 = vector.load %arg4[%c0_100, %c0_101] : memref<128x512xbf16, #tpu.memory_space<vmem>>, vector<128x512xbf16>
      %cst_102 = arith.constant dense<0.000000e+00> : vector<8x512xf32>
      %291 = tpu.matmul %289, %290, %cst_102 {dimension_numbers = #tpu.dot_dimension_numbers<[1], [0], [0], [1], [0, 0, 1, 1], [], []>} : vector<8x128xbf16>, vector<128x512xbf16>, vector<8x512xf32> -> vector<8x512xf32>
      %292 = arith.addf %288, %291 : vector<8x512xf32>
      %293 = vector.extract_strided_slice %292 {offsets = [0, 0], sizes = [8, 128], strides = [1, 1]} : vector<8x512xf32> to vector<8x128xf32>
      %294 = arith.negf %293 : vector<8x128xf32>
      %295 = math.exp %294 : vector<8x128xf32>
      %cst_103 = arith.constant 1.000000e+00 : f32
      %296 = vector.broadcast %cst_103 : f32 to vector<8x128xf32>
      %297 = arith.addf %296, %295 : vector<8x128xf32>
      %298 = arith.divf %296, %297 : vector<8x128xf32>
      %299 = vector.extract_strided_slice %292 {offsets = [0, 128], sizes = [8, 128], strides = [1, 1]} : vector<8x512xf32> to vector<8x128xf32>
      %300 = arith.negf %299 : vector<8x128xf32>
      %301 = math.exp %300 : vector<8x128xf32>
      %cst_104 = arith.constant 1.000000e+00 : f32
      %302 = vector.broadcast %cst_104 : f32 to vector<8x128xf32>
      %303 = arith.addf %302, %301 : vector<8x128xf32>
      %304 = arith.divf %302, %303 : vector<8x128xf32>
      %305 = vector.extract_strided_slice %292 {offsets = [0, 256], sizes = [8, 128], strides = [1, 1]} : vector<8x512xf32> to vector<8x128xf32>
      %306 = math.tanh %305 : vector<8x128xf32>
      %307 = vector.extract_strided_slice %292 {offsets = [0, 384], sizes = [8, 128], strides = [1, 1]} : vector<8x512xf32> to vector<8x128xf32>
      %308 = arith.negf %307 : vector<8x128xf32>
      %309 = math.exp %308 : vector<8x128xf32>
      %cst_105 = arith.constant 1.000000e+00 : f32
      %310 = vector.broadcast %cst_105 : f32 to vector<8x128xf32>
      %311 = arith.addf %310, %309 : vector<8x128xf32>
      %312 = arith.divf %310, %311 : vector<8x128xf32>
      %313 = arith.mulf %304, %277 : vector<8x128xf32>
      %314 = arith.mulf %298, %306 : vector<8x128xf32>
      %315 = arith.addf %313, %314 : vector<8x128xf32>
      %316 = math.tanh %315 : vector<8x128xf32>
      %317 = arith.mulf %312, %316 : vector<8x128xf32>
      %318 = arith.addi %52, %c6_i32 : i32
      %319 = vector.broadcast %318 : i32 to vector<8x128xi32>
      %320 = arith.cmpi eq, %49, %319 : vector<8x128xi32>
      %321 = arith.select %320, %317, %283 : vector<8x128xi1>, vector<8x128xf32>
      %c7_i32 = arith.constant 7 : i32
      %c8_i32_106 = arith.constant 8 : i32
      %322 = arith.muli %c7_i32, %c8_i32_106 : i32
      %323 = arith.addi %51, %322 : i32
      %324 = tpu.assume_multiple %323, 8 : i32
      %325 = arith.index_cast %324 : i32 to index
      %c0_107 = arith.constant 0 : index
      %326 = vector.load %arg9[%325, %c0_107] : memref<128x512xf32, #tpu.memory_space<vmem>>, vector<8x512xf32>
      %327 = arith.truncf %317 : vector<8x128xf32> to vector<8x128xbf16>
      %c0_108 = arith.constant 0 : index
      %c0_109 = arith.constant 0 : index
      %328 = vector.load %arg4[%c0_108, %c0_109] : memref<128x512xbf16, #tpu.memory_space<vmem>>, vector<128x512xbf16>
      %cst_110 = arith.constant dense<0.000000e+00> : vector<8x512xf32>
      %329 = tpu.matmul %327, %328, %cst_110 {dimension_numbers = #tpu.dot_dimension_numbers<[1], [0], [0], [1], [0, 0, 1, 1], [], []>} : vector<8x128xbf16>, vector<128x512xbf16>, vector<8x512xf32> -> vector<8x512xf32>
      %330 = arith.addf %326, %329 : vector<8x512xf32>
      %331 = vector.extract_strided_slice %330 {offsets = [0, 0], sizes = [8, 128], strides = [1, 1]} : vector<8x512xf32> to vector<8x128xf32>
      %332 = arith.negf %331 : vector<8x128xf32>
      %333 = math.exp %332 : vector<8x128xf32>
      %cst_111 = arith.constant 1.000000e+00 : f32
      %334 = vector.broadcast %cst_111 : f32 to vector<8x128xf32>
      %335 = arith.addf %334, %333 : vector<8x128xf32>
      %336 = arith.divf %334, %335 : vector<8x128xf32>
      %337 = vector.extract_strided_slice %330 {offsets = [0, 128], sizes = [8, 128], strides = [1, 1]} : vector<8x512xf32> to vector<8x128xf32>
      %338 = arith.negf %337 : vector<8x128xf32>
      %339 = math.exp %338 : vector<8x128xf32>
      %cst_112 = arith.constant 1.000000e+00 : f32
      %340 = vector.broadcast %cst_112 : f32 to vector<8x128xf32>
      %341 = arith.addf %340, %339 : vector<8x128xf32>
      %342 = arith.divf %340, %341 : vector<8x128xf32>
      %343 = vector.extract_strided_slice %330 {offsets = [0, 256], sizes = [8, 128], strides = [1, 1]} : vector<8x512xf32> to vector<8x128xf32>
      %344 = math.tanh %343 : vector<8x128xf32>
      %345 = vector.extract_strided_slice %330 {offsets = [0, 384], sizes = [8, 128], strides = [1, 1]} : vector<8x512xf32> to vector<8x128xf32>
      %346 = arith.negf %345 : vector<8x128xf32>
      %347 = math.exp %346 : vector<8x128xf32>
      %cst_113 = arith.constant 1.000000e+00 : f32
      %348 = vector.broadcast %cst_113 : f32 to vector<8x128xf32>
      %349 = arith.addf %348, %347 : vector<8x128xf32>
      %350 = arith.divf %348, %349 : vector<8x128xf32>
      %351 = arith.mulf %342, %315 : vector<8x128xf32>
      %352 = arith.mulf %336, %344 : vector<8x128xf32>
      %353 = arith.addf %351, %352 : vector<8x128xf32>
      %354 = math.tanh %353 : vector<8x128xf32>
      %355 = arith.mulf %350, %354 : vector<8x128xf32>
      %356 = arith.addi %52, %c7_i32 : i32
      %357 = vector.broadcast %356 : i32 to vector<8x128xi32>
      %358 = arith.cmpi eq, %49, %357 : vector<8x128xi32>
      %359 = arith.select %358, %355, %321 : vector<8x128xi1>, vector<8x128xf32>
      %c8_i32_114 = arith.constant 8 : i32
      %c0_115 = arith.constant 0 : index
      %c0_116 = arith.constant 0 : index
      %360 = vector.load %arg10[%c0_115, %c0_116] : memref<8x128xf32, #tpu.memory_space<vmem>>, vector<8x128xf32>
      tpu.vector_store %arg10[%c0_115, %c0_116], %355 {strides = array<i32>} : memref<8x128xf32, #tpu.memory_space<vmem>>, vector<8x128xf32>,
      %c0_117 = arith.constant 0 : index
      %c0_118 = arith.constant 0 : index
      %361 = vector.load %arg11[%c0_117, %c0_118] : memref<8x128xf32, #tpu.memory_space<vmem>>, vector<8x128xf32>
      tpu.vector_store %arg11[%c0_117, %c0_118], %353 {strides = array<i32>} : memref<8x128xf32, #tpu.memory_space<vmem>>, vector<8x128xf32>,
      %c0_119 = arith.constant 0 : index
      %c0_120 = arith.constant 0 : index
      %362 = vector.load %arg12[%c0_119, %c0_120] : memref<8x128xf32, #tpu.memory_space<vmem>>, vector<8x128xf32>
      tpu.vector_store %arg12[%c0_119, %c0_120], %359 {strides = array<i32>} : memref<8x128xf32, #tpu.memory_space<vmem>>, vector<8x128xf32>,
    }
    %c2_i32_16 = arith.constant 2 : i32
    %c0_17 = arith.constant 0 : index
    %c0_18 = arith.constant 0 : index
    %14 = vector.load %arg12[%c0_17, %c0_18] : memref<8x128xf32, #tpu.memory_space<vmem>>, vector<8x128xf32>
    %c0_19 = arith.constant 0 : index
    %c0_20 = arith.constant 0 : index
    %15 = vector.load %arg6[%c0_19, %c0_20] : memref<1x128xf32, #tpu.memory_space<vmem>>, vector<1x128xf32>
    %16 = vector.broadcast %15 : vector<1x128xf32> to vector<8x128xf32>
    %17 = arith.mulf %14, %16 : vector<8x128xf32>
    %cst_21 = arith.constant dense<0.000000e+00> : vector<8xf32>
    %18 = vector.multi_reduction <add>, %17, %cst_21 [1] : vector<8x128xf32> to vector<8xf32>
    %19 = vector.shape_cast %18 : vector<8xf32> to vector<8x1xf32>
    %c0_22 = arith.constant 0 : index
    %c0_23 = arith.constant 0 : index
    %20 = vector.load %arg7[%c0_22, %c0_23] : memref<1x1xf32, #tpu.memory_space<vmem>>, vector<1x1xf32>
    %21 = vector.broadcast %20 : vector<1x1xf32> to vector<8x1xf32>
    %22 = arith.addf %19, %21 : vector<8x1xf32>
    %23 = arith.negf %22 : vector<8x1xf32>
    %24 = math.exp %23 : vector<8x1xf32>
    %cst_24 = arith.constant 1.000000e+00 : f32
    %25 = vector.broadcast %cst_24 : f32 to vector<8x1xf32>
    %26 = arith.addf %25, %24 : vector<8x1xf32>
    %27 = arith.divf %25, %26 : vector<8x1xf32>
    %c0_25 = arith.constant 0 : index
    %c0_26 = arith.constant 0 : index
    %28 = vector.load %arg8[%c0_25, %c0_26] : memref<8x1xf32, #tpu.memory_space<vmem>>, vector<8x1xf32>
    tpu.vector_store %arg8[%c0_25, %c0_26], %27 {strides = array<i32>} : memref<8x1xf32, #tpu.memory_space<vmem>>, vector<8x1xf32>,
    return
  }
  func.func @transform_0(%arg0: i32) -> (i32, i32) {
    %c0_i32 = arith.constant 0 : i32
    %c0_i32_0 = arith.constant 0 : i32
    return %arg0, %c0_i32 : i32, i32
  }
  func.func @transform_1(%arg0: i32) -> (i32, i32) {
    %c0_i32 = arith.constant 0 : i32
    %c0_i32_0 = arith.constant 0 : i32
    return %arg0, %c0_i32 : i32, i32
  }
  func.func @transform_2(%arg0: i32) -> (i32, i32) {
    %c0_i32 = arith.constant 0 : i32
    %c0_i32_0 = arith.constant 0 : i32
    %c0_i32_1 = arith.constant 0 : i32
    return %c0_i32, %c0_i32_0 : i32, i32
  }
  func.func @transform_3(%arg0: i32) -> (i32, i32) {
    %c0_i32 = arith.constant 0 : i32
    %c0_i32_0 = arith.constant 0 : i32
    %c0_i32_1 = arith.constant 0 : i32
    return %c0_i32, %c0_i32_0 : i32, i32
  }
  func.func @transform_4(%arg0: i32) -> (i32, i32) {
    %c0_i32 = arith.constant 0 : i32
    %c0_i32_0 = arith.constant 0 : i32
    %c0_i32_1 = arith.constant 0 : i32
    return %c0_i32, %c0_i32_0 : i32, i32
  }
  func.func @transform_5(%arg0: i32) -> (i32, i32) {
    %c0_i32 = arith.constant 0 : i32
    %c0_i32_0 = arith.constant 0 : i32
    %c0_i32_1 = arith.constant 0 : i32
    return %c0_i32, %c0_i32_0 : i32, i32
  }
  func.func @transform_6(%arg0: i32) -> (i32, i32) {
    %c0_i32 = arith.constant 0 : i32
    %c0_i32_0 = arith.constant 0 : i32
    %c0_i32_1 = arith.constant 0 : i32
    return %c0_i32, %c0_i32_0 : i32, i32
  }
  func.func @transform_7(%arg0: i32) -> (i32, i32) {
    %c0_i32 = arith.constant 0 : i32
    %c0_i32_0 = arith.constant 0 : i32
    return %arg0, %c0_i32 : i32, i32
  }
}

</mosaic_0001>

<llo_original>
// kernel: tpu_custom_call.1
$region0: #{tpu_custom_call.1}
  #allocation0 [shape = 'u32[]', space=smem, size = 0x4, offset = 0x4, fixed_abs, tag = 'smem constant byte address 0x4 - core index']
  #allocation1 [shape = 'u32[72,128]{1,0:T(1,128)}', space=vmem, size = 0x9000, scoped, tag = 'internal scratch']
  #allocation2 [shape = 'f32[128,512]{1,0:T(8,128)}', space=vmem, size = 0x40000, scoped, tag = 'scratch operand']
  #allocation3 [shape = 'f32[8,128]{1,0:T(8,128)}', space=vmem, size = 0x1000, scoped, tag = 'scratch operand']
  #allocation4 [shape = 'f32[8,128]{1,0:T(8,128)}', space=vmem, size = 0x1000, scoped, tag = 'scratch operand']
  #allocation5 [shape = 'f32[8,128]{1,0:T(8,128)}', space=vmem, size = 0x1000, scoped, tag = 'scratch operand']
  #allocation6 [shape = 'f32[1,1]{1,0:T(1,128)S(1)}', space=vmem, size = 0x200, scoped, tag = 'scoped memory for tpu_custom_call.1']
  %s0 = inlined_call_operand.vmem [shape: s32[8,1], index: 0, kind: input, shape index: {}]
  %s1 = inlined_call_operand.hbm [shape: bf16[128,256], index: 1, kind: input, shape index: {}]
  %s2 = inlined_call_operand.hbm [shape: bf16[256,512], index: 2, kind: input, shape index: {}]
  %s3 = inlined_call_operand.hbm [shape: bf16[128,512], index: 3, kind: input, shape index: {}]
  %s4 = inlined_call_operand.vmem [shape: f32[1,512], index: 4, kind: input, shape index: {}]
  %s5 = inlined_call_operand.vmem [shape: f32[1,128], index: 5, kind: input, shape index: {}]
  %s6 = inlined_call_operand.<no memory space> [shape: f32[1,1], index: 6, kind: input, shape index: {}]
  %s7 = inlined_call_operand.vmem [shape: f32[8,1], index: 7, kind: output, shape index: {}]
  %s8 = sld [smem:[#allocation0]]
  $region61: #{tpu_custom_call.1} parent=0
    _
  %s10 = ssub.s32 1, %s8
  %s11 = scalar_select 0, %s10, %s8
  %v12 = vstv %s6
  %13 = vst [vmem:[#allocation6] sm:$0x1] %v12
  $region1: #{tpu_custom_call.1} parent=0
    #allocation7 [shape = 'u8[65536]{0}', space=vmem, size = 0x10000, scoped, tag = 'input window, operand 1, single buffered']
    #allocation8 [shape = 's32[1]{0}', space=sflag, size = 0x4, scoped, tag = 'scoped memory for tpu_custom_call.1']
    #allocation9 [shape = 'u8[262144]{0}', space=vmem, size = 0x40000, scoped, tag = 'input window, operand 2, single buffered']
    #allocation10 [shape = 's32[1]{0}', space=sflag, size = 0x4, scoped, tag = 'scoped memory for tpu_custom_call.1']
    #allocation11 [shape = 'u8[131072]{0}', space=vmem, size = 0x20000, scoped, tag = 'input window, operand 3, single buffered']
    %14 = vsyncpa [#allocation8], 0
    %15 = vsyncpa [#allocation10], 0
    // Predicated region
    $region2: #{tpu_custom_call.1} parent=1 // pred_check
      _
    $region3: #{tpu_custom_call.1} parent=1 // pred_check_branch
      %17 = sbr.rel (0) target = $region5
    $region4: #{tpu_custom_call.1} parent=1 // pred_region
      _
    $region5: #{tpu_custom_call.1} parent=1 // pred_fallthru
      _
    // Predicated region
    $region6: #{tpu_custom_call.1} parent=1 // pred_check
      _
    $region7: #{tpu_custom_call.1} parent=1 // pred_check_branch
      %19 = sbr.rel (0) target = $region9
    $region8: #{tpu_custom_call.1} parent=1 // pred_region
      %21 = vsyncadd [#allocation8], 0
      %s22 = sshll.u32 %s1, 4
      %s23 = int_to_ptr.hbm [resolvable:$true] %s22
      %s24 = sshll.u32 [#allocation7], 4
      %s25 = int_to_ptr.vmem [resolvable:$true] %s24
      %30 = dma.hbm_to_vmem [thread:$0]  %s23, 2048, %s25, [#allocation8], 128, 128, 8
    $region9: #{tpu_custom_call.1} parent=1 // pred_fallthru
      _
    // Predicated region
    $region10: #{tpu_custom_call.1} parent=1 // pred_check
      _
    $region11: #{tpu_custom_call.1} parent=1 // pred_check_branch
      %32 = sbr.rel (0) target = $region13
    $region12: #{tpu_custom_call.1} parent=1 // pred_region
      %34 = vsyncadd [#allocation10], 0
      %s35 = sshll.u32 %s2, 4
      %s36 = int_to_ptr.hbm [resolvable:$true] %s35
      %s37 = sshll.u32 [#allocation9], 4
      %s38 = int_to_ptr.vmem [resolvable:$true] %s37
      %43 = dma.hbm_to_vmem [thread:$0]  %s36, 8192, %s38, [#allocation10], 256, 256, 16
    $region13: #{tpu_custom_call.1} parent=1 // pred_fallthru
      _
    // Predicated region
    $region14: #{tpu_custom_call.1} parent=1 // pred_check
      _
    $region15: #{tpu_custom_call.1} parent=1 // pred_check_branch
      %45 = sbr.rel (0) target = $region17
    $region16: #{tpu_custom_call.1} parent=1 // pred_region
      %47 = vsyncadd [#allocation10], 0
      %s48 = sshll.u32 %s3, 4
      %s49 = int_to_ptr.hbm [resolvable:$true] %s48
      %s50 = sshll.u32 [#allocation11], 4
      %s51 = int_to_ptr.vmem [resolvable:$true] %s50
      %56 = dma.hbm_to_vmem [thread:$0]  %s49, 4096, %s51, [#allocation10], 256, 256, 16
    $region17: #{tpu_custom_call.1} parent=1 // pred_fallthru
      _
    // Predicated region
    $region18: #{tpu_custom_call.1} parent=1 // pred_check
      _
    $region19: #{tpu_custom_call.1} parent=1 // pred_check_branch
      %58 = sbr.rel (0) target = $region21
    $region20: #{tpu_custom_call.1} parent=1 // pred_region
      _
    $region21: #{tpu_custom_call.1} parent=1 // pred_fallthru
      _
    // Predicated region
    $region22: #{tpu_custom_call.1} parent=1 // pred_check
      _
    $region23: #{tpu_custom_call.1} parent=1 // pred_check_branch
      %60 = sbr.rel (0) target = $region25
    $region24: #{tpu_custom_call.1} parent=1 // pred_region
      _
    $region25: #{tpu_custom_call.1} parent=1 // pred_fallthru
      _
    // Predicated region
    $region26: #{tpu_custom_call.1} parent=1 // pred_check
      _
    $region27: #{tpu_custom_call.1} parent=1 // pred_check_branch
      %62 = sbr.rel (0) target = $region29
    $region28: #{tpu_custom_call.1} parent=1 // pred_region
      _
    $region29: #{tpu_custom_call.1} parent=1 // pred_fallthru
      _
    // Predicated region
    $region30: #{tpu_custom_call.1} parent=1 // pred_check
      _
    $region31: #{tpu_custom_call.1} parent=1 // pred_check_branch
      %64 = sbr.rel (0) target = $region33
    $region32: #{tpu_custom_call.1} parent=1 // pred_region
      %66 = dma.done [#allocation8], 2048
    $region33: #{tpu_custom_call.1} parent=1 // pred_fallthru
      _
    // Predicated region
    $region34: #{tpu_custom_call.1} parent=1 // pred_check
      _
    $region35: #{tpu_custom_call.1} parent=1 // pred_check_branch
      %68 = sbr.rel (0) target = $region37
    $region36: #{tpu_custom_call.1} parent=1 // pred_region
      %70 = dma.done [#allocation10], 8192
    $region37: #{tpu_custom_call.1} parent=1 // pred_fallthru
      _
    // Predicated region
    $region38: #{tpu_custom_call.1} parent=1 // pred_check
      _
    $region39: #{tpu_custom_call.1} parent=1 // pred_check_branch
      %72 = sbr.rel (0) target = $region41
    $region40: #{tpu_custom_call.1} parent=1 // pred_region
      %74 = dma.done [#allocation10], 4096
    $region41: #{tpu_custom_call.1} parent=1 // pred_fallthru
      _
    %75 = vst [vmem:[#allocation3] sm:$0xff] 0.0
    %76 = vst [vmem:[#allocation4] sm:$0xff] 0.0
    %77 = vst [vmem:[#allocation5] sm:$0xff] 0.0
    %v78 = vld [vmem:[#allocation7] sm:$0xff]
    %v79 = vld [vmem:[#allocation7 + $0x8] sm:$0xff]
    %v80 = vld [vmem:[#allocation7 + $0x10] sm:$0xff]
    %v81 = vld [vmem:[#allocation7 + $0x18] sm:$0xff]
    %v82 = vld [vmem:[#allocation7 + $0x20] sm:$0xff]
    %v83 = vld [vmem:[#allocation7 + $0x28] sm:$0xff]
    %v84 = vld [vmem:[#allocation7 + $0x30] sm:$0xff]
    %v85 = vld [vmem:[#allocation7 + $0x38] sm:$0xff]
    %v86 = vld [vmem:[#allocation9] sm:$0xff]
    %v87 = vld [vmem:[#allocation9 + $0x8] sm:$0xff]
    %v88 = vld [vmem:[#allocation9 + $0x10] sm:$0xff]
    %v89 = vld [vmem:[#allocation9 + $0x18] sm:$0xff]
    %v90 = vld [vmem:[#allocation9 + $0x20] sm:$0xff]
    %v91 = vld [vmem:[#allocation9 + $0x28] sm:$0xff]
    %v92 = vld [vmem:[#allocation9 + $0x30] sm:$0xff]
    %v93 = vld [vmem:[#allocation9 + $0x38] sm:$0xff]
    %v94 = vld [vmem:[#allocation9 + $0x40] sm:$0xff]
    %v95 = vld [vmem:[#allocation9 + $0x48] sm:$0xff]
    %v96 = vld [vmem:[#allocation9 + $0x50] sm:$0xff]
    %v97 = vld [vmem:[#allocation9 + $0x58] sm:$0xff]
    %v98 = vld [vmem:[#allocation9 + $0x60] sm:$0xff]
    %v99 = vld [vmem:[#allocation9 + $0x68] sm:$0xff]
    %v100 = vld [vmem:[#allocation9 + $0x70] sm:$0xff]
    %v101 = vld [vmem:[#allocation9 + $0x78] sm:$0xff]
    %v102 = vld [vmem:[#allocation9 + $0x80] sm:$0xff]
    %v103 = vld [vmem:[#allocation9 + $0x88] sm:$0xff]
    %v104 = vld [vmem:[#allocation9 + $0x90] sm:$0xff]
    %v105 = vld [vmem:[#allocation9 + $0x98] sm:$0xff]
    %v106 = vld [vmem:[#allocation9 + $0xa0] sm:$0xff]
    %v107 = vld [vmem:[#allocation9 + $0xa8] sm:$0xff]
    %v108 = vld [vmem:[#allocation9 + $0xb0] sm:$0xff]
    %v109 = vld [vmem:[#allocation9 + $0xb8] sm:$0xff]
    %v110 = vld [vmem:[#allocation9 + $0xc0] sm:$0xff]
    %v111 = vld [vmem:[#allocation9 + $0xc8] sm:$0xff]
    %v112 = vld [vmem:[#allocation9 + $0xd0] sm:$0xff]
    %v113 = vld [vmem:[#allocation9 + $0xd8] sm:$0xff]
    %v114 = vld [vmem:[#allocation9 + $0xe0] sm:$0xff]
    %v115 = vld [vmem:[#allocation9 + $0xe8] sm:$0xff]
    %v116 = vld [vmem:[#allocation9 + $0xf0] sm:$0xff]
    %v117 = vld [vmem:[#allocation9 + $0xf8] sm:$0xff]
    %v118 = vld [vmem:[#allocation9 + $0x100] sm:$0xff]
    %v119 = vld [vmem:[#allocation9 + $0x108] sm:$0xff]
    %v120 = vld [vmem:[#allocation9 + $0x110] sm:$0xff]
    %v121 = vld [vmem:[#allocation9 + $0x118] sm:$0xff]
    %v122 = vld [vmem:[#allocation9 + $0x120] sm:$0xff]
    %v123 = vld [vmem:[#allocation9 + $0x128] sm:$0xff]
    %v124 = vld [vmem:[#allocation9 + $0x130] sm:$0xff]
    %v125 = vld [vmem:[#allocation9 + $0x138] sm:$0xff]
    %v126 = vld [vmem:[#allocation9 + $0x140] sm:$0xff]
    %v127 = vld [vmem:[#allocation9 + $0x148] sm:$0xff]
    %v128 = vld [vmem:[#allocation9 + $0x150] sm:$0xff]
    %v129 = vld [vmem:[#allocation9 + $0x158] sm:$0xff]
    %v130 = vld [vmem:[#allocation9 + $0x160] sm:$0xff]
    %v131 = vld [vmem:[#allocation9 + $0x168] sm:$0xff]
    %v132 = vld [vmem:[#allocation9 + $0x170] sm:$0xff]
    %v133 = vld [vmem:[#allocation9 + $0x178] sm:$0xff]
    %v134 = vld [vmem:[#allocation9 + $0x180] sm:$0xff]
    %v135 = vld [vmem:[#allocation9 + $0x188] sm:$0xff]
    %v136 = vld [vmem:[#allocation9 + $0x190] sm:$0xff]
    %v137 = vld [vmem:[#allocation9 + $0x198] sm:$0xff]
    %v138 = vld [vmem:[#allocation9 + $0x1a0] sm:$0xff]
    %v139 = vld [vmem:[#allocation9 + $0x1a8] sm:$0xff]
    %v140 = vld [vmem:[#allocation9 + $0x1b0] sm:$0xff]
    %v141 = vld [vmem:[#allocation9 + $0x1b8] sm:$0xff]
    %v142 = vld [vmem:[#allocation9 + $0x1c0] sm:$0xff]
    %v143 = vld [vmem:[#allocation9 + $0x1c8] sm:$0xff]
    %v144 = vld [vmem:[#allocation9 + $0x1d0] sm:$0xff]
    %v145 = vld [vmem:[#allocation9 + $0x1d8] sm:$0xff]
    %v146 = vld [vmem:[#allocation9 + $0x1e0] sm:$0xff]
    %v147 = vld [vmem:[#allocation9 + $0x1e8] sm:$0xff]
    %v148 = vld [vmem:[#allocation9 + $0x1f0] sm:$0xff]
    %v149 = vld [vmem:[#allocation9 + $0x1f8] sm:$0xff]
    %v150 = vld [vmem:[%s4] sm:$0xf]
    %v152 = vperm.slane %v150, 0
    %v153 = vperm.slane %v150, 1
    %v154 = vperm.slane %v150, 2
    %v155 = vperm.slane %v150, 3
    %v168 = vunpack.c.l.b16 %v78
    %v169 = vunpack.c.h.b16 %v78
    %v170 = vunpack.c.l.b16 %v79
    %v171 = vunpack.c.h.b16 %v79
    %v172 = vunpack.c.l.b16 %v80
    %v173 = vunpack.c.h.b16 %v80
    %v174 = vunpack.c.l.b16 %v81
    %v175 = vunpack.c.h.b16 %v81
    %v176 = vunpack.c.l.b16 %v82
    %v177 = vunpack.c.h.b16 %v82
    %v178 = vunpack.c.l.b16 %v83
    %v179 = vunpack.c.h.b16 %v83
    %v180 = vunpack.c.l.b16 %v84
    %v181 = vunpack.c.h.b16 %v84
    %v182 = vunpack.c.l.b16 %v85
    %v183 = vunpack.c.h.b16 %v85
    %v184 = vpack.c.b16 %v170, %v168
    %v185 = vpack.c.b16 %v171, %v169
    %v186 = vpack.c.b16 %v174, %v172
    %v187 = vpack.c.b16 %v175, %v173
    %v188 = vpack.c.b16 %v178, %v176
    %v189 = vpack.c.b16 %v179, %v177
    %v190 = vpack.c.b16 %v182, %v180
    %v191 = vpack.c.b16 %v183, %v181
    %v264 = vunpack.c.l.b16 %v86
    %v265 = vunpack.c.h.b16 %v86
    %v266 = vunpack.c.l.b16 %v87
    %v267 = vunpack.c.h.b16 %v87
    %v268 = vunpack.c.l.b16 %v88
    %v269 = vunpack.c.h.b16 %v88
    %v270 = vunpack.c.l.b16 %v89
    %v271 = vunpack.c.h.b16 %v89
    %v272 = vunpack.c.l.b16 %v90
    %v273 = vunpack.c.h.b16 %v90
    %v274 = vunpack.c.l.b16 %v91
    %v275 = vunpack.c.h.b16 %v91
    %v276 = vunpack.c.l.b16 %v92
    %v277 = vunpack.c.h.b16 %v92
    %v278 = vunpack.c.l.b16 %v93
    %v279 = vunpack.c.h.b16 %v93
    %v280 = vunpack.c.l.b16 %v94
    %v281 = vunpack.c.h.b16 %v94
    %v282 = vunpack.c.l.b16 %v95
    %v283 = vunpack.c.h.b16 %v95
    %v284 = vunpack.c.l.b16 %v96
    %v285 = vunpack.c.h.b16 %v96
    %v286 = vunpack.c.l.b16 %v97
    %v287 = vunpack.c.h.b16 %v97
    %v288 = vunpack.c.l.b16 %v98
    %v289 = vunpack.c.h.b16 %v98
    %v290 = vunpack.c.l.b16 %v99
    %v291 = vunpack.c.h.b16 %v99
    %v292 = vunpack.c.l.b16 %v100
    %v293 = vunpack.c.h.b16 %v100
    %v294 = vunpack.c.l.b16 %v101
    %v295 = vunpack.c.h.b16 %v101
    %v296 = vunpack.c.l.b16 %v102
    %v297 = vunpack.c.h.b16 %v102
    %v298 = vunpack.c.l.b16 %v103
    %v299 = vunpack.c.h.b16 %v103
    %v300 = vunpack.c.l.b16 %v104
    %v301 = vunpack.c.h.b16 %v104
    %v302 = vunpack.c.l.b16 %v105
    %v303 = vunpack.c.h.b16 %v105
    %v304 = vunpack.c.l.b16 %v106
    %v305 = vunpack.c.h.b16 %v106
    %v306 = vunpack.c.l.b16 %v107
    %v307 = vunpack.c.h.b16 %v107
    %v308 = vunpack.c.l.b16 %v108
    %v309 = vunpack.c.h.b16 %v108
    %v310 = vunpack.c.l.b16 %v109
    %v311 = vunpack.c.h.b16 %v109
    %v312 = vunpack.c.l.b16 %v110
    %v313 = vunpack.c.h.b16 %v110
    %v314 = vunpack.c.l.b16 %v111
    %v315 = vunpack.c.h.b16 %v111
    %v316 = vunpack.c.l.b16 %v112
    %v317 = vunpack.c.h.b16 %v112
    %v318 = vunpack.c.l.b16 %v113
    %v319 = vunpack.c.h.b16 %v113
    %v320 = vunpack.c.l.b16 %v114
    %v321 = vunpack.c.h.b16 %v114
    %v322 = vunpack.c.l.b16 %v115
    %v323 = vunpack.c.h.b16 %v115
    %v324 = vunpack.c.l.b16 %v116
    %v325 = vunpack.c.h.b16 %v116
    %v326 = vunpack.c.l.b16 %v117
    %v327 = vunpack.c.h.b16 %v117
    %v328 = vunpack.c.l.b16 %v118
    %v329 = vunpack.c.h.b16 %v118
    %v330 = vunpack.c.l.b16 %v119
    %v331 = vunpack.c.h.b16 %v119
    %v332 = vunpack.c.l.b16 %v120
    %v333 = vunpack.c.h.b16 %v120
    %v334 = vunpack.c.l.b16 %v121
    %v335 = vunpack.c.h.b16 %v121
    %v336 = vunpack.c.l.b16 %v122
    %v337 = vunpack.c.h.b16 %v122
    %v338 = vunpack.c.l.b16 %v123
    %v339 = vunpack.c.h.b16 %v123
    %v340 = vunpack.c.l.b16 %v124
    %v341 = vunpack.c.h.b16 %v124
    %v342 = vunpack.c.l.b16 %v125
    %v343 = vunpack.c.h.b16 %v125
    %v344 = vunpack.c.l.b16 %v126
    %v345 = vunpack.c.h.b16 %v126
    %v346 = vunpack.c.l.b16 %v127
    %v347 = vunpack.c.h.b16 %v127
    %v348 = vunpack.c.l.b16 %v128
    %v349 = vunpack.c.h.b16 %v128
    %v350 = vunpack.c.l.b16 %v129
    %v351 = vunpack.c.h.b16 %v129
    %v352 = vunpack.c.l.b16 %v130
    %v353 = vunpack.c.h.b16 %v130
    %v354 = vunpack.c.l.b16 %v131
    %v355 = vunpack.c.h.b16 %v131
    %v356 = vunpack.c.l.b16 %v132
    %v357 = vunpack.c.h.b16 %v132
    %v358 = vunpack.c.l.b16 %v133
    %v359 = vunpack.c.h.b16 %v133
    %v360 = vunpack.c.l.b16 %v134
    %v361 = vunpack.c.h.b16 %v134
    %v362 = vunpack.c.l.b16 %v135
    %v363 = vunpack.c.h.b16 %v135
    %v364 = vunpack.c.l.b16 %v136
    %v365 = vunpack.c.h.b16 %v136
    %v366 = vunpack.c.l.b16 %v137
    %v367 = vunpack.c.h.b16 %v137
    %v368 = vunpack.c.l.b16 %v138
    %v369 = vunpack.c.h.b16 %v138
    %v370 = vunpack.c.l.b16 %v139
    %v371 = vunpack.c.h.b16 %v139
    %v372 = vunpack.c.l.b16 %v140
    %v373 = vunpack.c.h.b16 %v140
    %v374 = vunpack.c.l.b16 %v141
    %v375 = vunpack.c.h.b16 %v141
    %v376 = vunpack.c.l.b16 %v142
    %v377 = vunpack.c.h.b16 %v142
    %v378 = vunpack.c.l.b16 %v143
    %v379 = vunpack.c.h.b16 %v143
    %v380 = vunpack.c.l.b16 %v144
    %v381 = vunpack.c.h.b16 %v144
    %v382 = vunpack.c.l.b16 %v145
    %v383 = vunpack.c.h.b16 %v145
    %v384 = vunpack.c.l.b16 %v146
    %v385 = vunpack.c.h.b16 %v146
    %v386 = vunpack.c.l.b16 %v147
    %v387 = vunpack.c.h.b16 %v147
    %v388 = vunpack.c.l.b16 %v148
    %v389 = vunpack.c.h.b16 %v148
    %v390 = vunpack.c.l.b16 %v149
    %v391 = vunpack.c.h.b16 %v149
    %v392 = vpack.c.b16 %v268, %v264
    %v393 = vpack.c.b16 %v269, %v265
    %v394 = vpack.c.b16 %v270, %v266
    %v395 = vpack.c.b16 %v271, %v267
    %v396 = vpack.c.b16 %v276, %v272
    %v397 = vpack.c.b16 %v277, %v273
    %v398 = vpack.c.b16 %v278, %v274
    %v399 = vpack.c.b16 %v279, %v275
    %v400 = vpack.c.b16 %v284, %v280
    %v401 = vpack.c.b16 %v285, %v281
    %v402 = vpack.c.b16 %v286, %v282
    %v403 = vpack.c.b16 %v287, %v283
    %v404 = vpack.c.b16 %v292, %v288
    %v405 = vpack.c.b16 %v293, %v289
    %v406 = vpack.c.b16 %v294, %v290
    %v407 = vpack.c.b16 %v295, %v291
    %v408 = vpack.c.b16 %v300, %v296
    %v409 = vpack.c.b16 %v301, %v297
    %v410 = vpack.c.b16 %v302, %v298
    %v411 = vpack.c.b16 %v303, %v299
    %v412 = vpack.c.b16 %v308, %v304
    %v413 = vpack.c.b16 %v309, %v305
    %v414 = vpack.c.b16 %v310, %v306
    %v415 = vpack.c.b16 %v311, %v307
    %v416 = vpack.c.b16 %v316, %v312
    %v417 = vpack.c.b16 %v317, %v313
    %v418 = vpack.c.b16 %v318, %v314
    %v419 = vpack.c.b16 %v319, %v315
    %v420 = vpack.c.b16 %v324, %v320
    %v421 = vpack.c.b16 %v325, %v321
    %v422 = vpack.c.b16 %v326, %v322
    %v423 = vpack.c.b16 %v327, %v323
    %v424 = vpack.c.b16 %v332, %v328
    %v425 = vpack.c.b16 %v333, %v329
    %v426 = vpack.c.b16 %v334, %v330
    %v427 = vpack.c.b16 %v335, %v331
    %v428 = vpack.c.b16 %v340, %v336
    %v429 = vpack.c.b16 %v341, %v337
    %v430 = vpack.c.b16 %v342, %v338
    %v431 = vpack.c.b16 %v343, %v339
    %v432 = vpack.c.b16 %v348, %v344
    %v433 = vpack.c.b16 %v349, %v345
    %v434 = vpack.c.b16 %v350, %v346
    %v435 = vpack.c.b16 %v351, %v347
    %v436 = vpack.c.b16 %v356, %v352
    %v437 = vpack.c.b16 %v357, %v353
    %v438 = vpack.c.b16 %v358, %v354
    %v439 = vpack.c.b16 %v359, %v355
    %v440 = vpack.c.b16 %v364, %v360
    %v441 = vpack.c.b16 %v365, %v361
    %v442 = vpack.c.b16 %v366, %v362
    %v443 = vpack.c.b16 %v367, %v363
    %v444 = vpack.c.b16 %v372, %v368
    %v445 = vpack.c.b16 %v373, %v369
    %v446 = vpack.c.b16 %v374, %v370
    %v447 = vpack.c.b16 %v375, %v371
    %v448 = vpack.c.b16 %v380, %v376
    %v449 = vpack.c.b16 %v381, %v377
    %v450 = vpack.c.b16 %v382, %v378
    %v451 = vpack.c.b16 %v383, %v379
    %v452 = vpack.c.b16 %v388, %v384
    %v453 = vpack.c.b16 %v389, %v385
    %v454 = vpack.c.b16 %v390, %v386
    %v455 = vpack.c.b16 %v391, %v387
    %520 = vmatpush.bf16.msra.mxu0 %v420
    %521 = vmatpush.bf16.msra.mxu0 %v416
    %522 = vmatpush.bf16.msra.mxu0 %v412
    %523 = vmatpush.bf16.msra.mxu0 %v408
    %524 = vmatpush.bf16.msra.mxu0 %v404
    %525 = vmatpush.bf16.msra.mxu0 %v400
    %526 = vmatpush.bf16.msra.mxu0 %v396
    %527 = vmatpush.bf16.msra.mxu0 %v392
    %528 = vmatmul.bf16.gmra.mxu0 %v184
    %v529 = vpop.f32.mrf.mxu0
    %v530 = vadd.f32 %v152, %v529
    %v531 = vpop.f32.mrf.mxu0
    %v532 = vadd.f32 %v152, %v531
    %533 = vmatmul.bf16.gmra.mxu0 %v186
    %v534 = vpop.f32.mrf.mxu0
    %v535 = vadd.f32 %v152, %v534
    %v536 = vpop.f32.mrf.mxu0
    %v537 = vadd.f32 %v152, %v536
    %538 = vmatmul.bf16.gmra.mxu0 %v188
    %v539 = vpop.f32.mrf.mxu0
    %v540 = vadd.f32 %v152, %v539
    %v541 = vpop.f32.mrf.mxu0
    %v542 = vadd.f32 %v152, %v541
    %543 = vmatmul.bf16.gmra.mxu0 %v190
    %v544 = vpop.f32.mrf.mxu0
    %v545 = vadd.f32 %v152, %v544
    %v546 = vpop.f32.mrf.mxu0
    %v547 = vadd.f32 %v152, %v546
    %548 = vdwg.mxu0
    %549 = vmatpush.bf16.msra.mxu0 %v452
    %550 = vmatpush.bf16.msra.mxu0 %v448
    %551 = vmatpush.bf16.msra.mxu0 %v444
    %552 = vmatpush.bf16.msra.mxu0 %v440
    %553 = vmatpush.bf16.msra.mxu0 %v436
    %554 = vmatpush.bf16.msra.mxu0 %v432
    %555 = vmatpush.bf16.msra.mxu0 %v428
    %556 = vmatpush.bf16.msra.mxu0 %v424
    %557 = vmatmul.bf16.gmra.mxu0 %v185
    %v558 = vpop.f32.mrf.mxu0
    %v559 = vadd.f32 %v530, %v558
    %v560 = vpop.f32.mrf.mxu0
    %v561 = vadd.f32 %v532, %v560
    %562 = vmatmul.bf16.gmra.mxu0 %v187
    %v563 = vpop.f32.mrf.mxu0
    %v564 = vadd.f32 %v535, %v563
    %v565 = vpop.f32.mrf.mxu0
    %v566 = vadd.f32 %v537, %v565
    %567 = vmatmul.bf16.gmra.mxu0 %v189
    %v568 = vpop.f32.mrf.mxu0
    %v569 = vadd.f32 %v540, %v568
    %v570 = vpop.f32.mrf.mxu0
    %v571 = vadd.f32 %v542, %v570
    %572 = vmatmul.bf16.gmra.mxu0 %v191
    %v573 = vpop.f32.mrf.mxu0
    %v574 = vadd.f32 %v545, %v573
    %v575 = vpop.f32.mrf.mxu0
    %v576 = vadd.f32 %v547, %v575
    %577 = vdwg.mxu0
    %578 = vmatpush.bf16.msra.mxu0 %v421
    %579 = vmatpush.bf16.msra.mxu0 %v417
    %580 = vmatpush.bf16.msra.mxu0 %v413
    %581 = vmatpush.bf16.msra.mxu0 %v409
    %582 = vmatpush.bf16.msra.mxu0 %v405
    %583 = vmatpush.bf16.msra.mxu0 %v401
    %584 = vmatpush.bf16.msra.mxu0 %v397
    %585 = vmatpush.bf16.msra.mxu0 %v393
    %586 = vmatmul.bf16.gmra.mxu0 %v184
    %v587 = vpop.f32.mrf.mxu0
    %v588 = vadd.f32 %v153, %v587
    %v589 = vpop.f32.mrf.mxu0
    %v590 = vadd.f32 %v153, %v589
    %591 = vmatmul.bf16.gmra.mxu0 %v186
    %v592 = vpop.f32.mrf.mxu0
    %v593 = vadd.f32 %v153, %v592
    %v594 = vpop.f32.mrf.mxu0
    %v595 = vadd.f32 %v153, %v594
    %596 = vmatmul.bf16.gmra.mxu0 %v188
    %v597 = vpop.f32.mrf.mxu0
    %v598 = vadd.f32 %v153, %v597
    %v599 = vpop.f32.mrf.mxu0
    %v600 = vadd.f32 %v153, %v599
    %601 = vmatmul.bf16.gmra.mxu0 %v190
    %v602 = vpop.f32.mrf.mxu0
    %v603 = vadd.f32 %v153, %v602
    %v604 = vpop.f32.mrf.mxu0
    %v605 = vadd.f32 %v153, %v604
    %606 = vdwg.mxu0
    %607 = vmatpush.bf16.msra.mxu0 %v453
    %608 = vmatpush.bf16.msra.mxu0 %v449
    %609 = vmatpush.bf16.msra.mxu0 %v445
    %610 = vmatpush.bf16.msra.mxu0 %v441
    %611 = vmatpush.bf16.msra.mxu0 %v437
    %612 = vmatpush.bf16.msra.mxu0 %v433
    %613 = vmatpush.bf16.msra.mxu0 %v429
    %614 = vmatpush.bf16.msra.mxu0 %v425
    %615 = vmatmul.bf16.gmra.mxu0 %v185
    %v616 = vpop.f32.mrf.mxu0
    %v617 = vadd.f32 %v588, %v616
    %v618 = vpop.f32.mrf.mxu0
    %v619 = vadd.f32 %v590, %v618
    %620 = vmatmul.bf16.gmra.mxu0 %v187
    %v621 = vpop.f32.mrf.mxu0
    %v622 = vadd.f32 %v593, %v621
    %v623 = vpop.f32.mrf.mxu0
    %v624 = vadd.f32 %v595, %v623
    %625 = vmatmul.bf16.gmra.mxu0 %v189
    %v626 = vpop.f32.mrf.mxu0
    %v627 = vadd.f32 %v598, %v626
    %v628 = vpop.f32.mrf.mxu0
    %v629 = vadd.f32 %v600, %v628
    %630 = vmatmul.bf16.gmra.mxu0 %v191
    %v631 = vpop.f32.mrf.mxu0
    %v632 = vadd.f32 %v603, %v631
    %v633 = vpop.f32.mrf.mxu0
    %v634 = vadd.f32 %v605, %v633
    %635 = vdwg.mxu0
    %636 = vmatpush.bf16.msra.mxu0 %v422
    %637 = vmatpush.bf16.msra.mxu0 %v418
    %638 = vmatpush.bf16.msra.mxu0 %v414
    %639 = vmatpush.bf16.msra.mxu0 %v410
    %640 = vmatpush.bf16.msra.mxu0 %v406
    %641 = vmatpush.bf16.msra.mxu0 %v402
    %642 = vmatpush.bf16.msra.mxu0 %v398
    %643 = vmatpush.bf16.msra.mxu0 %v394
    %644 = vmatmul.bf16.gmra.mxu0 %v184
    %v645 = vpop.f32.mrf.mxu0
    %v646 = vadd.f32 %v154, %v645
    %v647 = vpop.f32.mrf.mxu0
    %v648 = vadd.f32 %v154, %v647
    %649 = vmatmul.bf16.gmra.mxu0 %v186
    %v650 = vpop.f32.mrf.mxu0
    %v651 = vadd.f32 %v154, %v650
    %v652 = vpop.f32.mrf.mxu0
    %v653 = vadd.f32 %v154, %v652
    %654 = vmatmul.bf16.gmra.mxu0 %v188
    %v655 = vpop.f32.mrf.mxu0
    %v656 = vadd.f32 %v154, %v655
    %v657 = vpop.f32.mrf.mxu0
    %v658 = vadd.f32 %v154, %v657
    %659 = vmatmul.bf16.gmra.mxu0 %v190
    %v660 = vpop.f32.mrf.mxu0
    %v661 = vadd.f32 %v154, %v660
    %v662 = vpop.f32.mrf.mxu0
    %v663 = vadd.f32 %v154, %v662
    %664 = vdwg.mxu0
    %665 = vmatpush.bf16.msra.mxu0 %v454
    %666 = vmatpush.bf16.msra.mxu0 %v450
    %667 = vmatpush.bf16.msra.mxu0 %v446
    %668 = vmatpush.bf16.msra.mxu0 %v442
    %669 = vmatpush.bf16.msra.mxu0 %v438
    %670 = vmatpush.bf16.msra.mxu0 %v434
    %671 = vmatpush.bf16.msra.mxu0 %v430
    %672 = vmatpush.bf16.msra.mxu0 %v426
    %673 = vmatmul.bf16.gmra.mxu0 %v185
    %v674 = vpop.f32.mrf.mxu0
    %v675 = vadd.f32 %v646, %v674
    %v676 = vpop.f32.mrf.mxu0
    %v677 = vadd.f32 %v648, %v676
    %678 = vmatmul.bf16.gmra.mxu0 %v187
    %v679 = vpop.f32.mrf.mxu0
    %v680 = vadd.f32 %v651, %v679
    %v681 = vpop.f32.mrf.mxu0
    %v682 = vadd.f32 %v653, %v681
    %683 = vmatmul.bf16.gmra.mxu0 %v189
    %v684 = vpop.f32.mrf.mxu0
    %v685 = vadd.f32 %v656, %v684
    %v686 = vpop.f32.mrf.mxu0
    %v687 = vadd.f32 %v658, %v686
    %688 = vmatmul.bf16.gmra.mxu0 %v191
    %v689 = vpop.f32.mrf.mxu0
    %v690 = vadd.f32 %v661, %v689
    %v691 = vpop.f32.mrf.mxu0
    %v692 = vadd.f32 %v663, %v691
    %693 = vdwg.mxu0
    %694 = vmatpush.bf16.msra.mxu0 %v423
    %695 = vmatpush.bf16.msra.mxu0 %v419
    %696 = vmatpush.bf16.msra.mxu0 %v415
    %697 = vmatpush.bf16.msra.mxu0 %v411
    %698 = vmatpush.bf16.msra.mxu0 %v407
    %699 = vmatpush.bf16.msra.mxu0 %v403
    %700 = vmatpush.bf16.msra.mxu0 %v399
    %701 = vmatpush.bf16.msra.mxu0 %v395
    %702 = vmatmul.bf16.gmra.mxu0 %v184
    %v703 = vpop.f32.mrf.mxu0
    %v704 = vadd.f32 %v155, %v703
    %v705 = vpop.f32.mrf.mxu0
    %v706 = vadd.f32 %v155, %v705
    %707 = vmatmul.bf16.gmra.mxu0 %v186
    %v708 = vpop.f32.mrf.mxu0
    %v709 = vadd.f32 %v155, %v708
    %v710 = vpop.f32.mrf.mxu0
    %v711 = vadd.f32 %v155, %v710
    %712 = vmatmul.bf16.gmra.mxu0 %v188
    %v713 = vpop.f32.mrf.mxu0
    %v714 = vadd.f32 %v155, %v713
    %v715 = vpop.f32.mrf.mxu0
    %v716 = vadd.f32 %v155, %v715
    %717 = vmatmul.bf16.gmra.mxu0 %v190
    %v718 = vpop.f32.mrf.mxu0
    %v719 = vadd.f32 %v155, %v718
    %v720 = vpop.f32.mrf.mxu0
    %v721 = vadd.f32 %v155, %v720
    %722 = vdwg.mxu0
    %723 = vmatpush.bf16.msra.mxu0 %v455
    %724 = vmatpush.bf16.msra.mxu0 %v451
    %725 = vmatpush.bf16.msra.mxu0 %v447
    %726 = vmatpush.bf16.msra.mxu0 %v443
    %727 = vmatpush.bf16.msra.mxu0 %v439
    %728 = vmatpush.bf16.msra.mxu0 %v435
    %729 = vmatpush.bf16.msra.mxu0 %v431
    %730 = vmatpush.bf16.msra.mxu0 %v427
    %731 = vmatmul.bf16.gmra.mxu0 %v185
    %v732 = vpop.f32.mrf.mxu0
    %v733 = vadd.f32 %v704, %v732
    %v734 = vpop.f32.mrf.mxu0
    %v735 = vadd.f32 %v706, %v734
    %736 = vmatmul.bf16.gmra.mxu0 %v187
    %v737 = vpop.f32.mrf.mxu0
    %v738 = vadd.f32 %v709, %v737
    %v739 = vpop.f32.mrf.mxu0
    %v740 = vadd.f32 %v711, %v739
    %741 = vmatmul.bf16.gmra.mxu0 %v189
    %v742 = vpop.f32.mrf.mxu0
    %v743 = vadd.f32 %v714, %v742
    %v744 = vpop.f32.mrf.mxu0
    %v745 = vadd.f32 %v716, %v744
    %746 = vmatmul.bf16.gmra.mxu0 %v191
    %v747 = vpop.f32.mrf.mxu0
    %v748 = vadd.f32 %v719, %v747
    %v749 = vpop.f32.mrf.mxu0
    %v750 = vadd.f32 %v721, %v749
    %751 = vdwg.mxu0
    %752 = vst [vmem:[#allocation2] sm:$0xff] %v559
    %753 = vst [vmem:[#allocation2 + $0x8] sm:$0xff] %v617
    %754 = vst [vmem:[#allocation2 + $0x10] sm:$0xff] %v675
    %755 = vst [vmem:[#allocation2 + $0x18] sm:$0xff] %v733
    %756 = vst [vmem:[#allocation2 + $0x20] sm:$0xff] %v561
    %757 = vst [vmem:[#allocation2 + $0x28] sm:$0xff] %v619
    %758 = vst [vmem:[#allocation2 + $0x30] sm:$0xff] %v677
    %759 = vst [vmem:[#allocation2 + $0x38] sm:$0xff] %v735
    %760 = vst [vmem:[#allocation2 + $0x40] sm:$0xff] %v564
    %761 = vst [vmem:[#allocation2 + $0x48] sm:$0xff] %v622
    %762 = vst [vmem:[#allocation2 + $0x50] sm:$0xff] %v680
    %763 = vst [vmem:[#allocation2 + $0x58] sm:$0xff] %v738
    %764 = vst [vmem:[#allocation2 + $0x60] sm:$0xff] %v566
    %765 = vst [vmem:[#allocation2 + $0x68] sm:$0xff] %v624
    %766 = vst [vmem:[#allocation2 + $0x70] sm:$0xff] %v682
    %767 = vst [vmem:[#allocation2 + $0x78] sm:$0xff] %v740
    %768 = vst [vmem:[#allocation2 + $0x80] sm:$0xff] %v569
    %769 = vst [vmem:[#allocation2 + $0x88] sm:$0xff] %v627
    %770 = vst [vmem:[#allocation2 + $0x90] sm:$0xff] %v685
    %771 = vst [vmem:[#allocation2 + $0x98] sm:$0xff] %v743
    %772 = vst [vmem:[#allocation2 + $0xa0] sm:$0xff] %v571
    %773 = vst [vmem:[#allocation2 + $0xa8] sm:$0xff] %v629
    %774 = vst [vmem:[#allocation2 + $0xb0] sm:$0xff] %v687
    %775 = vst [vmem:[#allocation2 + $0xb8] sm:$0xff] %v745
    %776 = vst [vmem:[#allocation2 + $0xc0] sm:$0xff] %v574
    %777 = vst [vmem:[#allocation2 + $0xc8] sm:$0xff] %v632
    %778 = vst [vmem:[#allocation2 + $0xd0] sm:$0xff] %v690
    %779 = vst [vmem:[#allocation2 + $0xd8] sm:$0xff] %v748
    %780 = vst [vmem:[#allocation2 + $0xe0] sm:$0xff] %v576
    %781 = vst [vmem:[#allocation2 + $0xe8] sm:$0xff] %v634
    %782 = vst [vmem:[#allocation2 + $0xf0] sm:$0xff] %v692
    %783 = vst [vmem:[#allocation2 + $0xf8] sm:$0xff] %v750
    loop: start=0, step=1, limit=2
    $region42: #{tpu_custom_call.1} parent=1 // loop_pre_header
      _
    $region43: #{tpu_custom_call.1} parent=1 // loop_header
      %s785 = sphi 0, %s789
      %p786 = scmp.ge.s32.totalorder %s785, 2
    $region44: #{tpu_custom_call.1} parent=1 // loop_header_branch
      %788 = sbr.rel (%p786) target = $region48
    $region45: #{tpu_custom_call.1} parent=1 // loop_body
      %p790 = scmp.lt.s32.totalorder %s785, 0
      %s791 = ssub.s32 0, %s785
      %s792 = scalar_select %p790, %s791, %s785
      %s793 = sand.u32 %s792, 1
      %s794 = ssub.s32 0, %s793
      %s795 = scalar_select %p790, %s794, %s793
      %p796 = scmp.ne.s32.totalorder %s795, 0
      %p797 = scmp.lt.s32.totalorder %s795, 0
      %p798 = pnand %p797, %p796
      %p799 = pneg %p798
      %s800 = sadd.s32 %s795, 2
      %s801 = scalar_select %p799, %s800, %s795
      %s802 = sadd.s32 %s785, 1
      %p803 = scmp.lt.s32.totalorder %s802, 2
      // Predicated region
      $region49: #{tpu_custom_call.1} parent=45 // pred_check
        %p804 = pneg %p803
      $region50: #{tpu_custom_call.1} parent=45 // pred_check_branch
        %806 = sbr.rel (%p804) target = $region52
      $region51: #{tpu_custom_call.1} parent=45 // pred_region
        %s807 = ssub.s32 1, %s801
        %s808 = smul.u32 %s802, 64
        %s809 = smul.u32 %s807, 64
        %s810 = sshra.s32 %s808, 3
        %s811 = sand.u32 %s808, 7
        %s812 = smul.u32 %s810, 2
        %s813 = smul.addr %s812, 4
        %s814 = scalar_lea.vmem [#allocation7], %s813
        %v815 = vld [vmem:[%s814] sm:$0xff]
        %v816 = vld [vmem:[%s814 + $0x8] sm:$0xff]
        %v817 = vld [vmem:[%s814 + $0x10] sm:$0xff]
        %v818 = vld [vmem:[%s814 + $0x18] sm:$0xff]
        %v819 = vld [vmem:[%s814 + $0x20] sm:$0xff]
        %v820 = vld [vmem:[%s814 + $0x28] sm:$0xff]
        %v821 = vld [vmem:[%s814 + $0x30] sm:$0xff]
        %v822 = vld [vmem:[%s814 + $0x38] sm:$0xff]
        %v823 = vld [vmem:[#allocation9] sm:$0xff]
        %v824 = vld [vmem:[#allocation9 + $0x8] sm:$0xff]
        %v825 = vld [vmem:[#allocation9 + $0x10] sm:$0xff]
        %v826 = vld [vmem:[#allocation9 + $0x18] sm:$0xff]
        %v827 = vld [vmem:[#allocation9 + $0x20] sm:$0xff]
        %v828 = vld [vmem:[#allocation9 + $0x28] sm:$0xff]
        %v829 = vld [vmem:[#allocation9 + $0x30] sm:$0xff]
        %v830 = vld [vmem:[#allocation9 + $0x38] sm:$0xff]
        %v831 = vld [vmem:[#allocation9 + $0x40] sm:$0xff]
        %v832 = vld [vmem:[#allocation9 + $0x48] sm:$0xff]
        %v833 = vld [vmem:[#allocation9 + $0x50] sm:$0xff]
        %v834 = vld [vmem:[#allocation9 + $0x58] sm:$0xff]
        %v835 = vld [vmem:[#allocation9 + $0x60] sm:$0xff]
        %v836 = vld [vmem:[#allocation9 + $0x68] sm:$0xff]
        %v837 = vld [vmem:[#allocation9 + $0x70] sm:$0xff]
        %v838 = vld [vmem:[#allocation9 + $0x78] sm:$0xff]
        %v839 = vld [vmem:[#allocation9 + $0x80] sm:$0xff]
        %v840 = vld [vmem:[#allocation9 + $0x88] sm:$0xff]
        %v841 = vld [vmem:[#allocation9 + $0x90] sm:$0xff]
        %v842 = vld [vmem:[#allocation9 + $0x98] sm:$0xff]
        %v843 = vld [vmem:[#allocation9 + $0xa0] sm:$0xff]
        %v844 = vld [vmem:[#allocation9 + $0xa8] sm:$0xff]
        %v845 = vld [vmem:[#allocation9 + $0xb0] sm:$0xff]
        %v846 = vld [vmem:[#allocation9 + $0xb8] sm:$0xff]
        %v847 = vld [vmem:[#allocation9 + $0xc0] sm:$0xff]
        %v848 = vld [vmem:[#allocation9 + $0xc8] sm:$0xff]
        %v849 = vld [vmem:[#allocation9 + $0xd0] sm:$0xff]
        %v850 = vld [vmem:[#allocation9 + $0xd8] sm:$0xff]
        %v851 = vld [vmem:[#allocation9 + $0xe0] sm:$0xff]
        %v852 = vld [vmem:[#allocation9 + $0xe8] sm:$0xff]
        %v853 = vld [vmem:[#allocation9 + $0xf0] sm:$0xff]
        %v854 = vld [vmem:[#allocation9 + $0xf8] sm:$0xff]
        %v855 = vld [vmem:[#allocation9 + $0x100] sm:$0xff]
        %v856 = vld [vmem:[#allocation9 + $0x108] sm:$0xff]
        %v857 = vld [vmem:[#allocation9 + $0x110] sm:$0xff]
        %v858 = vld [vmem:[#allocation9 + $0x118] sm:$0xff]
        %v859 = vld [vmem:[#allocation9 + $0x120] sm:$0xff]
        %v860 = vld [vmem:[#allocation9 + $0x128] sm:$0xff]
        %v861 = vld [vmem:[#allocation9 + $0x130] sm:$0xff]
        %v862 = vld [vmem:[#allocation9 + $0x138] sm:$0xff]
        %v863 = vld [vmem:[#allocation9 + $0x140] sm:$0xff]
        %v864 = vld [vmem:[#allocation9 + $0x148] sm:$0xff]
        %v865 = vld [vmem:[#allocation9 + $0x150] sm:$0xff]
        %v866 = vld [vmem:[#allocation9 + $0x158] sm:$0xff]
        %v867 = vld [vmem:[#allocation9 + $0x160] sm:$0xff]
        %v868 = vld [vmem:[#allocation9 + $0x168] sm:$0xff]
        %v869 = vld [vmem:[#allocation9 + $0x170] sm:$0xff]
        %v870 = vld [vmem:[#allocation9 + $0x178] sm:$0xff]
        %v871 = vld [vmem:[#allocation9 + $0x180] sm:$0xff]
        %v872 = vld [vmem:[#allocation9 + $0x188] sm:$0xff]
        %v873 = vld [vmem:[#allocation9 + $0x190] sm:$0xff]
        %v874 = vld [vmem:[#allocation9 + $0x198] sm:$0xff]
        %v875 = vld [vmem:[#allocation9 + $0x1a0] sm:$0xff]
        %v876 = vld [vmem:[#allocation9 + $0x1a8] sm:$0xff]
        %v877 = vld [vmem:[#allocation9 + $0x1b0] sm:$0xff]
        %v878 = vld [vmem:[#allocation9 + $0x1b8] sm:$0xff]
        %v879 = vld [vmem:[#allocation9 + $0x1c0] sm:$0xff]
        %v880 = vld [vmem:[#allocation9 + $0x1c8] sm:$0xff]
        %v881 = vld [vmem:[#allocation9 + $0x1d0] sm:$0xff]
        %v882 = vld [vmem:[#allocation9 + $0x1d8] sm:$0xff]
        %v883 = vld [vmem:[#allocation9 + $0x1e0] sm:$0xff]
        %v884 = vld [vmem:[#allocation9 + $0x1e8] sm:$0xff]
        %v885 = vld [vmem:[#allocation9 + $0x1f0] sm:$0xff]
        %v886 = vld [vmem:[#allocation9 + $0x1f8] sm:$0xff]
        %v887 = vld [vmem:[%s4] sm:$0xf]
        %v889 = vperm.slane %v887, 0
        %v890 = vperm.slane %v887, 1
        %v891 = vperm.slane %v887, 2
        %v892 = vperm.slane %v887, 3
        %v905 = vunpack.c.l.b16 %v815
        %v906 = vunpack.c.h.b16 %v815
        %v907 = vunpack.c.l.b16 %v816
        %v908 = vunpack.c.h.b16 %v816
        %v909 = vunpack.c.l.b16 %v817
        %v910 = vunpack.c.h.b16 %v817
        %v911 = vunpack.c.l.b16 %v818
        %v912 = vunpack.c.h.b16 %v818
        %v913 = vunpack.c.l.b16 %v819
        %v914 = vunpack.c.h.b16 %v819
        %v915 = vunpack.c.l.b16 %v820
        %v916 = vunpack.c.h.b16 %v820
        %v917 = vunpack.c.l.b16 %v821
        %v918 = vunpack.c.h.b16 %v821
        %v919 = vunpack.c.l.b16 %v822
        %v920 = vunpack.c.h.b16 %v822
        %v921 = vpack.c.b16 %v907, %v905
        %v922 = vpack.c.b16 %v908, %v906
        %v923 = vpack.c.b16 %v911, %v909
        %v924 = vpack.c.b16 %v912, %v910
        %v925 = vpack.c.b16 %v915, %v913
        %v926 = vpack.c.b16 %v916, %v914
        %v927 = vpack.c.b16 %v919, %v917
        %v928 = vpack.c.b16 %v920, %v918
        %v1001 = vunpack.c.l.b16 %v823
        %v1002 = vunpack.c.h.b16 %v823
        %v1003 = vunpack.c.l.b16 %v824
        %v1004 = vunpack.c.h.b16 %v824
        %v1005 = vunpack.c.l.b16 %v825
        %v1006 = vunpack.c.h.b16 %v825
        %v1007 = vunpack.c.l.b16 %v826
        %v1008 = vunpack.c.h.b16 %v826
        %v1009 = vunpack.c.l.b16 %v827
        %v1010 = vunpack.c.h.b16 %v827
        %v1011 = vunpack.c.l.b16 %v828
        %v1012 = vunpack.c.h.b16 %v828
        %v1013 = vunpack.c.l.b16 %v829
        %v1014 = vunpack.c.h.b16 %v829
        %v1015 = vunpack.c.l.b16 %v830
        %v1016 = vunpack.c.h.b16 %v830
        %v1017 = vunpack.c.l.b16 %v831
        %v1018 = vunpack.c.h.b16 %v831
        %v1019 = vunpack.c.l.b16 %v832
        %v1020 = vunpack.c.h.b16 %v832
        %v1021 = vunpack.c.l.b16 %v833
        %v1022 = vunpack.c.h.b16 %v833
        %v1023 = vunpack.c.l.b16 %v834
        %v1024 = vunpack.c.h.b16 %v834
        %v1025 = vunpack.c.l.b16 %v835
        %v1026 = vunpack.c.h.b16 %v835
        %v1027 = vunpack.c.l.b16 %v836
        %v1028 = vunpack.c.h.b16 %v836
        %v1029 = vunpack.c.l.b16 %v837
        %v1030 = vunpack.c.h.b16 %v837
        %v1031 = vunpack.c.l.b16 %v838
        %v1032 = vunpack.c.h.b16 %v838
        %v1033 = vunpack.c.l.b16 %v839
        %v1034 = vunpack.c.h.b16 %v839
        %v1035 = vunpack.c.l.b16 %v840
        %v1036 = vunpack.c.h.b16 %v840
        %v1037 = vunpack.c.l.b16 %v841
        %v1038 = vunpack.c.h.b16 %v841
        %v1039 = vunpack.c.l.b16 %v842
        %v1040 = vunpack.c.h.b16 %v842
        %v1041 = vunpack.c.l.b16 %v843
        %v1042 = vunpack.c.h.b16 %v843
        %v1043 = vunpack.c.l.b16 %v844
        %v1044 = vunpack.c.h.b16 %v844
        %v1045 = vunpack.c.l.b16 %v845
        %v1046 = vunpack.c.h.b16 %v845
        %v1047 = vunpack.c.l.b16 %v846
        %v1048 = vunpack.c.h.b16 %v846
        %v1049 = vunpack.c.l.b16 %v847
        %v1050 = vunpack.c.h.b16 %v847
        %v1051 = vunpack.c.l.b16 %v848
        %v1052 = vunpack.c.h.b16 %v848
        %v1053 = vunpack.c.l.b16 %v849
        %v1054 = vunpack.c.h.b16 %v849
        %v1055 = vunpack.c.l.b16 %v850
        %v1056 = vunpack.c.h.b16 %v850
        %v1057 = vunpack.c.l.b16 %v851
        %v1058 = vunpack.c.h.b16 %v851
        %v1059 = vunpack.c.l.b16 %v852
        %v1060 = vunpack.c.h.b16 %v852
        %v1061 = vunpack.c.l.b16 %v853
        %v1062 = vunpack.c.h.b16 %v853
        %v1063 = vunpack.c.l.b16 %v854
        %v1064 = vunpack.c.h.b16 %v854
        %v1065 = vunpack.c.l.b16 %v855
        %v1066 = vunpack.c.h.b16 %v855
        %v1067 = vunpack.c.l.b16 %v856
        %v1068 = vunpack.c.h.b16 %v856
        %v1069 = vunpack.c.l.b16 %v857
        %v1070 = vunpack.c.h.b16 %v857
        %v1071 = vunpack.c.l.b16 %v858
        %v1072 = vunpack.c.h.b16 %v858
        %v1073 = vunpack.c.l.b16 %v859
        %v1074 = vunpack.c.h.b16 %v859
        %v1075 = vunpack.c.l.b16 %v860
        %v1076 = vunpack.c.h.b16 %v860
        %v1077 = vunpack.c.l.b16 %v861
        %v1078 = vunpack.c.h.b16 %v861
        %v1079 = vunpack.c.l.b16 %v862
        %v1080 = vunpack.c.h.b16 %v862
        %v1081 = vunpack.c.l.b16 %v863
        %v1082 = vunpack.c.h.b16 %v863
        %v1083 = vunpack.c.l.b16 %v864
        %v1084 = vunpack.c.h.b16 %v864
        %v1085 = vunpack.c.l.b16 %v865
        %v1086 = vunpack.c.h.b16 %v865
        %v1087 = vunpack.c.l.b16 %v866
        %v1088 = vunpack.c.h.b16 %v866
        %v1089 = vunpack.c.l.b16 %v867
        %v1090 = vunpack.c.h.b16 %v867
        %v1091 = vunpack.c.l.b16 %v868
        %v1092 = vunpack.c.h.b16 %v868
        %v1093 = vunpack.c.l.b16 %v869
        %v1094 = vunpack.c.h.b16 %v869
        %v1095 = vunpack.c.l.b16 %v870
        %v1096 = vunpack.c.h.b16 %v870
        %v1097 = vunpack.c.l.b16 %v871
        %v1098 = vunpack.c.h.b16 %v871
        %v1099 = vunpack.c.l.b16 %v872
        %v1100 = vunpack.c.h.b16 %v872
        %v1101 = vunpack.c.l.b16 %v873
        %v1102 = vunpack.c.h.b16 %v873
        %v1103 = vunpack.c.l.b16 %v874
        %v1104 = vunpack.c.h.b16 %v874
        %v1105 = vunpack.c.l.b16 %v875
        %v1106 = vunpack.c.h.b16 %v875
        %v1107 = vunpack.c.l.b16 %v876
        %v1108 = vunpack.c.h.b16 %v876
        %v1109 = vunpack.c.l.b16 %v877
        %v1110 = vunpack.c.h.b16 %v877
        %v1111 = vunpack.c.l.b16 %v878
        %v1112 = vunpack.c.h.b16 %v878
        %v1113 = vunpack.c.l.b16 %v879
        %v1114 = vunpack.c.h.b16 %v879
        %v1115 = vunpack.c.l.b16 %v880
        %v1116 = vunpack.c.h.b16 %v880
        %v1117 = vunpack.c.l.b16 %v881
        %v1118 = vunpack.c.h.b16 %v881
        %v1119 = vunpack.c.l.b16 %v882
        %v1120 = vunpack.c.h.b16 %v882
        %v1121 = vunpack.c.l.b16 %v883
        %v1122 = vunpack.c.h.b16 %v883
        %v1123 = vunpack.c.l.b16 %v884
        %v1124 = vunpack.c.h.b16 %v884
        %v1125 = vunpack.c.l.b16 %v885
        %v1126 = vunpack.c.h.b16 %v885
        %v1127 = vunpack.c.l.b16 %v886
        %v1128 = vunpack.c.h.b16 %v886
        %v1129 = vpack.c.b16 %v1005, %v1001
        %v1130 = vpack.c.b16 %v1006, %v1002
        %v1131 = vpack.c.b16 %v1007, %v1003
        %v1132 = vpack.c.b16 %v1008, %v1004
        %v1133 = vpack.c.b16 %v1013, %v1009
        %v1134 = vpack.c.b16 %v1014, %v1010
        %v1135 = vpack.c.b16 %v1015, %v1011
        %v1136 = vpack.c.b16 %v1016, %v1012
        %v1137 = vpack.c.b16 %v1021, %v1017
        %v1138 = vpack.c.b16 %v1022, %v1018
        %v1139 = vpack.c.b16 %v1023, %v1019
        %v1140 = vpack.c.b16 %v1024, %v1020
        %v1141 = vpack.c.b16 %v1029, %v1025
        %v1142 = vpack.c.b16 %v1030, %v1026
        %v1143 = vpack.c.b16 %v1031, %v1027
        %v1144 = vpack.c.b16 %v1032, %v1028
        %v1145 = vpack.c.b16 %v1037, %v1033
        %v1146 = vpack.c.b16 %v1038, %v1034
        %v1147 = vpack.c.b16 %v1039, %v1035
        %v1148 = vpack.c.b16 %v1040, %v1036
        %v1149 = vpack.c.b16 %v1045, %v1041
        %v1150 = vpack.c.b16 %v1046, %v1042
        %v1151 = vpack.c.b16 %v1047, %v1043
        %v1152 = vpack.c.b16 %v1048, %v1044
        %v1153 = vpack.c.b16 %v1053, %v1049
        %v1154 = vpack.c.b16 %v1054, %v1050
        %v1155 = vpack.c.b16 %v1055, %v1051
        %v1156 = vpack.c.b16 %v1056, %v1052
        %v1157 = vpack.c.b16 %v1061, %v1057
        %v1158 = vpack.c.b16 %v1062, %v1058
        %v1159 = vpack.c.b16 %v1063, %v1059
        %v1160 = vpack.c.b16 %v1064, %v1060
        %v1161 = vpack.c.b16 %v1069, %v1065
        %v1162 = vpack.c.b16 %v1070, %v1066
        %v1163 = vpack.c.b16 %v1071, %v1067
        %v1164 = vpack.c.b16 %v1072, %v1068
        %v1165 = vpack.c.b16 %v1077, %v1073
        %v1166 = vpack.c.b16 %v1078, %v1074
        %v1167 = vpack.c.b16 %v1079, %v1075
        %v1168 = vpack.c.b16 %v1080, %v1076
        %v1169 = vpack.c.b16 %v1085, %v1081
        %v1170 = vpack.c.b16 %v1086, %v1082
        %v1171 = vpack.c.b16 %v1087, %v1083
        %v1172 = vpack.c.b16 %v1088, %v1084
        %v1173 = vpack.c.b16 %v1093, %v1089
        %v1174 = vpack.c.b16 %v1094, %v1090
        %v1175 = vpack.c.b16 %v1095, %v1091
        %v1176 = vpack.c.b16 %v1096, %v1092
        %v1177 = vpack.c.b16 %v1101, %v1097
        %v1178 = vpack.c.b16 %v1102, %v1098
        %v1179 = vpack.c.b16 %v1103, %v1099
        %v1180 = vpack.c.b16 %v1104, %v1100
        %v1181 = vpack.c.b16 %v1109, %v1105
        %v1182 = vpack.c.b16 %v1110, %v1106
        %v1183 = vpack.c.b16 %v1111, %v1107
        %v1184 = vpack.c.b16 %v1112, %v1108
        %v1185 = vpack.c.b16 %v1117, %v1113
        %v1186 = vpack.c.b16 %v1118, %v1114
        %v1187 = vpack.c.b16 %v1119, %v1115
        %v1188 = vpack.c.b16 %v1120, %v1116
        %v1189 = vpack.c.b16 %v1125, %v1121
        %v1190 = vpack.c.b16 %v1126, %v1122
        %v1191 = vpack.c.b16 %v1127, %v1123
        %v1192 = vpack.c.b16 %v1128, %v1124
        %1257 = vmatpush.bf16.msra.mxu0 %v1157
        %1258 = vmatpush.bf16.msra.mxu0 %v1153
        %1259 = vmatpush.bf16.msra.mxu0 %v1149
        %1260 = vmatpush.bf16.msra.mxu0 %v1145
        %1261 = vmatpush.bf16.msra.mxu0 %v1141
        %1262 = vmatpush.bf16.msra.mxu0 %v1137
        %1263 = vmatpush.bf16.msra.mxu0 %v1133
        %1264 = vmatpush.bf16.msra.mxu0 %v1129
        %1265 = vmatmul.bf16.gmra.mxu0 %v921
        %v1266 = vpop.f32.mrf.mxu0
        %v1267 = vadd.f32 %v889, %v1266
        %v1268 = vpop.f32.mrf.mxu0
        %v1269 = vadd.f32 %v889, %v1268
        %1270 = vmatmul.bf16.gmra.mxu0 %v923
        %v1271 = vpop.f32.mrf.mxu0
        %v1272 = vadd.f32 %v889, %v1271
        %v1273 = vpop.f32.mrf.mxu0
        %v1274 = vadd.f32 %v889, %v1273
        %1275 = vmatmul.bf16.gmra.mxu0 %v925
        %v1276 = vpop.f32.mrf.mxu0
        %v1277 = vadd.f32 %v889, %v1276
        %v1278 = vpop.f32.mrf.mxu0
        %v1279 = vadd.f32 %v889, %v1278
        %1280 = vmatmul.bf16.gmra.mxu0 %v927
        %v1281 = vpop.f32.mrf.mxu0
        %v1282 = vadd.f32 %v889, %v1281
        %v1283 = vpop.f32.mrf.mxu0
        %v1284 = vadd.f32 %v889, %v1283
        %1285 = vdwg.mxu0
        %1286 = vmatpush.bf16.msra.mxu0 %v1189
        %1287 = vmatpush.bf16.msra.mxu0 %v1185
        %1288 = vmatpush.bf16.msra.mxu0 %v1181
        %1289 = vmatpush.bf16.msra.mxu0 %v1177
        %1290 = vmatpush.bf16.msra.mxu0 %v1173
        %1291 = vmatpush.bf16.msra.mxu0 %v1169
        %1292 = vmatpush.bf16.msra.mxu0 %v1165
        %1293 = vmatpush.bf16.msra.mxu0 %v1161
        %1294 = vmatmul.bf16.gmra.mxu0 %v922
        %v1295 = vpop.f32.mrf.mxu0
        %v1296 = vadd.f32 %v1267, %v1295
        %v1297 = vpop.f32.mrf.mxu0
        %v1298 = vadd.f32 %v1269, %v1297
        %1299 = vmatmul.bf16.gmra.mxu0 %v924
        %v1300 = vpop.f32.mrf.mxu0
        %v1301 = vadd.f32 %v1272, %v1300
        %v1302 = vpop.f32.mrf.mxu0
        %v1303 = vadd.f32 %v1274, %v1302
        %1304 = vmatmul.bf16.gmra.mxu0 %v926
        %v1305 = vpop.f32.mrf.mxu0
        %v1306 = vadd.f32 %v1277, %v1305
        %v1307 = vpop.f32.mrf.mxu0
        %v1308 = vadd.f32 %v1279, %v1307
        %1309 = vmatmul.bf16.gmra.mxu0 %v928
        %v1310 = vpop.f32.mrf.mxu0
        %v1311 = vadd.f32 %v1282, %v1310
        %v1312 = vpop.f32.mrf.mxu0
        %v1313 = vadd.f32 %v1284, %v1312
        %1314 = vdwg.mxu0
        %1315 = vmatpush.bf16.msra.mxu0 %v1158
        %1316 = vmatpush.bf16.msra.mxu0 %v1154
        %1317 = vmatpush.bf16.msra.mxu0 %v1150
        %1318 = vmatpush.bf16.msra.mxu0 %v1146
        %1319 = vmatpush.bf16.msra.mxu0 %v1142
        %1320 = vmatpush.bf16.msra.mxu0 %v1138
        %1321 = vmatpush.bf16.msra.mxu0 %v1134
        %1322 = vmatpush.bf16.msra.mxu0 %v1130
        %1323 = vmatmul.bf16.gmra.mxu0 %v921
        %v1324 = vpop.f32.mrf.mxu0
        %v1325 = vadd.f32 %v890, %v1324
        %v1326 = vpop.f32.mrf.mxu0
        %v1327 = vadd.f32 %v890, %v1326
        %1328 = vmatmul.bf16.gmra.mxu0 %v923
        %v1329 = vpop.f32.mrf.mxu0
        %v1330 = vadd.f32 %v890, %v1329
        %v1331 = vpop.f32.mrf.mxu0
        %v1332 = vadd.f32 %v890, %v1331
        %1333 = vmatmul.bf16.gmra.mxu0 %v925
        %v1334 = vpop.f32.mrf.mxu0
        %v1335 = vadd.f32 %v890, %v1334
        %v1336 = vpop.f32.mrf.mxu0
        %v1337 = vadd.f32 %v890, %v1336
        %1338 = vmatmul.bf16.gmra.mxu0 %v927
        %v1339 = vpop.f32.mrf.mxu0
        %v1340 = vadd.f32 %v890, %v1339
        %v1341 = vpop.f32.mrf.mxu0
        %v1342 = vadd.f32 %v890, %v1341
        %1343 = vdwg.mxu0
        %1344 = vmatpush.bf16.msra.mxu0 %v1190
        %1345 = vmatpush.bf16.msra.mxu0 %v1186
        %1346 = vmatpush.bf16.msra.mxu0 %v1182
        %1347 = vmatpush.bf16.msra.mxu0 %v1178
        %1348 = vmatpush.bf16.msra.mxu0 %v1174
        %1349 = vmatpush.bf16.msra.mxu0 %v1170
        %1350 = vmatpush.bf16.msra.mxu0 %v1166
        %1351 = vmatpush.bf16.msra.mxu0 %v1162
        %1352 = vmatmul.bf16.gmra.mxu0 %v922
        %v1353 = vpop.f32.mrf.mxu0
        %v1354 = vadd.f32 %v1325, %v1353
        %v1355 = vpop.f32.mrf.mxu0
        %v1356 = vadd.f32 %v1327, %v1355
        %1357 = vmatmul.bf16.gmra.mxu0 %v924
        %v1358 = vpop.f32.mrf.mxu0
        %v1359 = vadd.f32 %v1330, %v1358
        %v1360 = vpop.f32.mrf.mxu0
        %v1361 = vadd.f32 %v1332, %v1360
        %1362 = vmatmul.bf16.gmra.mxu0 %v926
        %v1363 = vpop.f32.mrf.mxu0
        %v1364 = vadd.f32 %v1335, %v1363
        %v1365 = vpop.f32.mrf.mxu0
        %v1366 = vadd.f32 %v1337, %v1365
        %1367 = vmatmul.bf16.gmra.mxu0 %v928
        %v1368 = vpop.f32.mrf.mxu0
        %v1369 = vadd.f32 %v1340, %v1368
        %v1370 = vpop.f32.mrf.mxu0
        %v1371 = vadd.f32 %v1342, %v1370
        %1372 = vdwg.mxu0
        %1373 = vmatpush.bf16.msra.mxu0 %v1159
        %1374 = vmatpush.bf16.msra.mxu0 %v1155
        %1375 = vmatpush.bf16.msra.mxu0 %v1151
        %1376 = vmatpush.bf16.msra.mxu0 %v1147
        %1377 = vmatpush.bf16.msra.mxu0 %v1143
        %1378 = vmatpush.bf16.msra.mxu0 %v1139
        %1379 = vmatpush.bf16.msra.mxu0 %v1135
        %1380 = vmatpush.bf16.msra.mxu0 %v1131
        %1381 = vmatmul.bf16.gmra.mxu0 %v921
        %v1382 = vpop.f32.mrf.mxu0
        %v1383 = vadd.f32 %v891, %v1382
        %v1384 = vpop.f32.mrf.mxu0
        %v1385 = vadd.f32 %v891, %v1384
        %1386 = vmatmul.bf16.gmra.mxu0 %v923
        %v1387 = vpop.f32.mrf.mxu0
        %v1388 = vadd.f32 %v891, %v1387
        %v1389 = vpop.f32.mrf.mxu0
        %v1390 = vadd.f32 %v891, %v1389
        %1391 = vmatmul.bf16.gmra.mxu0 %v925
        %v1392 = vpop.f32.mrf.mxu0
        %v1393 = vadd.f32 %v891, %v1392
        %v1394 = vpop.f32.mrf.mxu0
        %v1395 = vadd.f32 %v891, %v1394
        %1396 = vmatmul.bf16.gmra.mxu0 %v927
        %v1397 = vpop.f32.mrf.mxu0
        %v1398 = vadd.f32 %v891, %v1397
        %v1399 = vpop.f32.mrf.mxu0
        %v1400 = vadd.f32 %v891, %v1399
        %1401 = vdwg.mxu0
        %1402 = vmatpush.bf16.msra.mxu0 %v1191
        %1403 = vmatpush.bf16.msra.mxu0 %v1187
        %1404 = vmatpush.bf16.msra.mxu0 %v1183
        %1405 = vmatpush.bf16.msra.mxu0 %v1179
        %1406 = vmatpush.bf16.msra.mxu0 %v1175
        %1407 = vmatpush.bf16.msra.mxu0 %v1171
        %1408 = vmatpush.bf16.msra.mxu0 %v1167
        %1409 = vmatpush.bf16.msra.mxu0 %v1163
        %1410 = vmatmul.bf16.gmra.mxu0 %v922
        %v1411 = vpop.f32.mrf.mxu0
        %v1412 = vadd.f32 %v1383, %v1411
        %v1413 = vpop.f32.mrf.mxu0
        %v1414 = vadd.f32 %v1385, %v1413
        %1415 = vmatmul.bf16.gmra.mxu0 %v924
        %v1416 = vpop.f32.mrf.mxu0
        %v1417 = vadd.f32 %v1388, %v1416
        %v1418 = vpop.f32.mrf.mxu0
        %v1419 = vadd.f32 %v1390, %v1418
        %1420 = vmatmul.bf16.gmra.mxu0 %v926
        %v1421 = vpop.f32.mrf.mxu0
        %v1422 = vadd.f32 %v1393, %v1421
        %v1423 = vpop.f32.mrf.mxu0
        %v1424 = vadd.f32 %v1395, %v1423
        %1425 = vmatmul.bf16.gmra.mxu0 %v928
        %v1426 = vpop.f32.mrf.mxu0
        %v1427 = vadd.f32 %v1398, %v1426
        %v1428 = vpop.f32.mrf.mxu0
        %v1429 = vadd.f32 %v1400, %v1428
        %1430 = vdwg.mxu0
        %1431 = vmatpush.bf16.msra.mxu0 %v1160
        %1432 = vmatpush.bf16.msra.mxu0 %v1156
        %1433 = vmatpush.bf16.msra.mxu0 %v1152
        %1434 = vmatpush.bf16.msra.mxu0 %v1148
        %1435 = vmatpush.bf16.msra.mxu0 %v1144
        %1436 = vmatpush.bf16.msra.mxu0 %v1140
        %1437 = vmatpush.bf16.msra.mxu0 %v1136
        %1438 = vmatpush.bf16.msra.mxu0 %v1132
        %1439 = vmatmul.bf16.gmra.mxu0 %v921
        %v1440 = vpop.f32.mrf.mxu0
        %v1441 = vadd.f32 %v892, %v1440
        %v1442 = vpop.f32.mrf.mxu0
        %v1443 = vadd.f32 %v892, %v1442
        %1444 = vmatmul.bf16.gmra.mxu0 %v923
        %v1445 = vpop.f32.mrf.mxu0
        %v1446 = vadd.f32 %v892, %v1445
        %v1447 = vpop.f32.mrf.mxu0
        %v1448 = vadd.f32 %v892, %v1447
        %1449 = vmatmul.bf16.gmra.mxu0 %v925
        %v1450 = vpop.f32.mrf.mxu0
        %v1451 = vadd.f32 %v892, %v1450
        %v1452 = vpop.f32.mrf.mxu0
        %v1453 = vadd.f32 %v892, %v1452
        %1454 = vmatmul.bf16.gmra.mxu0 %v927
        %v1455 = vpop.f32.mrf.mxu0
        %v1456 = vadd.f32 %v892, %v1455
        %v1457 = vpop.f32.mrf.mxu0
        %v1458 = vadd.f32 %v892, %v1457
        %1459 = vdwg.mxu0
        %1460 = vmatpush.bf16.msra.mxu0 %v1192
        %1461 = vmatpush.bf16.msra.mxu0 %v1188
        %1462 = vmatpush.bf16.msra.mxu0 %v1184
        %1463 = vmatpush.bf16.msra.mxu0 %v1180
        %1464 = vmatpush.bf16.msra.mxu0 %v1176
        %1465 = vmatpush.bf16.msra.mxu0 %v1172
        %1466 = vmatpush.bf16.msra.mxu0 %v1168
        %1467 = vmatpush.bf16.msra.mxu0 %v1164
        %1468 = vmatmul.bf16.gmra.mxu0 %v922
        %v1469 = vpop.f32.mrf.mxu0
        %v1470 = vadd.f32 %v1441, %v1469
        %v1471 = vpop.f32.mrf.mxu0
        %v1472 = vadd.f32 %v1443, %v1471
        %1473 = vmatmul.bf16.gmra.mxu0 %v924
        %v1474 = vpop.f32.mrf.mxu0
        %v1475 = vadd.f32 %v1446, %v1474
        %v1476 = vpop.f32.mrf.mxu0
        %v1477 = vadd.f32 %v1448, %v1476
        %1478 = vmatmul.bf16.gmra.mxu0 %v926
        %v1479 = vpop.f32.mrf.mxu0
        %v1480 = vadd.f32 %v1451, %v1479
        %v1481 = vpop.f32.mrf.mxu0
        %v1482 = vadd.f32 %v1453, %v1481
        %1483 = vmatmul.bf16.gmra.mxu0 %v928
        %v1484 = vpop.f32.mrf.mxu0
        %v1485 = vadd.f32 %v1456, %v1484
        %v1486 = vpop.f32.mrf.mxu0
        %v1487 = vadd.f32 %v1458, %v1486
        %1488 = vdwg.mxu0
        %s1489 = sshra.s32 %s809, 3
        %s1490 = sand.u32 %s809, 7
        %s1491 = smul.u32 %s1489, 4
        %s1492 = smul.addr %s1491, 8
        %s1493 = scalar_lea.vmem [#allocation2], %s1492
        %1494 = vst [vmem:[%s1493] sm:$0xff] %v1296
        %1495 = vst [vmem:[%s1493 + $0x8] sm:$0xff] %v1354
        %1496 = vst [vmem:[%s1493 + $0x10] sm:$0xff] %v1412
        %1497 = vst [vmem:[%s1493 + $0x18] sm:$0xff] %v1470
        %1498 = vst [vmem:[%s1493 + $0x20] sm:$0xff] %v1298
        %1499 = vst [vmem:[%s1493 + $0x28] sm:$0xff] %v1356
        %1500 = vst [vmem:[%s1493 + $0x30] sm:$0xff] %v1414
        %1501 = vst [vmem:[%s1493 + $0x38] sm:$0xff] %v1472
        %1502 = vst [vmem:[%s1493 + $0x40] sm:$0xff] %v1301
        %1503 = vst [vmem:[%s1493 + $0x48] sm:$0xff] %v1359
        %1504 = vst [vmem:[%s1493 + $0x50] sm:$0xff] %v1417
        %1505 = vst [vmem:[%s1493 + $0x58] sm:$0xff] %v1475
        %1506 = vst [vmem:[%s1493 + $0x60] sm:$0xff] %v1303
        %1507 = vst [vmem:[%s1493 + $0x68] sm:$0xff] %v1361
        %1508 = vst [vmem:[%s1493 + $0x70] sm:$0xff] %v1419
        %1509 = vst [vmem:[%s1493 + $0x78] sm:$0xff] %v1477
        %1510 = vst [vmem:[%s1493 + $0x80] sm:$0xff] %v1306
        %1511 = vst [vmem:[%s1493 + $0x88] sm:$0xff] %v1364
        %1512 = vst [vmem:[%s1493 + $0x90] sm:$0xff] %v1422
        %1513 = vst [vmem:[%s1493 + $0x98] sm:$0xff] %v1480
        %1514 = vst [vmem:[%s1493 + $0xa0] sm:$0xff] %v1308
        %1515 = vst [vmem:[%s1493 + $0xa8] sm:$0xff] %v1366
        %1516 = vst [vmem:[%s1493 + $0xb0] sm:$0xff] %v1424
        %1517 = vst [vmem:[%s1493 + $0xb8] sm:$0xff] %v1482
        %1518 = vst [vmem:[%s1493 + $0xc0] sm:$0xff] %v1311
        %1519 = vst [vmem:[%s1493 + $0xc8] sm:$0xff] %v1369
        %1520 = vst [vmem:[%s1493 + $0xd0] sm:$0xff] %v1427
        %1521 = vst [vmem:[%s1493 + $0xd8] sm:$0xff] %v1485
        %1522 = vst [vmem:[%s1493 + $0xe0] sm:$0xff] %v1313
        %1523 = vst [vmem:[%s1493 + $0xe8] sm:$0xff] %v1371
        %1524 = vst [vmem:[%s1493 + $0xf0] sm:$0xff] %v1429
        %1525 = vst [vmem:[%s1493 + $0xf8] sm:$0xff] %v1487
      $region52: #{tpu_custom_call.1} parent=45 // pred_fallthru
        _
      %v1526 = vld [vmem:[%s0] sm:$0xff]
      %v1527 = vsub.s32 %v1526, 1
      %1528 = vset.pattern.permute.xlu0 0
      %1529 = vperm.xlu0 %1528, %v1527
      %v1530 = vpop.permute.xlu0 %1529
      %s1531 = smul.u32 %s801, 64
      %s1532 = smul.u32 %s785, 8
      %v1533 = vld [vmem:[#allocation3] sm:$0xff]
      %v1534 = vld [vmem:[#allocation4] sm:$0xff]
      %v1535 = vld [vmem:[#allocation5] sm:$0xff]
      %s1536 = sshra.s32 %s1531, 3
      %s1537 = sand.u32 %s1531, 7
      %s1538 = smul.u32 %s1536, 4
      %s1539 = smul.addr %s1538, 8
      %s1540 = scalar_lea.vmem [#allocation2], %s1539
      %v1541 = vld [vmem:[%s1540] sm:$0xff]
      %v1542 = vld [vmem:[%s1540 + $0x8] sm:$0xff]
      %v1543 = vld [vmem:[%s1540 + $0x10] sm:$0xff]
      %v1544 = vld [vmem:[%s1540 + $0x18] sm:$0xff]
      %v1545 = vpack.c.bf16 %v1533, %v1533
      %v1546 = vld [vmem:[#allocation11] sm:$0xff]
      %v1547 = vld [vmem:[#allocation11 + $0x8] sm:$0xff]
      %v1548 = vld [vmem:[#allocation11 + $0x10] sm:$0xff]
      %v1549 = vld [vmem:[#allocation11 + $0x18] sm:$0xff]
      %v1550 = vld [vmem:[#allocation11 + $0x20] sm:$0xff]
      %v1551 = vld [vmem:[#allocation11 + $0x28] sm:$0xff]
      %v1552 = vld [vmem:[#allocation11 + $0x30] sm:$0xff]
      %v1553 = vld [vmem:[#allocation11 + $0x38] sm:$0xff]
      %v1554 = vld [vmem:[#allocation11 + $0x40] sm:$0xff]
      %v1555 = vld [vmem:[#allocation11 + $0x48] sm:$0xff]
      %v1556 = vld [vmem:[#allocation11 + $0x50] sm:$0xff]
      %v1557 = vld [vmem:[#allocation11 + $0x58] sm:$0xff]
      %v1558 = vld [vmem:[#allocation11 + $0x60] sm:$0xff]
      %v1559 = vld [vmem:[#allocation11 + $0x68] sm:$0xff]
      %v1560 = vld [vmem:[#allocation11 + $0x70] sm:$0xff]
      %v1561 = vld [vmem:[#allocation11 + $0x78] sm:$0xff]
      %v1562 = vld [vmem:[#allocation11 + $0x80] sm:$0xff]
      %v1563 = vld [vmem:[#allocation11 + $0x88] sm:$0xff]
      %v1564 = vld [vmem:[#allocation11 + $0x90] sm:$0xff]
      %v1565 = vld [vmem:[#allocation11 + $0x98] sm:$0xff]
      %v1566 = vld [vmem:[#allocation11 + $0xa0] sm:$0xff]
      %v1567 = vld [vmem:[#allocation11 + $0xa8] sm:$0xff]
      %v1568 = vld [vmem:[#allocation11 + $0xb0] sm:$0xff]
      %v1569 = vld [vmem:[#allocation11 + $0xb8] sm:$0xff]
      %v1570 = vld [vmem:[#allocation11 + $0xc0] sm:$0xff]
      %v1571 = vld [vmem:[#allocation11 + $0xc8] sm:$0xff]
      %v1572 = vld [vmem:[#allocation11 + $0xd0] sm:$0xff]
      %v1573 = vld [vmem:[#allocation11 + $0xd8] sm:$0xff]
      %v1574 = vld [vmem:[#allocation11 + $0xe0] sm:$0xff]
      %v1575 = vld [vmem:[#allocation11 + $0xe8] sm:$0xff]
      %v1576 = vld [vmem:[#allocation11 + $0xf0] sm:$0xff]
      %v1577 = vld [vmem:[#allocation11 + $0xf8] sm:$0xff]
      %v1610 = vunpack.c.l.b16 %v1546
      %v1611 = vunpack.c.h.b16 %v1546
      %v1612 = vunpack.c.l.b16 %v1547
      %v1613 = vunpack.c.h.b16 %v1547
      %v1614 = vunpack.c.l.b16 %v1548
      %v1615 = vunpack.c.h.b16 %v1548
      %v1616 = vunpack.c.l.b16 %v1549
      %v1617 = vunpack.c.h.b16 %v1549
      %v1618 = vunpack.c.l.b16 %v1550
      %v1619 = vunpack.c.h.b16 %v1550
      %v1620 = vunpack.c.l.b16 %v1551
      %v1621 = vunpack.c.h.b16 %v1551
      %v1622 = vunpack.c.l.b16 %v1552
      %v1623 = vunpack.c.h.b16 %v1552
      %v1624 = vunpack.c.l.b16 %v1553
      %v1625 = vunpack.c.h.b16 %v1553
      %v1626 = vunpack.c.l.b16 %v1554
      %v1627 = vunpack.c.h.b16 %v1554
      %v1628 = vunpack.c.l.b16 %v1555
      %v1629 = vunpack.c.h.b16 %v1555
      %v1630 = vunpack.c.l.b16 %v1556
      %v1631 = vunpack.c.h.b16 %v1556
      %v1632 = vunpack.c.l.b16 %v1557
      %v1633 = vunpack.c.h.b16 %v1557
      %v1634 = vunpack.c.l.b16 %v1558
      %v1635 = vunpack.c.h.b16 %v1558
      %v1636 = vunpack.c.l.b16 %v1559
      %v1637 = vunpack.c.h.b16 %v1559
      %v1638 = vunpack.c.l.b16 %v1560
      %v1639 = vunpack.c.h.b16 %v1560
      %v1640 = vunpack.c.l.b16 %v1561
      %v1641 = vunpack.c.h.b16 %v1561
      %v1642 = vunpack.c.l.b16 %v1562
      %v1643 = vunpack.c.h.b16 %v1562
      %v1644 = vunpack.c.l.b16 %v1563
      %v1645 = vunpack.c.h.b16 %v1563
      %v1646 = vunpack.c.l.b16 %v1564
      %v1647 = vunpack.c.h.b16 %v1564
      %v1648 = vunpack.c.l.b16 %v1565
      %v1649 = vunpack.c.h.b16 %v1565
      %v1650 = vunpack.c.l.b16 %v1566
      %v1651 = vunpack.c.h.b16 %v1566
      %v1652 = vunpack.c.l.b16 %v1567
      %v1653 = vunpack.c.h.b16 %v1567
      %v1654 = vunpack.c.l.b16 %v1568
      %v1655 = vunpack.c.h.b16 %v1568
      %v1656 = vunpack.c.l.b16 %v1569
      %v1657 = vunpack.c.h.b16 %v1569
      %v1658 = vunpack.c.l.b16 %v1570
      %v1659 = vunpack.c.h.b16 %v1570
      %v1660 = vunpack.c.l.b16 %v1571
      %v1661 = vunpack.c.h.b16 %v1571
      %v1662 = vunpack.c.l.b16 %v1572
      %v1663 = vunpack.c.h.b16 %v1572
      %v1664 = vunpack.c.l.b16 %v1573
      %v1665 = vunpack.c.h.b16 %v1573
      %v1666 = vunpack.c.l.b16 %v1574
      %v1667 = vunpack.c.h.b16 %v1574
      %v1668 = vunpack.c.l.b16 %v1575
      %v1669 = vunpack.c.h.b16 %v1575
      %v1670 = vunpack.c.l.b16 %v1576
      %v1671 = vunpack.c.h.b16 %v1576
      %v1672 = vunpack.c.l.b16 %v1577
      %v1673 = vunpack.c.h.b16 %v1577
      %v1674 = vpack.c.b16 %v1614, %v1610
      %v1675 = vpack.c.b16 %v1615, %v1611
      %v1676 = vpack.c.b16 %v1616, %v1612
      %v1677 = vpack.c.b16 %v1617, %v1613
      %v1678 = vpack.c.b16 %v1622, %v1618
      %v1679 = vpack.c.b16 %v1623, %v1619
      %v1680 = vpack.c.b16 %v1624, %v1620
      %v1681 = vpack.c.b16 %v1625, %v1621
      %v1682 = vpack.c.b16 %v1630, %v1626
      %v1683 = vpack.c.b16 %v1631, %v1627
      %v1684 = vpack.c.b16 %v1632, %v1628
      %v1685 = vpack.c.b16 %v1633, %v1629
      %v1686 = vpack.c.b16 %v1638, %v1634
      %v1687 = vpack.c.b16 %v1639, %v1635
      %v1688 = vpack.c.b16 %v1640, %v1636
      %v1689 = vpack.c.b16 %v1641, %v1637
      %v1690 = vpack.c.b16 %v1646, %v1642
      %v1691 = vpack.c.b16 %v1647, %v1643
      %v1692 = vpack.c.b16 %v1648, %v1644
      %v1693 = vpack.c.b16 %v1649, %v1645
      %v1694 = vpack.c.b16 %v1654, %v1650
      %v1695 = vpack.c.b16 %v1655, %v1651
      %v1696 = vpack.c.b16 %v1656, %v1652
      %v1697 = vpack.c.b16 %v1657, %v1653
      %v1698 = vpack.c.b16 %v1662, %v1658
      %v1699 = vpack.c.b16 %v1663, %v1659
      %v1700 = vpack.c.b16 %v1664, %v1660
      %v1701 = vpack.c.b16 %v1665, %v1661
      %v1702 = vpack.c.b16 %v1670, %v1666
      %v1703 = vpack.c.b16 %v1671, %v1667
      %v1704 = vpack.c.b16 %v1672, %v1668
      %v1705 = vpack.c.b16 %v1673, %v1669
      %1738 = vmatpush.bf16.msra.mxu0 %v1702
      %1739 = vmatpush.bf16.msra.mxu0 %v1698
      %1740 = vmatpush.bf16.msra.mxu0 %v1694
      %1741 = vmatpush.bf16.msra.mxu0 %v1690
      %1742 = vmatpush.bf16.msra.mxu0 %v1686
      %1743 = vmatpush.bf16.msra.mxu0 %v1682
      %1744 = vmatpush.bf16.msra.mxu0 %v1678
      %1745 = vmatpush.bf16.msra.mxu0 %v1674
      %1746 = vmatmul.bf16.gmra.mxu0 %v1545
      %v1747 = vpop.f32.mrf.mxu0
      %v1748 = vadd.f32 0.0, %v1747
      %v1749 = vpop.f32.mrf.mxu0
      %1750 = vdwg.mxu0
      %1751 = vmatpush.bf16.msra.mxu0 %v1703
      %1752 = vmatpush.bf16.msra.mxu0 %v1699
      %1753 = vmatpush.bf16.msra.mxu0 %v1695
      %1754 = vmatpush.bf16.msra.mxu0 %v1691
      %1755 = vmatpush.bf16.msra.mxu0 %v1687
      %1756 = vmatpush.bf16.msra.mxu0 %v1683
      %1757 = vmatpush.bf16.msra.mxu0 %v1679
      %1758 = vmatpush.bf16.msra.mxu0 %v1675
      %1759 = vmatmul.bf16.gmra.mxu0 %v1545
      %v1760 = vpop.f32.mrf.mxu0
      %v1761 = vadd.f32 0.0, %v1760
      %v1762 = vpop.f32.mrf.mxu0
      %1763 = vdwg.mxu0
      %1764 = vmatpush.bf16.msra.mxu0 %v1704
      %1765 = vmatpush.bf16.msra.mxu0 %v1700
      %1766 = vmatpush.bf16.msra.mxu0 %v1696
      %1767 = vmatpush.bf16.msra.mxu0 %v1692
      %1768 = vmatpush.bf16.msra.mxu0 %v1688
      %1769 = vmatpush.bf16.msra.mxu0 %v1684
      %1770 = vmatpush.bf16.msra.mxu0 %v1680
      %1771 = vmatpush.bf16.msra.mxu0 %v1676
      %1772 = vmatmul.bf16.gmra.mxu0 %v1545
      %v1773 = vpop.f32.mrf.mxu0
      %v1774 = vadd.f32 0.0, %v1773
      %v1775 = vpop.f32.mrf.mxu0
      %1776 = vdwg.mxu0
      %1777 = vmatpush.bf16.msra.mxu0 %v1705
      %1778 = vmatpush.bf16.msra.mxu0 %v1701
      %1779 = vmatpush.bf16.msra.mxu0 %v1697
      %1780 = vmatpush.bf16.msra.mxu0 %v1693
      %1781 = vmatpush.bf16.msra.mxu0 %v1689
      %1782 = vmatpush.bf16.msra.mxu0 %v1685
      %1783 = vmatpush.bf16.msra.mxu0 %v1681
      %1784 = vmatpush.bf16.msra.mxu0 %v1677
      %1785 = vmatmul.bf16.gmra.mxu0 %v1545
      %v1786 = vpop.f32.mrf.mxu0
      %v1787 = vadd.f32 0.0, %v1786
      %v1788 = vpop.f32.mrf.mxu0
      %1789 = vdwg.mxu0
      %v1790 = vadd.f32 %v1541, %v1748
      %v1791 = vadd.f32 %v1542, %v1761
      %v1792 = vadd.f32 %v1543, %v1774
      %v1793 = vadd.f32 %v1544, %v1787
      %v1794 = vxor.u32 %v1790, 2147483648
      %v1795 = vmul.f32 %v1794, 1.442695
      %v1796 = vpow.pop %v1795
      %v1797 = vadd.f32 %v1796, 1.0
      %v1798 = vrcp.pop %v1797
      %v1799 = vmul.f32 %v1797, %v1798
      %v1800 = vsub.f32 1.0, %v1799
      %v1801 = vmul.f32 %v1798, %v1800
      %v1802 = vadd.f32 %v1798, %v1801
      %vm1803 = vweird.f32 %v1797
      %vm1804 = vweird.f32 %v1798
      %vm1805 = vmor %vm1803, %vm1804
      %v1806 = vsel %vm1805, %v1798, %v1802
      %v1807 = vand.u32 2147483647, %v1797
      %vm1808 = vcmp.eq.f32.partialorder %v1807, 8.507059e+37
      %v1809 = vand.u32 %v1797, 2147483648
      %v1810 = vor.u32 1.1754944e-38, %v1809
      %v1811 = vsel %vm1808, %v1810, %v1806
      %v1812 = vmul.f32 1.0, %v1811
      %v1813 = vxor.u32 %v1791, 2147483648
      %v1814 = vmul.f32 %v1813, 1.442695
      %v1815 = vpow.pop %v1814
      %v1816 = vadd.f32 %v1815, 1.0
      %v1817 = vrcp.pop %v1816
      %v1818 = vmul.f32 %v1816, %v1817
      %v1819 = vsub.f32 1.0, %v1818
      %v1820 = vmul.f32 %v1817, %v1819
      %v1821 = vadd.f32 %v1817, %v1820
      %vm1822 = vweird.f32 %v1816
      %vm1823 = vweird.f32 %v1817
      %vm1824 = vmor %vm1822, %vm1823
      %v1825 = vsel %vm1824, %v1817, %v1821
      %v1826 = vand.u32 2147483647, %v1816
      %vm1827 = vcmp.eq.f32.partialorder %v1826, 8.507059e+37
      %v1828 = vand.u32 %v1816, 2147483648
      %v1829 = vor.u32 1.1754944e-38, %v1828
      %v1830 = vsel %vm1827, %v1829, %v1825
      %v1831 = vmul.f32 1.0, %v1830
      %v1832 = vtanh.pop %v1792
      %v1833 = vxor.u32 %v1793, 2147483648
      %v1834 = vmul.f32 %v1833, 1.442695
      %v1835 = vpow.pop %v1834
      %v1836 = vadd.f32 %v1835, 1.0
      %v1837 = vrcp.pop %v1836
      %v1838 = vmul.f32 %v1836, %v1837
      %v1839 = vsub.f32 1.0, %v1838
      %v1840 = vmul.f32 %v1837, %v1839
      %v1841 = vadd.f32 %v1837, %v1840
      %vm1842 = vweird.f32 %v1836
      %vm1843 = vweird.f32 %v1837
      %vm1844 = vmor %vm1842, %vm1843
      %v1845 = vsel %vm1844, %v1837, %v1841
      %v1846 = vand.u32 2147483647, %v1836
      %vm1847 = vcmp.eq.f32.partialorder %v1846, 8.507059e+37
      %v1848 = vand.u32 %v1836, 2147483648
      %v1849 = vor.u32 1.1754944e-38, %v1848
      %v1850 = vsel %vm1847, %v1849, %v1845
      %v1851 = vmul.f32 1.0, %v1850
      %v1852 = vmul.f32 %v1831, %v1534
      %v1853 = vmul.f32 %v1812, %v1832
      %v1854 = vadd.f32 %v1852, %v1853
      %v1855 = vtanh.pop %v1854
      %v1856 = vmul.f32 %v1851, %v1855
      %v1857 = vstv %s1532
      %vm1858 = vcmp.eq.s32.totalorder %v1530, %v1857
      %v1859 = vsel %vm1858, %v1856, %v1535
      %s1860 = sadd.s32 %s1531, 8
      %s1861 = sshra.s32 %s1860, 3
      %s1862 = sand.u32 %s1860, 7
      %s1863 = smul.u32 %s1861, 4
      %s1864 = smul.addr %s1863, 8
      %s1865 = scalar_lea.vmem [#allocation2], %s1864
      %v1866 = vld [vmem:[%s1865] sm:$0xff]
      %v1867 = vld [vmem:[%s1865 + $0x8] sm:$0xff]
      %v1868 = vld [vmem:[%s1865 + $0x10] sm:$0xff]
      %v1869 = vld [vmem:[%s1865 + $0x18] sm:$0xff]
      %v1870 = vpack.c.bf16 %v1856, %v1856
      %1871 = vmatpush.bf16.msra.mxu0 %v1702
      %1872 = vmatpush.bf16.msra.mxu0 %v1698
      %1873 = vmatpush.bf16.msra.mxu0 %v1694
      %1874 = vmatpush.bf16.msra.mxu0 %v1690
      %1875 = vmatpush.bf16.msra.mxu0 %v1686
      %1876 = vmatpush.bf16.msra.mxu0 %v1682
      %1877 = vmatpush.bf16.msra.mxu0 %v1678
      %1878 = vmatpush.bf16.msra.mxu0 %v1674
      %1879 = vmatmul.bf16.gmra.mxu0 %v1870
      %v1880 = vpop.f32.mrf.mxu0
      %v1881 = vadd.f32 0.0, %v1880
      %v1882 = vpop.f32.mrf.mxu0
      %1883 = vdwg.mxu0
      %1884 = vmatpush.bf16.msra.mxu0 %v1703
      %1885 = vmatpush.bf16.msra.mxu0 %v1699
      %1886 = vmatpush.bf16.msra.mxu0 %v1695
      %1887 = vmatpush.bf16.msra.mxu0 %v1691
      %1888 = vmatpush.bf16.msra.mxu0 %v1687
      %1889 = vmatpush.bf16.msra.mxu0 %v1683
      %1890 = vmatpush.bf16.msra.mxu0 %v1679
      %1891 = vmatpush.bf16.msra.mxu0 %v1675
      %1892 = vmatmul.bf16.gmra.mxu0 %v1870
      %v1893 = vpop.f32.mrf.mxu0
      %v1894 = vadd.f32 0.0, %v1893
      %v1895 = vpop.f32.mrf.mxu0
      %1896 = vdwg.mxu0
      %1897 = vmatpush.bf16.msra.mxu0 %v1704
      %1898 = vmatpush.bf16.msra.mxu0 %v1700
      %1899 = vmatpush.bf16.msra.mxu0 %v1696
      %1900 = vmatpush.bf16.msra.mxu0 %v1692
      %1901 = vmatpush.bf16.msra.mxu0 %v1688
      %1902 = vmatpush.bf16.msra.mxu0 %v1684
      %1903 = vmatpush.bf16.msra.mxu0 %v1680
      %1904 = vmatpush.bf16.msra.mxu0 %v1676
      %1905 = vmatmul.bf16.gmra.mxu0 %v1870
      %v1906 = vpop.f32.mrf.mxu0
      %v1907 = vadd.f32 0.0, %v1906
      %v1908 = vpop.f32.mrf.mxu0
      %1909 = vdwg.mxu0
      %1910 = vmatpush.bf16.msra.mxu0 %v1705
      %1911 = vmatpush.bf16.msra.mxu0 %v1701
      %1912 = vmatpush.bf16.msra.mxu0 %v1697
      %1913 = vmatpush.bf16.msra.mxu0 %v1693
      %1914 = vmatpush.bf16.msra.mxu0 %v1689
      %1915 = vmatpush.bf16.msra.mxu0 %v1685
      %1916 = vmatpush.bf16.msra.mxu0 %v1681
      %1917 = vmatpush.bf16.msra.mxu0 %v1677
      %1918 = vmatmul.bf16.gmra.mxu0 %v1870
      %v1919 = vpop.f32.mrf.mxu0
      %v1920 = vadd.f32 0.0, %v1919
      %v1921 = vpop.f32.mrf.mxu0
      %1922 = vdwg.mxu0
      %v1923 = vadd.f32 %v1866, %v1881
      %v1924 = vadd.f32 %v1867, %v1894
      %v1925 = vadd.f32 %v1868, %v1907
      %v1926 = vadd.f32 %v1869, %v1920
      %v1927 = vxor.u32 %v1923, 2147483648
      %v1928 = vmul.f32 %v1927, 1.442695
      %v1929 = vpow.pop %v1928
      %v1930 = vadd.f32 %v1929, 1.0
      %v1931 = vrcp.pop %v1930
      %v1932 = vmul.f32 %v1930, %v1931
      %v1933 = vsub.f32 1.0, %v1932
      %v1934 = vmul.f32 %v1931, %v1933
      %v1935 = vadd.f32 %v1931, %v1934
      %vm1936 = vweird.f32 %v1930
      %vm1937 = vweird.f32 %v1931
      %vm1938 = vmor %vm1936, %vm1937
      %v1939 = vsel %vm1938, %v1931, %v1935
      %v1940 = vand.u32 2147483647, %v1930
      %vm1941 = vcmp.eq.f32.partialorder %v1940, 8.507059e+37
      %v1942 = vand.u32 %v1930, 2147483648
      %v1943 = vor.u32 1.1754944e-38, %v1942
      %v1944 = vsel %vm1941, %v1943, %v1939
      %v1945 = vmul.f32 1.0, %v1944
      %v1946 = vxor.u32 %v1924, 2147483648
      %v1947 = vmul.f32 %v1946, 1.442695
      %v1948 = vpow.pop %v1947
      %v1949 = vadd.f32 %v1948, 1.0
      %v1950 = vrcp.pop %v1949
      %v1951 = vmul.f32 %v1949, %v1950
      %v1952 = vsub.f32 1.0, %v1951
      %v1953 = vmul.f32 %v1950, %v1952
      %v1954 = vadd.f32 %v1950, %v1953
      %vm1955 = vweird.f32 %v1949
      %vm1956 = vweird.f32 %v1950
      %vm1957 = vmor %vm1955, %vm1956
      %v1958 = vsel %vm1957, %v1950, %v1954
      %v1959 = vand.u32 2147483647, %v1949
      %vm1960 = vcmp.eq.f32.partialorder %v1959, 8.507059e+37
      %v1961 = vand.u32 %v1949, 2147483648
      %v1962 = vor.u32 1.1754944e-38, %v1961
      %v1963 = vsel %vm1960, %v1962, %v1958
      %v1964 = vmul.f32 1.0, %v1963
      %v1965 = vtanh.pop %v1925
      %v1966 = vxor.u32 %v1926, 2147483648
      %v1967 = vmul.f32 %v1966, 1.442695
      %v1968 = vpow.pop %v1967
      %v1969 = vadd.f32 %v1968, 1.0
      %v1970 = vrcp.pop %v1969
      %v1971 = vmul.f32 %v1969, %v1970
      %v1972 = vsub.f32 1.0, %v1971
      %v1973 = vmul.f32 %v1970, %v1972
      %v1974 = vadd.f32 %v1970, %v1973
      %vm1975 = vweird.f32 %v1969
      %vm1976 = vweird.f32 %v1970
      %vm1977 = vmor %vm1975, %vm1976
      %v1978 = vsel %vm1977, %v1970, %v1974
      %v1979 = vand.u32 2147483647, %v1969
      %vm1980 = vcmp.eq.f32.partialorder %v1979, 8.507059e+37
      %v1981 = vand.u32 %v1969, 2147483648
      %v1982 = vor.u32 1.1754944e-38, %v1981
      %v1983 = vsel %vm1980, %v1982, %v1978
      %v1984 = vmul.f32 1.0, %v1983
      %v1985 = vmul.f32 %v1964, %v1854
      %v1986 = vmul.f32 %v1945, %v1965
      %v1987 = vadd.f32 %v1985, %v1986
      %v1988 = vtanh.pop %v1987
      %v1989 = vmul.f32 %v1984, %v1988
      %s1990 = sadd.s32 %s1532, 1
      %v1991 = vstv %s1990
      %vm1992 = vcmp.eq.s32.totalorder %v1530, %v1991
      %v1993 = vsel %vm1992, %v1989, %v1859
      %s1994 = sadd.s32 %s1531, 16
      %s1995 = sshra.s32 %s1994, 3
      %s1996 = sand.u32 %s1994, 7
      %s1997 = smul.u32 %s1995, 4
      %s1998 = smul.addr %s1997, 8
      %s1999 = scalar_lea.vmem [#allocation2], %s1998
      %v2000 = vld [vmem:[%s1999] sm:$0xff]
      %v2001 = vld [vmem:[%s1999 + $0x8] sm:$0xff]
      %v2002 = vld [vmem:[%s1999 + $0x10] sm:$0xff]
      %v2003 = vld [vmem:[%s1999 + $0x18] sm:$0xff]
      %v2004 = vpack.c.bf16 %v1989, %v1989
      %2005 = vmatpush.bf16.msra.mxu0 %v1702
      %2006 = vmatpush.bf16.msra.mxu0 %v1698
      %2007 = vmatpush.bf16.msra.mxu0 %v1694
      %2008 = vmatpush.bf16.msra.mxu0 %v1690
      %2009 = vmatpush.bf16.msra.mxu0 %v1686
      %2010 = vmatpush.bf16.msra.mxu0 %v1682
      %2011 = vmatpush.bf16.msra.mxu0 %v1678
      %2012 = vmatpush.bf16.msra.mxu0 %v1674
      %2013 = vmatmul.bf16.gmra.mxu0 %v2004
      %v2014 = vpop.f32.mrf.mxu0
      %v2015 = vadd.f32 0.0, %v2014
      %v2016 = vpop.f32.mrf.mxu0
      %2017 = vdwg.mxu0
      %2018 = vmatpush.bf16.msra.mxu0 %v1703
      %2019 = vmatpush.bf16.msra.mxu0 %v1699
      %2020 = vmatpush.bf16.msra.mxu0 %v1695
      %2021 = vmatpush.bf16.msra.mxu0 %v1691
      %2022 = vmatpush.bf16.msra.mxu0 %v1687
      %2023 = vmatpush.bf16.msra.mxu0 %v1683
      %2024 = vmatpush.bf16.msra.mxu0 %v1679
      %2025 = vmatpush.bf16.msra.mxu0 %v1675
      %2026 = vmatmul.bf16.gmra.mxu0 %v2004
      %v2027 = vpop.f32.mrf.mxu0
      %v2028 = vadd.f32 0.0, %v2027
      %v2029 = vpop.f32.mrf.mxu0
      %2030 = vdwg.mxu0
      %2031 = vmatpush.bf16.msra.mxu0 %v1704
      %2032 = vmatpush.bf16.msra.mxu0 %v1700
      %2033 = vmatpush.bf16.msra.mxu0 %v1696
      %2034 = vmatpush.bf16.msra.mxu0 %v1692
      %2035 = vmatpush.bf16.msra.mxu0 %v1688
      %2036 = vmatpush.bf16.msra.mxu0 %v1684
      %2037 = vmatpush.bf16.msra.mxu0 %v1680
      %2038 = vmatpush.bf16.msra.mxu0 %v1676
      %2039 = vmatmul.bf16.gmra.mxu0 %v2004
      %v2040 = vpop.f32.mrf.mxu0
      %v2041 = vadd.f32 0.0, %v2040
      %v2042 = vpop.f32.mrf.mxu0
      %2043 = vdwg.mxu0
      %2044 = vmatpush.bf16.msra.mxu0 %v1705
      %2045 = vmatpush.bf16.msra.mxu0 %v1701
      %2046 = vmatpush.bf16.msra.mxu0 %v1697
      %2047 = vmatpush.bf16.msra.mxu0 %v1693
      %2048 = vmatpush.bf16.msra.mxu0 %v1689
      %2049 = vmatpush.bf16.msra.mxu0 %v1685
      %2050 = vmatpush.bf16.msra.mxu0 %v1681
      %2051 = vmatpush.bf16.msra.mxu0 %v1677
      %2052 = vmatmul.bf16.gmra.mxu0 %v2004
      %v2053 = vpop.f32.mrf.mxu0
      %v2054 = vadd.f32 0.0, %v2053
      %v2055 = vpop.f32.mrf.mxu0
      %2056 = vdwg.mxu0
      %v2057 = vadd.f32 %v2000, %v2015
      %v2058 = vadd.f32 %v2001, %v2028
      %v2059 = vadd.f32 %v2002, %v2041
      %v2060 = vadd.f32 %v2003, %v2054
      %v2061 = vxor.u32 %v2057, 2147483648
      %v2062 = vmul.f32 %v2061, 1.442695
      %v2063 = vpow.pop %v2062
      %v2064 = vadd.f32 %v2063, 1.0
      %v2065 = vrcp.pop %v2064
      %v2066 = vmul.f32 %v2064, %v2065
      %v2067 = vsub.f32 1.0, %v2066
      %v2068 = vmul.f32 %v2065, %v2067
      %v2069 = vadd.f32 %v2065, %v2068
      %vm2070 = vweird.f32 %v2064
      %vm2071 = vweird.f32 %v2065
      %vm2072 = vmor %vm2070, %vm2071
      %v2073 = vsel %vm2072, %v2065, %v2069
      %v2074 = vand.u32 2147483647, %v2064
      %vm2075 = vcmp.eq.f32.partialorder %v2074, 8.507059e+37
      %v2076 = vand.u32 %v2064, 2147483648
      %v2077 = vor.u32 1.1754944e-38, %v2076
      %v2078 = vsel %vm2075, %v2077, %v2073
      %v2079 = vmul.f32 1.0, %v2078
      %v2080 = vxor.u32 %v2058, 2147483648
      %v2081 = vmul.f32 %v2080, 1.442695
      %v2082 = vpow.pop %v2081
      %v2083 = vadd.f32 %v2082, 1.0
      %v2084 = vrcp.pop %v2083
      %v2085 = vmul.f32 %v2083, %v2084
      %v2086 = vsub.f32 1.0, %v2085
      %v2087 = vmul.f32 %v2084, %v2086
      %v2088 = vadd.f32 %v2084, %v2087
      %vm2089 = vweird.f32 %v2083
      %vm2090 = vweird.f32 %v2084
      %vm2091 = vmor %vm2089, %vm2090
      %v2092 = vsel %vm2091, %v2084, %v2088
      %v2093 = vand.u32 2147483647, %v2083
      %vm2094 = vcmp.eq.f32.partialorder %v2093, 8.507059e+37
      %v2095 = vand.u32 %v2083, 2147483648
      %v2096 = vor.u32 1.1754944e-38, %v2095
      %v2097 = vsel %vm2094, %v2096, %v2092
      %v2098 = vmul.f32 1.0, %v2097
      %v2099 = vtanh.pop %v2059
      %v2100 = vxor.u32 %v2060, 2147483648
      %v2101 = vmul.f32 %v2100, 1.442695
      %v2102 = vpow.pop %v2101
      %v2103 = vadd.f32 %v2102, 1.0
      %v2104 = vrcp.pop %v2103
      %v2105 = vmul.f32 %v2103, %v2104
      %v2106 = vsub.f32 1.0, %v2105
      %v2107 = vmul.f32 %v2104, %v2106
      %v2108 = vadd.f32 %v2104, %v2107
      %vm2109 = vweird.f32 %v2103
      %vm2110 = vweird.f32 %v2104
      %vm2111 = vmor %vm2109, %vm2110
      %v2112 = vsel %vm2111, %v2104, %v2108
      %v2113 = vand.u32 2147483647, %v2103
      %vm2114 = vcmp.eq.f32.partialorder %v2113, 8.507059e+37
      %v2115 = vand.u32 %v2103, 2147483648
      %v2116 = vor.u32 1.1754944e-38, %v2115
      %v2117 = vsel %vm2114, %v2116, %v2112
      %v2118 = vmul.f32 1.0, %v2117
      %v2119 = vmul.f32 %v2098, %v1987
      %v2120 = vmul.f32 %v2079, %v2099
      %v2121 = vadd.f32 %v2119, %v2120
      %v2122 = vtanh.pop %v2121
      %v2123 = vmul.f32 %v2118, %v2122
      %s2124 = sadd.s32 %s1532, 2
      %v2125 = vstv %s2124
      %vm2126 = vcmp.eq.s32.totalorder %v1530, %v2125
      %v2127 = vsel %vm2126, %v2123, %v1993
      %s2128 = sadd.s32 %s1531, 24
      %s2129 = sshra.s32 %s2128, 3
      %s2130 = sand.u32 %s2128, 7
      %s2131 = smul.u32 %s2129, 4
      %s2132 = smul.addr %s2131, 8
      %s2133 = scalar_lea.vmem [#allocation2], %s2132
      %v2134 = vld [vmem:[%s2133] sm:$0xff]
      %v2135 = vld [vmem:[%s2133 + $0x8] sm:$0xff]
      %v2136 = vld [vmem:[%s2133 + $0x10] sm:$0xff]
      %v2137 = vld [vmem:[%s2133 + $0x18] sm:$0xff]
      %v2138 = vpack.c.bf16 %v2123, %v2123
      %2139 = vmatpush.bf16.msra.mxu0 %v1702
      %2140 = vmatpush.bf16.msra.mxu0 %v1698
      %2141 = vmatpush.bf16.msra.mxu0 %v1694
      %2142 = vmatpush.bf16.msra.mxu0 %v1690
      %2143 = vmatpush.bf16.msra.mxu0 %v1686
      %2144 = vmatpush.bf16.msra.mxu0 %v1682
      %2145 = vmatpush.bf16.msra.mxu0 %v1678
      %2146 = vmatpush.bf16.msra.mxu0 %v1674
      %2147 = vmatmul.bf16.gmra.mxu0 %v2138
      %v2148 = vpop.f32.mrf.mxu0
      %v2149 = vadd.f32 0.0, %v2148
      %v2150 = vpop.f32.mrf.mxu0
      %2151 = vdwg.mxu0
      %2152 = vmatpush.bf16.msra.mxu0 %v1703
      %2153 = vmatpush.bf16.msra.mxu0 %v1699
      %2154 = vmatpush.bf16.msra.mxu0 %v1695
      %2155 = vmatpush.bf16.msra.mxu0 %v1691
      %2156 = vmatpush.bf16.msra.mxu0 %v1687
      %2157 = vmatpush.bf16.msra.mxu0 %v1683
      %2158 = vmatpush.bf16.msra.mxu0 %v1679
      %2159 = vmatpush.bf16.msra.mxu0 %v1675
      %2160 = vmatmul.bf16.gmra.mxu0 %v2138
      %v2161 = vpop.f32.mrf.mxu0
      %v2162 = vadd.f32 0.0, %v2161
      %v2163 = vpop.f32.mrf.mxu0
      %2164 = vdwg.mxu0
      %2165 = vmatpush.bf16.msra.mxu0 %v1704
      %2166 = vmatpush.bf16.msra.mxu0 %v1700
      %2167 = vmatpush.bf16.msra.mxu0 %v1696
      %2168 = vmatpush.bf16.msra.mxu0 %v1692
      %2169 = vmatpush.bf16.msra.mxu0 %v1688
      %2170 = vmatpush.bf16.msra.mxu0 %v1684
      %2171 = vmatpush.bf16.msra.mxu0 %v1680
      %2172 = vmatpush.bf16.msra.mxu0 %v1676
      %2173 = vmatmul.bf16.gmra.mxu0 %v2138
      %v2174 = vpop.f32.mrf.mxu0
      %v2175 = vadd.f32 0.0, %v2174
      %v2176 = vpop.f32.mrf.mxu0
      %2177 = vdwg.mxu0
      %2178 = vmatpush.bf16.msra.mxu0 %v1705
      %2179 = vmatpush.bf16.msra.mxu0 %v1701
      %2180 = vmatpush.bf16.msra.mxu0 %v1697
      %2181 = vmatpush.bf16.msra.mxu0 %v1693
      %2182 = vmatpush.bf16.msra.mxu0 %v1689
      %2183 = vmatpush.bf16.msra.mxu0 %v1685
      %2184 = vmatpush.bf16.msra.mxu0 %v1681
      %2185 = vmatpush.bf16.msra.mxu0 %v1677
      %2186 = vmatmul.bf16.gmra.mxu0 %v2138
      %v2187 = vpop.f32.mrf.mxu0
      %v2188 = vadd.f32 0.0, %v2187
      %v2189 = vpop.f32.mrf.mxu0
      %2190 = vdwg.mxu0
      %v2191 = vadd.f32 %v2134, %v2149
      %v2192 = vadd.f32 %v2135, %v2162
      %v2193 = vadd.f32 %v2136, %v2175
      %v2194 = vadd.f32 %v2137, %v2188
      %v2195 = vxor.u32 %v2191, 2147483648
      %v2196 = vmul.f32 %v2195, 1.442695
      %v2197 = vpow.pop %v2196
      %v2198 = vadd.f32 %v2197, 1.0
      %v2199 = vrcp.pop %v2198
      %v2200 = vmul.f32 %v2198, %v2199
      %v2201 = vsub.f32 1.0, %v2200
      %v2202 = vmul.f32 %v2199, %v2201
      %v2203 = vadd.f32 %v2199, %v2202
      %vm2204 = vweird.f32 %v2198
      %vm2205 = vweird.f32 %v2199
      %vm2206 = vmor %vm2204, %vm2205
      %v2207 = vsel %vm2206, %v2199, %v2203
      %v2208 = vand.u32 2147483647, %v2198
      %vm2209 = vcmp.eq.f32.partialorder %v2208, 8.507059e+37
      %v2210 = vand.u32 %v2198, 2147483648
      %v2211 = vor.u32 1.1754944e-38, %v2210
      %v2212 = vsel %vm2209, %v2211, %v2207
      %v2213 = vmul.f32 1.0, %v2212
      %v2214 = vxor.u32 %v2192, 2147483648
      %v2215 = vmul.f32 %v2214, 1.442695
      %v2216 = vpow.pop %v2215
      %v2217 = vadd.f32 %v2216, 1.0
      %v2218 = vrcp.pop %v2217
      %v2219 = vmul.f32 %v2217, %v2218
      %v2220 = vsub.f32 1.0, %v2219
      %v2221 = vmul.f32 %v2218, %v2220
      %v2222 = vadd.f32 %v2218, %v2221
      %vm2223 = vweird.f32 %v2217
      %vm2224 = vweird.f32 %v2218
      %vm2225 = vmor %vm2223, %vm2224
      %v2226 = vsel %vm2225, %v2218, %v2222
      %v2227 = vand.u32 2147483647, %v2217
      %vm2228 = vcmp.eq.f32.partialorder %v2227, 8.507059e+37
      %v2229 = vand.u32 %v2217, 2147483648
      %v2230 = vor.u32 1.1754944e-38, %v2229
      %v2231 = vsel %vm2228, %v2230, %v2226
      %v2232 = vmul.f32 1.0, %v2231
      %v2233 = vtanh.pop %v2193
      %v2234 = vxor.u32 %v2194, 2147483648
      %v2235 = vmul.f32 %v2234, 1.442695
      %v2236 = vpow.pop %v2235
      %v2237 = vadd.f32 %v2236, 1.0
      %v2238 = vrcp.pop %v2237
      %v2239 = vmul.f32 %v2237, %v2238
      %v2240 = vsub.f32 1.0, %v2239
      %v2241 = vmul.f32 %v2238, %v2240
      %v2242 = vadd.f32 %v2238, %v2241
      %vm2243 = vweird.f32 %v2237
      %vm2244 = vweird.f32 %v2238
      %vm2245 = vmor %vm2243, %vm2244
      %v2246 = vsel %vm2245, %v2238, %v2242
      %v2247 = vand.u32 2147483647, %v2237
      %vm2248 = vcmp.eq.f32.partialorder %v2247, 8.507059e+37
      %v2249 = vand.u32 %v2237, 2147483648
      %v2250 = vor.u32 1.1754944e-38, %v2249
      %v2251 = vsel %vm2248, %v2250, %v2246
      %v2252 = vmul.f32 1.0, %v2251
      %v2253 = vmul.f32 %v2232, %v2121
      %v2254 = vmul.f32 %v2213, %v2233
      %v2255 = vadd.f32 %v2253, %v2254
      %v2256 = vtanh.pop %v2255
      %v2257 = vmul.f32 %v2252, %v2256
      %s2258 = sadd.s32 %s1532, 3
      %v2259 = vstv %s2258
      %vm2260 = vcmp.eq.s32.totalorder %v1530, %v2259
      %v2261 = vsel %vm2260, %v2257, %v2127
      %s2262 = sadd.s32 %s1531, 32
      %s2263 = sshra.s32 %s2262, 3
      %s2264 = sand.u32 %s2262, 7
      %s2265 = smul.u32 %s2263, 4
      %s2266 = smul.addr %s2265, 8
      %s2267 = scalar_lea.vmem [#allocation2], %s2266
      %v2268 = vld [vmem:[%s2267] sm:$0xff]
      %v2269 = vld [vmem:[%s2267 + $0x8] sm:$0xff]
      %v2270 = vld [vmem:[%s2267 + $0x10] sm:$0xff]
      %v2271 = vld [vmem:[%s2267 + $0x18] sm:$0xff]
      %v2272 = vpack.c.bf16 %v2257, %v2257
      %2273 = vmatpush.bf16.msra.mxu0 %v1702
      %2274 = vmatpush.bf16.msra.mxu0 %v1698
      %2275 = vmatpush.bf16.msra.mxu0 %v1694
      %2276 = vmatpush.bf16.msra.mxu0 %v1690
      %2277 = vmatpush.bf16.msra.mxu0 %v1686
      %2278 = vmatpush.bf16.msra.mxu0 %v1682
      %2279 = vmatpush.bf16.msra.mxu0 %v1678
      %2280 = vmatpush.bf16.msra.mxu0 %v1674
      %2281 = vmatmul.bf16.gmra.mxu0 %v2272
      %v2282 = vpop.f32.mrf.mxu0
      %v2283 = vadd.f32 0.0, %v2282
      %v2284 = vpop.f32.mrf.mxu0
      %2285 = vdwg.mxu0
      %2286 = vmatpush.bf16.msra.mxu0 %v1703
      %2287 = vmatpush.bf16.msra.mxu0 %v1699
      %2288 = vmatpush.bf16.msra.mxu0 %v1695
      %2289 = vmatpush.bf16.msra.mxu0 %v1691
      %2290 = vmatpush.bf16.msra.mxu0 %v1687
      %2291 = vmatpush.bf16.msra.mxu0 %v1683
      %2292 = vmatpush.bf16.msra.mxu0 %v1679
      %2293 = vmatpush.bf16.msra.mxu0 %v1675
      %2294 = vmatmul.bf16.gmra.mxu0 %v2272
      %v2295 = vpop.f32.mrf.mxu0
      %v2296 = vadd.f32 0.0, %v2295
      %v2297 = vpop.f32.mrf.mxu0
      %2298 = vdwg.mxu0
      %2299 = vmatpush.bf16.msra.mxu0 %v1704
      %2300 = vmatpush.bf16.msra.mxu0 %v1700
      %2301 = vmatpush.bf16.msra.mxu0 %v1696
      %2302 = vmatpush.bf16.msra.mxu0 %v1692
      %2303 = vmatpush.bf16.msra.mxu0 %v1688
      %2304 = vmatpush.bf16.msra.mxu0 %v1684
      %2305 = vmatpush.bf16.msra.mxu0 %v1680
      %2306 = vmatpush.bf16.msra.mxu0 %v1676
      %2307 = vmatmul.bf16.gmra.mxu0 %v2272
      %v2308 = vpop.f32.mrf.mxu0
      %v2309 = vadd.f32 0.0, %v2308
      %v2310 = vpop.f32.mrf.mxu0
      %2311 = vdwg.mxu0
      %2312 = vmatpush.bf16.msra.mxu0 %v1705
      %2313 = vmatpush.bf16.msra.mxu0 %v1701
      %2314 = vmatpush.bf16.msra.mxu0 %v1697
      %2315 = vmatpush.bf16.msra.mxu0 %v1693
      %2316 = vmatpush.bf16.msra.mxu0 %v1689
      %2317 = vmatpush.bf16.msra.mxu0 %v1685
      %2318 = vmatpush.bf16.msra.mxu0 %v1681
      %2319 = vmatpush.bf16.msra.mxu0 %v1677
      %2320 = vmatmul.bf16.gmra.mxu0 %v2272
      %v2321 = vpop.f32.mrf.mxu0
      %v2322 = vadd.f32 0.0, %v2321
      %v2323 = vpop.f32.mrf.mxu0
      %2324 = vdwg.mxu0
      %v2325 = vadd.f32 %v2268, %v2283
      %v2326 = vadd.f32 %v2269, %v2296
      %v2327 = vadd.f32 %v2270, %v2309
      %v2328 = vadd.f32 %v2271, %v2322
      %v2329 = vxor.u32 %v2325, 2147483648
      %v2330 = vmul.f32 %v2329, 1.442695
      %v2331 = vpow.pop %v2330
      %v2332 = vadd.f32 %v2331, 1.0
      %v2333 = vrcp.pop %v2332
      %v2334 = vmul.f32 %v2332, %v2333
      %v2335 = vsub.f32 1.0, %v2334
      %v2336 = vmul.f32 %v2333, %v2335
      %v2337 = vadd.f32 %v2333, %v2336
      %vm2338 = vweird.f32 %v2332
      %vm2339 = vweird.f32 %v2333
      %vm2340 = vmor %vm2338, %vm2339
      %v2341 = vsel %vm2340, %v2333, %v2337
      %v2342 = vand.u32 2147483647, %v2332
      %vm2343 = vcmp.eq.f32.partialorder %v2342, 8.507059e+37
      %v2344 = vand.u32 %v2332, 2147483648
      %v2345 = vor.u32 1.1754944e-38, %v2344
      %v2346 = vsel %vm2343, %v2345, %v2341
      %v2347 = vmul.f32 1.0, %v2346
      %v2348 = vxor.u32 %v2326, 2147483648
      %v2349 = vmul.f32 %v2348, 1.442695
      %v2350 = vpow.pop %v2349
      %v2351 = vadd.f32 %v2350, 1.0
      %v2352 = vrcp.pop %v2351
      %v2353 = vmul.f32 %v2351, %v2352
      %v2354 = vsub.f32 1.0, %v2353
      %v2355 = vmul.f32 %v2352, %v2354
      %v2356 = vadd.f32 %v2352, %v2355
      %vm2357 = vweird.f32 %v2351
      %vm2358 = vweird.f32 %v2352
      %vm2359 = vmor %vm2357, %vm2358
      %v2360 = vsel %vm2359, %v2352, %v2356
      %v2361 = vand.u32 2147483647, %v2351
      %vm2362 = vcmp.eq.f32.partialorder %v2361, 8.507059e+37
      %v2363 = vand.u32 %v2351, 2147483648
      %v2364 = vor.u32 1.1754944e-38, %v2363
      %v2365 = vsel %vm2362, %v2364, %v2360
      %v2366 = vmul.f32 1.0, %v2365
      %v2367 = vtanh.pop %v2327
      %v2368 = vxor.u32 %v2328, 2147483648
      %v2369 = vmul.f32 %v2368, 1.442695
      %v2370 = vpow.pop %v2369
      %v2371 = vadd.f32 %v2370, 1.0
      %v2372 = vrcp.pop %v2371
      %v2373 = vmul.f32 %v2371, %v2372
      %v2374 = vsub.f32 1.0, %v2373
      %v2375 = vmul.f32 %v2372, %v2374
      %v2376 = vadd.f32 %v2372, %v2375
      %vm2377 = vweird.f32 %v2371
      %vm2378 = vweird.f32 %v2372
      %vm2379 = vmor %vm2377, %vm2378
      %v2380 = vsel %vm2379, %v2372, %v2376
      %v2381 = vand.u32 2147483647, %v2371
      %vm2382 = vcmp.eq.f32.partialorder %v2381, 8.507059e+37
      %v2383 = vand.u32 %v2371, 2147483648
      %v2384 = vor.u32 1.1754944e-38, %v2383
      %v2385 = vsel %vm2382, %v2384, %v2380
      %v2386 = vmul.f32 1.0, %v2385
      %v2387 = vmul.f32 %v2366, %v2255
      %v2388 = vmul.f32 %v2347, %v2367
      %v2389 = vadd.f32 %v2387, %v2388
      %v2390 = vtanh.pop %v2389
      %v2391 = vmul.f32 %v2386, %v2390
      %s2392 = sadd.s32 %s1532, 4
      %v2393 = vstv %s2392
      %vm2394 = vcmp.eq.s32.totalorder %v1530, %v2393
      %v2395 = vsel %vm2394, %v2391, %v2261
      %s2396 = sadd.s32 %s1531, 40
      %s2397 = sshra.s32 %s2396, 3
      %s2398 = sand.u32 %s2396, 7
      %s2399 = smul.u32 %s2397, 4
      %s2400 = smul.addr %s2399, 8
      %s2401 = scalar_lea.vmem [#allocation2], %s2400
      %v2402 = vld [vmem:[%s2401] sm:$0xff]
      %v2403 = vld [vmem:[%s2401 + $0x8] sm:$0xff]
      %v2404 = vld [vmem:[%s2401 + $0x10] sm:$0xff]
      %v2405 = vld [vmem:[%s2401 + $0x18] sm:$0xff]
      %v2406 = vpack.c.bf16 %v2391, %v2391
      %2407 = vmatpush.bf16.msra.mxu0 %v1702
      %2408 = vmatpush.bf16.msra.mxu0 %v1698
      %2409 = vmatpush.bf16.msra.mxu0 %v1694
      %2410 = vmatpush.bf16.msra.mxu0 %v1690
      %2411 = vmatpush.bf16.msra.mxu0 %v1686
      %2412 = vmatpush.bf16.msra.mxu0 %v1682
      %2413 = vmatpush.bf16.msra.mxu0 %v1678
      %2414 = vmatpush.bf16.msra.mxu0 %v1674
      %2415 = vmatmul.bf16.gmra.mxu0 %v2406
      %v2416 = vpop.f32.mrf.mxu0
      %v2417 = vadd.f32 0.0, %v2416
      %v2418 = vpop.f32.mrf.mxu0
      %2419 = vdwg.mxu0
      %2420 = vmatpush.bf16.msra.mxu0 %v1703
      %2421 = vmatpush.bf16.msra.mxu0 %v1699
      %2422 = vmatpush.bf16.msra.mxu0 %v1695
      %2423 = vmatpush.bf16.msra.mxu0 %v1691
      %2424 = vmatpush.bf16.msra.mxu0 %v1687
      %2425 = vmatpush.bf16.msra.mxu0 %v1683
      %2426 = vmatpush.bf16.msra.mxu0 %v1679
      %2427 = vmatpush.bf16.msra.mxu0 %v1675
      %2428 = vmatmul.bf16.gmra.mxu0 %v2406
      %v2429 = vpop.f32.mrf.mxu0
      %v2430 = vadd.f32 0.0, %v2429
      %v2431 = vpop.f32.mrf.mxu0
      %2432 = vdwg.mxu0
      %2433 = vmatpush.bf16.msra.mxu0 %v1704
      %2434 = vmatpush.bf16.msra.mxu0 %v1700
      %2435 = vmatpush.bf16.msra.mxu0 %v1696
      %2436 = vmatpush.bf16.msra.mxu0 %v1692
      %2437 = vmatpush.bf16.msra.mxu0 %v1688
      %2438 = vmatpush.bf16.msra.mxu0 %v1684
      %2439 = vmatpush.bf16.msra.mxu0 %v1680
      %2440 = vmatpush.bf16.msra.mxu0 %v1676
      %2441 = vmatmul.bf16.gmra.mxu0 %v2406
      %v2442 = vpop.f32.mrf.mxu0
      %v2443 = vadd.f32 0.0, %v2442
      %v2444 = vpop.f32.mrf.mxu0
      %2445 = vdwg.mxu0
      %2446 = vmatpush.bf16.msra.mxu0 %v1705
      %2447 = vmatpush.bf16.msra.mxu0 %v1701
      %2448 = vmatpush.bf16.msra.mxu0 %v1697
      %2449 = vmatpush.bf16.msra.mxu0 %v1693
      %2450 = vmatpush.bf16.msra.mxu0 %v1689
      %2451 = vmatpush.bf16.msra.mxu0 %v1685
      %2452 = vmatpush.bf16.msra.mxu0 %v1681
      %2453 = vmatpush.bf16.msra.mxu0 %v1677
      %2454 = vmatmul.bf16.gmra.mxu0 %v2406
      %v2455 = vpop.f32.mrf.mxu0
      %v2456 = vadd.f32 0.0, %v2455
      %v2457 = vpop.f32.mrf.mxu0
      %2458 = vdwg.mxu0
      %v2459 = vadd.f32 %v2402, %v2417
      %v2460 = vadd.f32 %v2403, %v2430
      %v2461 = vadd.f32 %v2404, %v2443
      %v2462 = vadd.f32 %v2405, %v2456
      %v2463 = vxor.u32 %v2459, 2147483648
      %v2464 = vmul.f32 %v2463, 1.442695
      %v2465 = vpow.pop %v2464
      %v2466 = vadd.f32 %v2465, 1.0
      %v2467 = vrcp.pop %v2466
      %v2468 = vmul.f32 %v2466, %v2467
      %v2469 = vsub.f32 1.0, %v2468
      %v2470 = vmul.f32 %v2467, %v2469
      %v2471 = vadd.f32 %v2467, %v2470
      %vm2472 = vweird.f32 %v2466
      %vm2473 = vweird.f32 %v2467
      %vm2474 = vmor %vm2472, %vm2473
      %v2475 = vsel %vm2474, %v2467, %v2471
      %v2476 = vand.u32 2147483647, %v2466
      %vm2477 = vcmp.eq.f32.partialorder %v2476, 8.507059e+37
      %v2478 = vand.u32 %v2466, 2147483648
      %v2479 = vor.u32 1.1754944e-38, %v2478
      %v2480 = vsel %vm2477, %v2479, %v2475
      %v2481 = vmul.f32 1.0, %v2480
      %v2482 = vxor.u32 %v2460, 2147483648
      %v2483 = vmul.f32 %v2482, 1.442695
      %v2484 = vpow.pop %v2483
      %v2485 = vadd.f32 %v2484, 1.0
      %v2486 = vrcp.pop %v2485
      %v2487 = vmul.f32 %v2485, %v2486
      %v2488 = vsub.f32 1.0, %v2487
      %v2489 = vmul.f32 %v2486, %v2488
      %v2490 = vadd.f32 %v2486, %v2489
      %vm2491 = vweird.f32 %v2485
      %vm2492 = vweird.f32 %v2486
      %vm2493 = vmor %vm2491, %vm2492
      %v2494 = vsel %vm2493, %v2486, %v2490
      %v2495 = vand.u32 2147483647, %v2485
      %vm2496 = vcmp.eq.f32.partialorder %v2495, 8.507059e+37
      %v2497 = vand.u32 %v2485, 2147483648
      %v2498 = vor.u32 1.1754944e-38, %v2497
      %v2499 = vsel %vm2496, %v2498, %v2494
      %v2500 = vmul.f32 1.0, %v2499
      %v2501 = vtanh.pop %v2461
      %v2502 = vxor.u32 %v2462, 2147483648
      %v2503 = vmul.f32 %v2502, 1.442695
      %v2504 = vpow.pop %v2503
      %v2505 = vadd.f32 %v2504, 1.0
      %v2506 = vrcp.pop %v2505
      %v2507 = vmul.f32 %v2505, %v2506
      %v2508 = vsub.f32 1.0, %v2507
      %v2509 = vmul.f32 %v2506, %v2508
      %v2510 = vadd.f32 %v2506, %v2509
      %vm2511 = vweird.f32 %v2505
      %vm2512 = vweird.f32 %v2506
      %vm2513 = vmor %vm2511, %vm2512
      %v2514 = vsel %vm2513, %v2506, %v2510
      %v2515 = vand.u32 2147483647, %v2505
      %vm2516 = vcmp.eq.f32.partialorder %v2515, 8.507059e+37
      %v2517 = vand.u32 %v2505, 2147483648
      %v2518 = vor.u32 1.1754944e-38, %v2517
      %v2519 = vsel %vm2516, %v2518, %v2514
      %v2520 = vmul.f32 1.0, %v2519
      %v2521 = vmul.f32 %v2500, %v2389
      %v2522 = vmul.f32 %v2481, %v2501
      %v2523 = vadd.f32 %v2521, %v2522
      %v2524 = vtanh.pop %v2523
      %v2525 = vmul.f32 %v2520, %v2524
      %s2526 = sadd.s32 %s1532, 5
      %v2527 = vstv %s2526
      %vm2528 = vcmp.eq.s32.totalorder %v1530, %v2527
      %v2529 = vsel %vm2528, %v2525, %v2395
      %s2530 = sadd.s32 %s1531, 48
      %s2531 = sshra.s32 %s2530, 3
      %s2532 = sand.u32 %s2530, 7
      %s2533 = smul.u32 %s2531, 4
      %s2534 = smul.addr %s2533, 8
      %s2535 = scalar_lea.vmem [#allocation2], %s2534
      %v2536 = vld [vmem:[%s2535] sm:$0xff]
      %v2537 = vld [vmem:[%s2535 + $0x8] sm:$0xff]
      %v2538 = vld [vmem:[%s2535 + $0x10] sm:$0xff]
      %v2539 = vld [vmem:[%s2535 + $0x18] sm:$0xff]
      %v2540 = vpack.c.bf16 %v2525, %v2525
      %2541 = vmatpush.bf16.msra.mxu0 %v1702
      %2542 = vmatpush.bf16.msra.mxu0 %v1698
      %2543 = vmatpush.bf16.msra.mxu0 %v1694
      %2544 = vmatpush.bf16.msra.mxu0 %v1690
      %2545 = vmatpush.bf16.msra.mxu0 %v1686
      %2546 = vmatpush.bf16.msra.mxu0 %v1682
      %2547 = vmatpush.bf16.msra.mxu0 %v1678
      %2548 = vmatpush.bf16.msra.mxu0 %v1674
      %2549 = vmatmul.bf16.gmra.mxu0 %v2540
      %v2550 = vpop.f32.mrf.mxu0
      %v2551 = vadd.f32 0.0, %v2550
      %v2552 = vpop.f32.mrf.mxu0
      %2553 = vdwg.mxu0
      %2554 = vmatpush.bf16.msra.mxu0 %v1703
      %2555 = vmatpush.bf16.msra.mxu0 %v1699
      %2556 = vmatpush.bf16.msra.mxu0 %v1695
      %2557 = vmatpush.bf16.msra.mxu0 %v1691
      %2558 = vmatpush.bf16.msra.mxu0 %v1687
      %2559 = vmatpush.bf16.msra.mxu0 %v1683
      %2560 = vmatpush.bf16.msra.mxu0 %v1679
      %2561 = vmatpush.bf16.msra.mxu0 %v1675
      %2562 = vmatmul.bf16.gmra.mxu0 %v2540
      %v2563 = vpop.f32.mrf.mxu0
      %v2564 = vadd.f32 0.0, %v2563
      %v2565 = vpop.f32.mrf.mxu0
      %2566 = vdwg.mxu0
      %2567 = vmatpush.bf16.msra.mxu0 %v1704
      %2568 = vmatpush.bf16.msra.mxu0 %v1700
      %2569 = vmatpush.bf16.msra.mxu0 %v1696
      %2570 = vmatpush.bf16.msra.mxu0 %v1692
      %2571 = vmatpush.bf16.msra.mxu0 %v1688
      %2572 = vmatpush.bf16.msra.mxu0 %v1684
      %2573 = vmatpush.bf16.msra.mxu0 %v1680
      %2574 = vmatpush.bf16.msra.mxu0 %v1676
      %2575 = vmatmul.bf16.gmra.mxu0 %v2540
      %v2576 = vpop.f32.mrf.mxu0
      %v2577 = vadd.f32 0.0, %v2576
      %v2578 = vpop.f32.mrf.mxu0
      %2579 = vdwg.mxu0
      %2580 = vmatpush.bf16.msra.mxu0 %v1705
      %2581 = vmatpush.bf16.msra.mxu0 %v1701
      %2582 = vmatpush.bf16.msra.mxu0 %v1697
      %2583 = vmatpush.bf16.msra.mxu0 %v1693
      %2584 = vmatpush.bf16.msra.mxu0 %v1689
      %2585 = vmatpush.bf16.msra.mxu0 %v1685
      %2586 = vmatpush.bf16.msra.mxu0 %v1681
      %2587 = vmatpush.bf16.msra.mxu0 %v1677
      %2588 = vmatmul.bf16.gmra.mxu0 %v2540
      %v2589 = vpop.f32.mrf.mxu0
      %v2590 = vadd.f32 0.0, %v2589
      %v2591 = vpop.f32.mrf.mxu0
      %2592 = vdwg.mxu0
      %v2593 = vadd.f32 %v2536, %v2551
      %v2594 = vadd.f32 %v2537, %v2564
      %v2595 = vadd.f32 %v2538, %v2577
      %v2596 = vadd.f32 %v2539, %v2590
      %v2597 = vxor.u32 %v2593, 2147483648
      %v2598 = vmul.f32 %v2597, 1.442695
      %v2599 = vpow.pop %v2598
      %v2600 = vadd.f32 %v2599, 1.0
      %v2601 = vrcp.pop %v2600
      %v2602 = vmul.f32 %v2600, %v2601
      %v2603 = vsub.f32 1.0, %v2602
      %v2604 = vmul.f32 %v2601, %v2603
      %v2605 = vadd.f32 %v2601, %v2604
      %vm2606 = vweird.f32 %v2600
      %vm2607 = vweird.f32 %v2601
      %vm2608 = vmor %vm2606, %vm2607
      %v2609 = vsel %vm2608, %v2601, %v2605
      %v2610 = vand.u32 2147483647, %v2600
      %vm2611 = vcmp.eq.f32.partialorder %v2610, 8.507059e+37
      %v2612 = vand.u32 %v2600, 2147483648
      %v2613 = vor.u32 1.1754944e-38, %v2612
      %v2614 = vsel %vm2611, %v2613, %v2609
      %v2615 = vmul.f32 1.0, %v2614
      %v2616 = vxor.u32 %v2594, 2147483648
      %v2617 = vmul.f32 %v2616, 1.442695
      %v2618 = vpow.pop %v2617
      %v2619 = vadd.f32 %v2618, 1.0
      %v2620 = vrcp.pop %v2619
      %v2621 = vmul.f32 %v2619, %v2620
      %v2622 = vsub.f32 1.0, %v2621
      %v2623 = vmul.f32 %v2620, %v2622
      %v2624 = vadd.f32 %v2620, %v2623
      %vm2625 = vweird.f32 %v2619
      %vm2626 = vweird.f32 %v2620
      %vm2627 = vmor %vm2625, %vm2626
      %v2628 = vsel %vm2627, %v2620, %v2624
      %v2629 = vand.u32 2147483647, %v2619
      %vm2630 = vcmp.eq.f32.partialorder %v2629, 8.507059e+37
      %v2631 = vand.u32 %v2619, 2147483648
      %v2632 = vor.u32 1.1754944e-38, %v2631
      %v2633 = vsel %vm2630, %v2632, %v2628
      %v2634 = vmul.f32 1.0, %v2633
      %v2635 = vtanh.pop %v2595
      %v2636 = vxor.u32 %v2596, 2147483648
      %v2637 = vmul.f32 %v2636, 1.442695
      %v2638 = vpow.pop %v2637
      %v2639 = vadd.f32 %v2638, 1.0
      %v2640 = vrcp.pop %v2639
      %v2641 = vmul.f32 %v2639, %v2640
      %v2642 = vsub.f32 1.0, %v2641
      %v2643 = vmul.f32 %v2640, %v2642
      %v2644 = vadd.f32 %v2640, %v2643
      %vm2645 = vweird.f32 %v2639
      %vm2646 = vweird.f32 %v2640
      %vm2647 = vmor %vm2645, %vm2646
      %v2648 = vsel %vm2647, %v2640, %v2644
      %v2649 = vand.u32 2147483647, %v2639
      %vm2650 = vcmp.eq.f32.partialorder %v2649, 8.507059e+37
      %v2651 = vand.u32 %v2639, 2147483648
      %v2652 = vor.u32 1.1754944e-38, %v2651
      %v2653 = vsel %vm2650, %v2652, %v2648
      %v2654 = vmul.f32 1.0, %v2653
      %v2655 = vmul.f32 %v2634, %v2523
      %v2656 = vmul.f32 %v2615, %v2635
      %v2657 = vadd.f32 %v2655, %v2656
      %v2658 = vtanh.pop %v2657
      %v2659 = vmul.f32 %v2654, %v2658
      %s2660 = sadd.s32 %s1532, 6
      %v2661 = vstv %s2660
      %vm2662 = vcmp.eq.s32.totalorder %v1530, %v2661
      %v2663 = vsel %vm2662, %v2659, %v2529
      %s2664 = sadd.s32 %s1531, 56
      %s2665 = sshra.s32 %s2664, 3
      %s2666 = sand.u32 %s2664, 7
      %s2667 = smul.u32 %s2665, 4
      %s2668 = smul.addr %s2667, 8
      %s2669 = scalar_lea.vmem [#allocation2], %s2668
      %v2670 = vld [vmem:[%s2669] sm:$0xff]
      %v2671 = vld [vmem:[%s2669 + $0x8] sm:$0xff]
      %v2672 = vld [vmem:[%s2669 + $0x10] sm:$0xff]
      %v2673 = vld [vmem:[%s2669 + $0x18] sm:$0xff]
      %v2674 = vpack.c.bf16 %v2659, %v2659
      %2675 = vmatpush.bf16.msra.mxu0 %v1702
      %2676 = vmatpush.bf16.msra.mxu0 %v1698
      %2677 = vmatpush.bf16.msra.mxu0 %v1694
      %2678 = vmatpush.bf16.msra.mxu0 %v1690
      %2679 = vmatpush.bf16.msra.mxu0 %v1686
      %2680 = vmatpush.bf16.msra.mxu0 %v1682
      %2681 = vmatpush.bf16.msra.mxu0 %v1678
      %2682 = vmatpush.bf16.msra.mxu0 %v1674
      %2683 = vmatmul.bf16.gmra.mxu0 %v2674
      %v2684 = vpop.f32.mrf.mxu0
      %v2685 = vadd.f32 0.0, %v2684
      %v2686 = vpop.f32.mrf.mxu0
      %2687 = vdwg.mxu0
      %2688 = vmatpush.bf16.msra.mxu0 %v1703
      %2689 = vmatpush.bf16.msra.mxu0 %v1699
      %2690 = vmatpush.bf16.msra.mxu0 %v1695
      %2691 = vmatpush.bf16.msra.mxu0 %v1691
      %2692 = vmatpush.bf16.msra.mxu0 %v1687
      %2693 = vmatpush.bf16.msra.mxu0 %v1683
      %2694 = vmatpush.bf16.msra.mxu0 %v1679
      %2695 = vmatpush.bf16.msra.mxu0 %v1675
      %2696 = vmatmul.bf16.gmra.mxu0 %v2674
      %v2697 = vpop.f32.mrf.mxu0
      %v2698 = vadd.f32 0.0, %v2697
      %v2699 = vpop.f32.mrf.mxu0
      %2700 = vdwg.mxu0
      %2701 = vmatpush.bf16.msra.mxu0 %v1704
      %2702 = vmatpush.bf16.msra.mxu0 %v1700
      %2703 = vmatpush.bf16.msra.mxu0 %v1696
      %2704 = vmatpush.bf16.msra.mxu0 %v1692
      %2705 = vmatpush.bf16.msra.mxu0 %v1688
      %2706 = vmatpush.bf16.msra.mxu0 %v1684
      %2707 = vmatpush.bf16.msra.mxu0 %v1680
      %2708 = vmatpush.bf16.msra.mxu0 %v1676
      %2709 = vmatmul.bf16.gmra.mxu0 %v2674
      %v2710 = vpop.f32.mrf.mxu0
      %v2711 = vadd.f32 0.0, %v2710
      %v2712 = vpop.f32.mrf.mxu0
      %2713 = vdwg.mxu0
      %2714 = vmatpush.bf16.msra.mxu0 %v1705
      %2715 = vmatpush.bf16.msra.mxu0 %v1701
      %2716 = vmatpush.bf16.msra.mxu0 %v1697
      %2717 = vmatpush.bf16.msra.mxu0 %v1693
      %2718 = vmatpush.bf16.msra.mxu0 %v1689
      %2719 = vmatpush.bf16.msra.mxu0 %v1685
      %2720 = vmatpush.bf16.msra.mxu0 %v1681
      %2721 = vmatpush.bf16.msra.mxu0 %v1677
      %2722 = vmatmul.bf16.gmra.mxu0 %v2674
      %v2723 = vpop.f32.mrf.mxu0
      %v2724 = vadd.f32 0.0, %v2723
      %v2725 = vpop.f32.mrf.mxu0
      %2726 = vdwg.mxu0
      %v2727 = vadd.f32 %v2670, %v2685
      %v2728 = vadd.f32 %v2671, %v2698
      %v2729 = vadd.f32 %v2672, %v2711
      %v2730 = vadd.f32 %v2673, %v2724
      %v2731 = vxor.u32 %v2727, 2147483648
      %v2732 = vmul.f32 %v2731, 1.442695
      %v2733 = vpow.pop %v2732
      %v2734 = vadd.f32 %v2733, 1.0
      %v2735 = vrcp.pop %v2734
      %v2736 = vmul.f32 %v2734, %v2735
      %v2737 = vsub.f32 1.0, %v2736
      %v2738 = vmul.f32 %v2735, %v2737
      %v2739 = vadd.f32 %v2735, %v2738
      %vm2740 = vweird.f32 %v2734
      %vm2741 = vweird.f32 %v2735
      %vm2742 = vmor %vm2740, %vm2741
      %v2743 = vsel %vm2742, %v2735, %v2739
      %v2744 = vand.u32 2147483647, %v2734
      %vm2745 = vcmp.eq.f32.partialorder %v2744, 8.507059e+37
      %v2746 = vand.u32 %v2734, 2147483648
      %v2747 = vor.u32 1.1754944e-38, %v2746
      %v2748 = vsel %vm2745, %v2747, %v2743
      %v2749 = vmul.f32 1.0, %v2748
      %v2750 = vxor.u32 %v2728, 2147483648
      %v2751 = vmul.f32 %v2750, 1.442695
      %v2752 = vpow.pop %v2751
      %v2753 = vadd.f32 %v2752, 1.0
      %v2754 = vrcp.pop %v2753
      %v2755 = vmul.f32 %v2753, %v2754
      %v2756 = vsub.f32 1.0, %v2755
      %v2757 = vmul.f32 %v2754, %v2756
      %v2758 = vadd.f32 %v2754, %v2757
      %vm2759 = vweird.f32 %v2753
      %vm2760 = vweird.f32 %v2754
      %vm2761 = vmor %vm2759, %vm2760
      %v2762 = vsel %vm2761, %v2754, %v2758
      %v2763 = vand.u32 2147483647, %v2753
      %vm2764 = vcmp.eq.f32.partialorder %v2763, 8.507059e+37
      %v2765 = vand.u32 %v2753, 2147483648
      %v2766 = vor.u32 1.1754944e-38, %v2765
      %v2767 = vsel %vm2764, %v2766, %v2762
      %v2768 = vmul.f32 1.0, %v2767
      %v2769 = vtanh.pop %v2729
      %v2770 = vxor.u32 %v2730, 2147483648
      %v2771 = vmul.f32 %v2770, 1.442695
      %v2772 = vpow.pop %v2771
      %v2773 = vadd.f32 %v2772, 1.0
      %v2774 = vrcp.pop %v2773
      %v2775 = vmul.f32 %v2773, %v2774
      %v2776 = vsub.f32 1.0, %v2775
      %v2777 = vmul.f32 %v2774, %v2776
      %v2778 = vadd.f32 %v2774, %v2777
      %vm2779 = vweird.f32 %v2773
      %vm2780 = vweird.f32 %v2774
      %vm2781 = vmor %vm2779, %vm2780
      %v2782 = vsel %vm2781, %v2774, %v2778
      %v2783 = vand.u32 2147483647, %v2773
      %vm2784 = vcmp.eq.f32.partialorder %v2783, 8.507059e+37
      %v2785 = vand.u32 %v2773, 2147483648
      %v2786 = vor.u32 1.1754944e-38, %v2785
      %v2787 = vsel %vm2784, %v2786, %v2782
      %v2788 = vmul.f32 1.0, %v2787
      %v2789 = vmul.f32 %v2768, %v2657
      %v2790 = vmul.f32 %v2749, %v2769
      %v2791 = vadd.f32 %v2789, %v2790
      %v2792 = vtanh.pop %v2791
      %v2793 = vmul.f32 %v2788, %v2792
      %s2794 = sadd.s32 %s1532, 7
      %v2795 = vstv %s2794
      %vm2796 = vcmp.eq.s32.totalorder %v1530, %v2795
      %v2797 = vsel %vm2796, %v2793, %v2663
      %2798 = vst [vmem:[#allocation3] sm:$0xff] %v2793
      %2799 = vst [vmem:[#allocation4] sm:$0xff] %v2791
      %2800 = vst [vmem:[#allocation5] sm:$0xff] %v2797
    $region46: #{tpu_custom_call.1} parent=1 // loop_footer
      %s789 = sadd.s32 1, %s785
    $region47: #{tpu_custom_call.1} parent=1 // loop_footer_branch
      %784 = sbr.rel target = $region43
    $region48: #{tpu_custom_call.1} parent=1 // loop_exit
      _
    %v2801 = vld [vmem:[#allocation5] sm:$0xff]
    %v2802 = vld [vmem:[%s5] sm:$0x1]
    %v2804 = vperm.slane %v2802, 0
    %v2806 = vmul.f32 %v2801, %v2804
    %2807 = vadd.xlane.f32.xlu0 %v2806
    %v2808 = vpop.xlane.xlu0 %2807
    %v2809 = vld [vmem:[#allocation6] sm:$0x1]
    %v2811 = vperm.slane %v2809, 0
    %v2813 = vadd.f32 %v2808, %v2811
    %v2814 = vxor.u32 %v2813, 2147483648
    %v2815 = vmul.f32 %v2814, 1.442695
    %v2816 = vpow.pop %v2815
    %v2817 = vadd.f32 %v2816, 1.0
    %v2818 = vrcp.pop %v2817
    %v2819 = vmul.f32 %v2817, %v2818
    %v2820 = vsub.f32 1.0, %v2819
    %v2821 = vmul.f32 %v2818, %v2820
    %v2822 = vadd.f32 %v2818, %v2821
    %vm2823 = vweird.f32 %v2817
    %vm2824 = vweird.f32 %v2818
    %vm2825 = vmor %vm2823, %vm2824
    %v2826 = vsel %vm2825, %v2818, %v2822
    %v2827 = vand.u32 2147483647, %v2817
    %vm2828 = vcmp.eq.f32.partialorder %v2827, 8.507059e+37
    %v2829 = vand.u32 %v2817, 2147483648
    %v2830 = vor.u32 1.1754944e-38, %v2829
    %v2831 = vsel %vm2828, %v2830, %v2826
    %v2832 = vmul.f32 1.0, %v2831
    %vm2833 = vcmask 7168
    %2834 = vst.msk [vmem:[%s7] sm:$0xff] %vm2833, %v2832
    // Predicated region
    $region53: #{tpu_custom_call.1} parent=1 // pred_check
      _
    $region54: #{tpu_custom_call.1} parent=1 // pred_check_branch
      %2836 = sbr.rel (0) target = $region56
    $region55: #{tpu_custom_call.1} parent=1 // pred_region
      _
    $region56: #{tpu_custom_call.1} parent=1 // pred_fallthru
      _
    // Predicated region
    $region57: #{tpu_custom_call.1} parent=1 // pred_check
      _
    $region58: #{tpu_custom_call.1} parent=1 // pred_check_branch
      %2838 = sbr.rel (0) target = $region60
    $region59: #{tpu_custom_call.1} parent=1 // pred_region
      _
    $region60: #{tpu_custom_call.1} parent=1 // pred_fallthru
      _
    %2839 = vsyncpa [#allocation8], 1
    %2840 = vsyncpa [#allocation10], 1

</llo_original>
